<compile_context>
chip_gen: v6e
topology: v6e:2x2x1
jax: 0.10.0
libtpu: 0.0.40
codegen_flags: <defaults>
</compile_context>

<pallas_src>
import functools

import jax
import jax.numpy as jnp
from jax.experimental import pallas as pl
from jax.experimental.pallas import tpu as pltpu

LEAKY_SLOPE = 0.01
BN_EPS = 1e-5
C_MID = 64                      # channel width of stem output / every block
STRIDES = (1, 2, 2, 2)          # static network config (NOT part of the traced pytree)
DILATIONS = (1, 2, 4, 8)
VMEM_LIMIT = 32 * 1024 * 1024   # <= physical VMEM on v5e/v6e/v7x


def _cparams():
    return pltpu.CompilerParams(dimension_semantics=("parallel",),
                                vmem_limit_bytes=VMEM_LIMIT)


# ---------------------------------------------------------------------------
# Stem: Conv1d(Cin,64,k=7,s=2,p=3,bias=False) -> LeakyReLU -> BN.
# The raw input has only Cin channels, so the 7-tap im2col is done in XLA
# (negligible bytes) and the kernel is ONE (lout, 7*Cin) @ (7*Cin, 64) MXU
# matmul with the LeakyReLU/BN epilogue fused.  Output is bf16.
# ---------------------------------------------------------------------------
def _stem_kernel(x_ref, w_ref, scale_ref, shift_ref, o_ref):
    acc = jnp.dot(x_ref[...], w_ref[...], preferred_element_type=jnp.float32)
    # Module order is Conv -> LeakyReLU -> BatchNorm (LeakyReLU BEFORE BN).
    y = jnp.where(acc >= 0, acc, LEAKY_SLOPE * acc)
    o_ref[...] = (y * scale_ref[...] + shift_ref[...]).astype(o_ref.dtype)


def stem_forward(x_blc, p):
    B, L, cin = x_blc.shape
    K, pad, stride = 7, 3, 2
    lout = (L + 2 * pad - (K - 1) - 1) // stride + 1
    xp = jnp.pad(x_blc, ((0, 0), (pad, pad), (0, 0)))
    # (B, lout, K*cin) patches; channel index = k*cin + c (matches weight prep).
    patches = jnp.concatenate(
        [xp[:, k:k + stride * lout:stride, :] for k in range(K)], axis=-1)

    return pl.pallas_call(
        _stem_kernel,
        out_shape=jax.ShapeDtypeStruct((B, lout, C_MID), jnp.bfloat16),
        grid=(B,),
        in_specs=[
            pl.BlockSpec((None, lout, K * cin), lambda b: (b, 0, 0)),
            pl.BlockSpec((K * cin, C_MID), lambda b: (0, 0)),
            pl.BlockSpec((1, C_MID), lambda b: (0, 0)),
            pl.BlockSpec((1, C_MID), lambda b: (0, 0)),
        ],
        out_specs=pl.BlockSpec((None, lout, C_MID), lambda b: (b, 0, 0)),
        compiler_params=_cparams(),
    )(patches, p["w"], p["bn_scale"], p["bn_shift"])


# ---------------------------------------------------------------------------
# Fully fused residual block (one grid step = one batch element):
#   conv1(k3,s,d)->BN->ReLU->[dropout=id]->conv2(k3,1,d)->BN->ECA
#   -> (+ residual / downsampled residual) -> ReLU
# The last block optionally also fuses AdaptiveAvgPool1d(1) + the FC head and
# emits logits directly (no HBM writeback of the final activation).
# ---------------------------------------------------------------------------
def _block_kernel(x_ref, w1_ref, s1_ref, b1_ref, w2_ref, s2_ref, b2_ref, eca_ref,
                  *rest, lout, de, d2, has_down, fuse_head):
    i = 0
    if has_down:
        wd_ref, dsc_ref, dsh_ref = rest[i:i + 3]
        i += 3
    if fuse_head:
        fw1_ref, fb1_ref, fw2_ref, fb2_ref = rest[i:i + 4]
        i += 4
    o_ref, xpad_ref, hpad_ref = rest[i:i + 3]

    f32 = jnp.float32
    # Zero ONLY the halo rows of the padded scratches (interior is fully
    # rewritten every step, so this is megacore-safe and cheap).
    xpad_ref[pl.ds(0, de), :] = jnp.zeros((de, C_MID), f32)
    xpad_ref[pl.ds(de + lout, de), :] = jnp.zeros((de, C_MID), f32)
    hpad_ref[pl.ds(0, d2), :] = jnp.zeros((d2, C_MID), f32)
    hpad_ref[pl.ds(d2 + lout, d2), :] = jnp.zeros((d2, C_MID), f32)

    x = x_ref[...]                                         # (lout, C) bf16
    xpad_ref[pl.ds(de, lout), :] = x.astype(f32)

    # ---- conv1 (3 contiguous taps, effective dilation `de` on the phase-
    #      adjusted input) -> BN1 -> ReLU.  Centre tap reuses x directly. ----
    acc = jnp.dot(x, w1_ref[1], preferred_element_type=f32)
    acc = acc + jnp.dot(xpad_ref[pl.ds(0, lout), :].astype(jnp.bfloat16),
                        w1_ref[0], preferred_element_type=f32)
    acc = acc + jnp.dot(xpad_ref[pl.ds(2 * de, lout), :].astype(jnp.bfloat16),
                        w1_ref[2], preferred_element_type=f32)
    h = jnp.maximum(acc * s1_ref[...] + b1_ref[...], 0.0)
    # Dropout(p) is identity in eval mode.

    # ---- conv2 (k=3, stride 1, dilation d2) -> BN2 ----
    hpad_ref[pl.ds(d2, lout), :] = h
    acc2 = jnp.dot(h.astype(jnp.bfloat16), w2_ref[1], preferred_element_type=f32)
    acc2 = acc2 + jnp.dot(hpad_ref[pl.ds(0, lout), :].astype(jnp.bfloat16),
                          w2_ref[0], preferred_element_type=f32)
    acc2 = acc2 + jnp.dot(hpad_ref[pl.ds(2 * d2, lout), :].astype(jnp.bfloat16),
                          w2_ref[2], preferred_element_type=f32)
    out = acc2 * s2_ref[...] + b2_ref[...]

    # ---- ECA: global mean over length -> k=3 channel conv (tridiagonal
    #      (C,C) bf16 matmul) -> sigmoid gate ----
    pooled = jnp.mean(out, axis=0, keepdims=True)                        # (1, C)
    gate = jax.nn.sigmoid(jnp.dot(pooled.astype(jnp.bfloat16), eca_ref[...],
                                  preferred_element_type=f32))           # (1, C)
    out = out * gate

    # ---- residual + final ReLU ----
    if has_down:
        res = jnp.dot(x, wd_ref[...], preferred_element_type=f32)
        res = res * dsc_ref[...] + dsh_ref[...]
    else:
        res = x.astype(f32)
    y = jnp.maximum(out + res, 0.0)                                      # (lout, C)

    if fuse_head:
        # AdaptiveAvgPool1d(1) + Linear(64,64)->ReLU->[dropout=id]->Linear,
        # fused so the final activation never touches HBM.
        feat = jnp.mean(y, axis=0, keepdims=True)                        # (1, C)
        fh = jnp.dot(feat.astype(jnp.bfloat16), fw1_ref[...],
                     preferred_element_type=f32) + fb1_ref[...]
        fh = jnp.maximum(fh, 0.0)
        o_ref[...] = jnp.dot(fh.astype(jnp.bfloat16), fw2_ref[...],
                             preferred_element_type=f32) + fb2_ref[...]
    else:
        o_ref[...] = y.astype(o_ref.dtype)


def block_forward(x_blc, p, stride, dilation, head=None):
    """One ECAResTCNBlock1d.  If `head` is given, AdaptiveAvgPool + FC head are
    fused into the kernel and the call returns (B, num_classes) float32."""
    B, L, C = x_blc.shape
    if stride == 1:
        xin, de = x_blc, dilation
    else:
        # stride 2 with even dilation: every conv1 / downsample read lands on
        # an even row, so only the even phase is needed (contiguous taps with
        # effective dilation dilation//2).
        assert dilation % 2 == 0, "stride-2 blocks require even dilation"
        xin, de = x_blc[:, 0::2, :], dilation // 2
    lout = xin.shape[1]
    has_down = stride != 1
    fuse_head = head is not None

    in_specs = [
        pl.BlockSpec((None, lout, C), lambda b: (b, 0, 0)),
        pl.BlockSpec((3, C, C), lambda b: (0, 0, 0)),
        pl.BlockSpec((1, C), lambda b: (0, 0)),
        pl.BlockSpec((1, C), lambda b: (0, 0)),
        pl.BlockSpec((3, C, C), lambda b: (0, 0, 0)),
        pl.BlockSpec((1, C), lambda b: (0, 0)),
        pl.BlockSpec((1, C), lambda b: (0, 0)),
        pl.BlockSpec((C, C), lambda b: (0, 0)),
    ]
    args = [xin, p["w1"], p["bn1_scale"], p["bn1_shift"],
            p["w2"], p["bn2_scale"], p["bn2_shift"], p["eca_mat"]]
    if has_down:
        in_specs += [pl.BlockSpec((C, C), lambda b: (0, 0)),
                     pl.BlockSpec((1, C), lambda b: (0, 0)),
                     pl.BlockSpec((1, C), lambda b: (0, 0))]
        args += [p["down_w"], p["dbn_scale"], p["dbn_shift"]]
    if fuse_head:
        nclass = head["w2"].shape[1]
        in_specs += [pl.BlockSpec((C, C), lambda b: (0, 0)),
                     pl.BlockSpec((1, C), lambda b: (0, 0)),
                     pl.BlockSpec((C, nclass), lambda b: (0, 0)),
                     pl.BlockSpec((1, nclass), lambda b: (0, 0))]
        args += [head["w1"], head["b1"], head["w2"], head["b2"]]
        out_shape = jax.ShapeDtypeStruct((B, 1, nclass), jnp.float32)
        out_spec = pl.BlockSpec((None, 1, nclass), lambda b: (b, 0, 0))
    else:
        out_shape = jax.ShapeDtypeStruct((B, lout, C), jnp.bfloat16)
        out_spec = pl.BlockSpec((None, lout, C), lambda b: (b, 0, 0))

    kern = functools.partial(_block_kernel, lout=lout, de=de, d2=dilation,
                             has_down=has_down, fuse_head=fuse_head)
    out = pl.pallas_call(
        kern,
        out_shape=out_shape,
        grid=(B,),
        in_specs=in_specs,
        out_specs=out_spec,
        scratch_shapes=[pltpu.VMEM((lout + 2 * de, C), jnp.float32),
                        pltpu.VMEM((lout + 2 * dilation, C), jnp.float32)],
        compiler_params=_cparams(),
    )(*args)
    if fuse_head:
        out = out.reshape(B, -1)
    return out


# ---------------------------------------------------------------------------
# Parameter init (synthetic, PyTorch layouts) + one-time kernel-layout prep.
# ---------------------------------------------------------------------------
def _conv_w(key, cout, cin, k):
    std = (2.0 / (cin * k)) ** 0.5
    return std * jax.random.normal(key, (cout, cin, k), dtype=jnp.float32)


def _bn_affine(key, c):
    k1, k2, k3, k4 = jax.random.split(key, 4)
    gamma = 1.0 + 0.1 * jax.random.normal(k1, (c,))
    beta = 0.1 * jax.random.normal(k2, (c,))
    mean = 0.1 * jax.random.normal(k3, (c,))
    var = 1.0 + 0.1 * jax.random.uniform(k4, (c,))
    scale = gamma / jnp.sqrt(var + BN_EPS)
    shift = beta - mean * scale
    return scale.astype(jnp.float32), shift.astype(jnp.float32)


def init_params(key, in_channels, num_classes):
    keys = iter(jax.random.split(key, 64))
    params = {"stem_w": _conv_w(next(keys), 64, in_channels, 7)}
    params["stem_bn_scale"], params["stem_bn_shift"] = _bn_affine(next(keys), 64)
    blocks = []
    for s in STRIDES:
        p = {"conv1_w": _conv_w(next(keys), 64, 64, 3),
             "conv2_w": _conv_w(next(keys), 64, 64, 3),
             "eca_w": 0.3 * jax.random.normal(next(keys), (3,), dtype=jnp.float32)}
        p["bn1_scale"], p["bn1_shift"] = _bn_affine(next(keys), 64)
        p["bn2_scale"], p["bn2_shift"] = _bn_affine(next(keys), 64)
        if s != 1:
            p["down_w"] = _conv_w(next(keys), 64, 64, 1)
            p["dbn_scale"], p["dbn_shift"] = _bn_affine(next(keys), 64)
        else:
            p["down_w"] = None
        blocks.append(p)
    params["blocks"] = blocks
    params["fc1_w"] = (1.0 / 8.0) * jax.random.normal(next(keys), (64, 64), dtype=jnp.float32)
    params["fc1_b"] = 0.1 * jax.random.normal(next(keys), (64,), dtype=jnp.float32)
    params["fc2_w"] = (1.0 / 8.0) * jax.random.normal(next(keys), (num_classes, 64),
                                                      dtype=jnp.float32)
    params["fc2_b"] = 0.1 * jax.random.normal(next(keys), (num_classes,), dtype=jnp.float32)
    return params


def _prep_conv_taps(w_oik):
    # PyTorch (Cout, Cin, K) -> per-tap (K, Cin, Cout), bf16 for the MXU.
    return jnp.transpose(w_oik, (2, 1, 0)).astype(jnp.bfloat16)


def _prep_conv_flat(w_oik):
    # PyTorch (Cout, Cin, K) -> (K*Cin, Cout) matching im2col [k*Cin + c] order.
    cout, cin, k = w_oik.shape
    return jnp.transpose(w_oik, (2, 1, 0)).reshape(k * cin, cout).astype(jnp.bfloat16)


def _eca_matrix(w3, c):
    # k=3 zero-padded channel conv expressed as pooled @ M, M tridiagonal (C,C).
    r = jnp.arange(c)[:, None]
    col = jnp.arange(c)[None, :]
    m = (jnp.where(r + 1 == col, w3[0], 0.0)
         + jnp.where(r == col, w3[1], 0.0)
         + jnp.where(r == col + 1, w3[2], 0.0))
    return m.astype(jnp.bfloat16)


def prepare_params(raw):
    """One-time layout/cast prep (hoisted out of the jit'd forward pass)."""
    prep = {
        "stem": {"w": _prep_conv_flat(raw["stem_w"]),
                 "bn_scale": raw["stem_bn_scale"].reshape(1, -1),
                 "bn_shift": raw["stem_bn_shift"].reshape(1, -1)},
        "blocks": [],
        "fc": {"w1": raw["fc1_w"].T.astype(jnp.bfloat16),
               "b1": raw["fc1_b"].reshape(1, -1).astype(jnp.float32),
               "w2": raw["fc2_w"].T.astype(jnp.bfloat16),
               "b2": raw["fc2_b"].reshape(1, -1).astype(jnp.float32)},
    }
    for bp in raw["blocks"]:
        nb = {"w1": _prep_conv_taps(bp["conv1_w"]),
              "bn1_scale": bp["bn1_scale"].reshape(1, -1),
              "bn1_shift": bp["bn1_shift"].reshape(1, -1),
              "w2": _prep_conv_taps(bp["conv2_w"]),
              "bn2_scale": bp["bn2_scale"].reshape(1, -1),
              "bn2_shift": bp["bn2_shift"].reshape(1, -1),
              "eca_mat": _eca_matrix(bp["eca_w"], C_MID)}
        if bp.get("down_w") is not None:
            nb["down_w"] = jnp.transpose(bp["down_w"], (2, 1, 0))[0].astype(jnp.bfloat16)
            nb["dbn_scale"] = bp["dbn_scale"].reshape(1, -1)
            nb["dbn_shift"] = bp["dbn_shift"].reshape(1, -1)
        prep["blocks"].append(nb)
    return prep


# ---------------------------------------------------------------------------
# Full forward pass.
# ---------------------------------------------------------------------------
@jax.jit
def mini_eca_restcn_forward(params, x_bcl):
    # x_bcl: [B, C_in, L] (PyTorch NCL) -> channel-last [B, L, C_in], bf16.
    x = jnp.transpose(x_bcl, (0, 2, 1)).astype(jnp.bfloat16)
    x = stem_forward(x, params["stem"])
    blocks = params["blocks"]
    last = len(blocks) - 1
    for i, (bp, s, d) in enumerate(zip(blocks, STRIDES, DILATIONS)):
        # The last block also fuses AdaptiveAvgPool1d(1) + the FC head and
        # directly returns logits.
        x = block_forward(x, bp, stride=s, dilation=d,
                          head=params["fc"] if i == last else None)
    return x                                              # [B, num_classes] f32


if __name__ == "__main__":
    B, C_IN, L, NUM_CLASSES = 2, 4, 16, 10
    key = jax.random.PRNGKey(0)
    k_param, k_x = jax.random.split(key)
    raw = init_params(k_param, C_IN, NUM_CLASSES)
    params = prepare_params(raw)
    x = jax.random.normal(k_x, (B, C_IN, L), dtype=jnp.float32)

    out = mini_eca_restcn_forward(params, x)
    jax.block_until_ready(out)
    assert out.shape == (B, NUM_CLASSES)
    assert bool(jnp.all(jnp.isfinite(out)))
    print("KERNEL_OK")
</pallas_src>

<mosaic_0001>
module attributes {stable_mosaic.version = 11 : i64} {
  func.func @_block_kernel(%arg0: i32, %arg1: memref<1x4x64xbf16, #tpu.memory_space<vmem>>, %arg2: memref<3x64x64xbf16, #tpu.memory_space<vmem>>, %arg3: memref<1x64xf32, #tpu.memory_space<vmem>>, %arg4: memref<1x64xf32, #tpu.memory_space<vmem>>, %arg5: memref<3x64x64xbf16, #tpu.memory_space<vmem>>, %arg6: memref<1x64xf32, #tpu.memory_space<vmem>>, %arg7: memref<1x64xf32, #tpu.memory_space<vmem>>, %arg8: memref<64x64xbf16, #tpu.memory_space<vmem>>, %arg9: memref<64x64xbf16, #tpu.memory_space<vmem>>, %arg10: memref<1x64xf32, #tpu.memory_space<vmem>>, %arg11: memref<1x64xf32, #tpu.memory_space<vmem>>, %arg12: memref<1x4x64xbf16, #tpu.memory_space<vmem>>, %arg13: memref<6x64xf32, #tpu.memory_space<vmem>>, %arg14: memref<8x64xf32, #tpu.memory_space<vmem>>) attributes {dimension_semantics = [#tpu.dimension_semantics<parallel>], iteration_bounds = array<i64: 2>, scalar_prefetch = 0 : i64, scratch_operands = 2 : i64, tpu.core_type = #tpu.core_type<tc>, window_params = [{transform_indices = @transform_0, window_bounds = array<i64: 1, 4, 64>}, {pipeline_mode = #tpu.pipeline_mode<synchronous>, transform_indices = @transform_1, window_bounds = array<i64: 3, 64, 64>}, {pipeline_mode = #tpu.pipeline_mode<synchronous>, transform_indices = @transform_2, window_bounds = array<i64: 1, 64>}, {pipeline_mode = #tpu.pipeline_mode<synchronous>, transform_indices = @transform_3, window_bounds = array<i64: 1, 64>}, {pipeline_mode = #tpu.pipeline_mode<synchronous>, transform_indices = @transform_4, window_bounds = array<i64: 3, 64, 64>}, {pipeline_mode = #tpu.pipeline_mode<synchronous>, transform_indices = @transform_5, window_bounds = array<i64: 1, 64>}, {pipeline_mode = #tpu.pipeline_mode<synchronous>, transform_indices = @transform_6, window_bounds = array<i64: 1, 64>}, {pipeline_mode = #tpu.pipeline_mode<synchronous>, transform_indices = @transform_7, window_bounds = array<i64: 64, 64>}, {pipeline_mode = #tpu.pipeline_mode<synchronous>, transform_indices = @transform_8, window_bounds = array<i64: 64, 64>}, {pipeline_mode = #tpu.pipeline_mode<synchronous>, transform_indices = @transform_9, window_bounds = array<i64: 1, 64>}, {pipeline_mode = #tpu.pipeline_mode<synchronous>, transform_indices = @transform_10, window_bounds = array<i64: 1, 64>}, {transform_indices = @transform_11, window_bounds = array<i64: 1, 4, 64>}]} {
    %cst = arith.constant 0.000000e+00 : f32
    %0 = vector.broadcast %cst : f32 to vector<1x64xf32>
    %c0 = arith.constant 0 : index
    %c0_0 = arith.constant 0 : index
    %1 = vector.load %arg13[%c0, %c0_0] : memref<6x64xf32, #tpu.memory_space<vmem>>, vector<1x64xf32>
    tpu.vector_store %arg13[%c0, %c0_0], %0 {strides = array<i32>} : memref<6x64xf32, #tpu.memory_space<vmem>>, vector<1x64xf32>,
    %cst_1 = arith.constant 0.000000e+00 : f32
    %2 = vector.broadcast %cst_1 : f32 to vector<1x64xf32>
    %c5 = arith.constant 5 : index
    %c0_2 = arith.constant 0 : index
    %3 = vector.load %arg13[%c5, %c0_2] : memref<6x64xf32, #tpu.memory_space<vmem>>, vector<1x64xf32>
    tpu.vector_store %arg13[%c5, %c0_2], %2 {strides = array<i32>} : memref<6x64xf32, #tpu.memory_space<vmem>>, vector<1x64xf32>,
    %cst_3 = arith.constant 0.000000e+00 : f32
    %4 = vector.broadcast %cst_3 : f32 to vector<2x64xf32>
    %c0_4 = arith.constant 0 : index
    %c0_5 = arith.constant 0 : index
    %5 = vector.load %arg14[%c0_4, %c0_5] : memref<8x64xf32, #tpu.memory_space<vmem>>, vector<2x64xf32>
    tpu.vector_store %arg14[%c0_4, %c0_5], %4 {strides = array<i32>} : memref<8x64xf32, #tpu.memory_space<vmem>>, vector<2x64xf32>,
    %cst_6 = arith.constant 0.000000e+00 : f32
    %6 = vector.broadcast %cst_6 : f32 to vector<2x64xf32>
    %c6 = arith.constant 6 : index
    %c0_7 = arith.constant 0 : index
    %7 = vector.load %arg14[%c6, %c0_7] : memref<8x64xf32, #tpu.memory_space<vmem>>, vector<2x64xf32>
    tpu.vector_store %arg14[%c6, %c0_7], %6 {strides = array<i32>} : memref<8x64xf32, #tpu.memory_space<vmem>>, vector<2x64xf32>,
    %c0_8 = arith.constant 0 : index
    %c0_9 = arith.constant 0 : index
    %c0_10 = arith.constant 0 : index
    %8 = vector.load %arg1[%c0_8, %c0_9, %c0_10] : memref<1x4x64xbf16, #tpu.memory_space<vmem>>, vector<1x4x64xbf16>
    %9 = vector.shape_cast %8 : vector<1x4x64xbf16> to vector<4x64xbf16>
    %10 = arith.extf %9 : vector<4x64xbf16> to vector<4x64xf32>
    %c1 = arith.constant 1 : index
    %c0_11 = arith.constant 0 : index
    %11 = vector.load %arg13[%c1, %c0_11] : memref<6x64xf32, #tpu.memory_space<vmem>>, vector<4x64xf32>
    tpu.vector_store %arg13[%c1, %c0_11], %10 {strides = array<i32>} : memref<6x64xf32, #tpu.memory_space<vmem>>, vector<4x64xf32>,
    %c1_12 = arith.constant 1 : index
    %c0_13 = arith.constant 0 : index
    %c0_14 = arith.constant 0 : index
    %12 = vector.load %arg2[%c1_12, %c0_13, %c0_14] : memref<3x64x64xbf16, #tpu.memory_space<vmem>>, vector<1x64x64xbf16>
    %13 = vector.shape_cast %12 : vector<1x64x64xbf16> to vector<64x64xbf16>
    %cst_15 = arith.constant dense<0.000000e+00> : vector<4x64xf32>
    %14 = tpu.matmul %9, %13, %cst_15 {dimension_numbers = #tpu.dot_dimension_numbers<[1], [0], [0], [1], [0, 0, 1, 1], [], []>} : vector<4x64xbf16>, vector<64x64xbf16>, vector<4x64xf32> -> vector<4x64xf32>
    %c0_16 = arith.constant 0 : index
    %c0_17 = arith.constant 0 : index
    %15 = vector.load %arg13[%c0_16, %c0_17] : memref<6x64xf32, #tpu.memory_space<vmem>>, vector<4x64xf32>
    %16 = arith.truncf %15 : vector<4x64xf32> to vector<4x64xbf16>
    %c0_18 = arith.constant 0 : index
    %c0_19 = arith.constant 0 : index
    %c0_20 = arith.constant 0 : index
    %17 = vector.load %arg2[%c0_18, %c0_19, %c0_20] : memref<3x64x64xbf16, #tpu.memory_space<vmem>>, vector<1x64x64xbf16>
    %18 = vector.shape_cast %17 : vector<1x64x64xbf16> to vector<64x64xbf16>
    %cst_21 = arith.constant dense<0.000000e+00> : vector<4x64xf32>
    %19 = tpu.matmul %16, %18, %cst_21 {dimension_numbers = #tpu.dot_dimension_numbers<[1], [0], [0], [1], [0, 0, 1, 1], [], []>} : vector<4x64xbf16>, vector<64x64xbf16>, vector<4x64xf32> -> vector<4x64xf32>
    %20 = arith.addf %14, %19 : vector<4x64xf32>
    %c2 = arith.constant 2 : index
    %c0_22 = arith.constant 0 : index
    %21 = vector.load %arg13[%c2, %c0_22] : memref<6x64xf32, #tpu.memory_space<vmem>>, vector<4x64xf32>
    %22 = arith.truncf %21 : vector<4x64xf32> to vector<4x64xbf16>
    %c2_23 = arith.constant 2 : index
    %c0_24 = arith.constant 0 : index
    %c0_25 = arith.constant 0 : index
    %23 = vector.load %arg2[%c2_23, %c0_24, %c0_25] : memref<3x64x64xbf16, #tpu.memory_space<vmem>>, vector<1x64x64xbf16>
    %24 = vector.shape_cast %23 : vector<1x64x64xbf16> to vector<64x64xbf16>
    %cst_26 = arith.constant dense<0.000000e+00> : vector<4x64xf32>
    %25 = tpu.matmul %22, %24, %cst_26 {dimension_numbers = #tpu.dot_dimension_numbers<[1], [0], [0], [1], [0, 0, 1, 1], [], []>} : vector<4x64xbf16>, vector<64x64xbf16>, vector<4x64xf32> -> vector<4x64xf32>
    %26 = arith.addf %20, %25 : vector<4x64xf32>
    %c0_27 = arith.constant 0 : index
    %c0_28 = arith.constant 0 : index
    %27 = vector.load %arg3[%c0_27, %c0_28] : memref<1x64xf32, #tpu.memory_space<vmem>>, vector<1x64xf32>
    %28 = vector.broadcast %27 : vector<1x64xf32> to vector<4x64xf32>
    %29 = arith.mulf %26, %28 : vector<4x64xf32>
    %c0_29 = arith.constant 0 : index
    %c0_30 = arith.constant 0 : index
    %30 = vector.load %arg4[%c0_29, %c0_30] : memref<1x64xf32, #tpu.memory_space<vmem>>, vector<1x64xf32>
    %31 = vector.broadcast %30 : vector<1x64xf32> to vector<4x64xf32>
    %32 = arith.addf %29, %31 : vector<4x64xf32>
    %cst_31 = arith.constant 0.000000e+00 : f32
    %33 = vector.broadcast %cst_31 : f32 to vector<4x64xf32>
    %34 = arith.maximumf %32, %33 : vector<4x64xf32>
    %c2_32 = arith.constant 2 : index
    %c0_33 = arith.constant 0 : index
    %35 = vector.load %arg14[%c2_32, %c0_33] : memref<8x64xf32, #tpu.memory_space<vmem>>, vector<4x64xf32>
    tpu.vector_store %arg14[%c2_32, %c0_33], %34 {strides = array<i32>} : memref<8x64xf32, #tpu.memory_space<vmem>>, vector<4x64xf32>,
    %36 = arith.truncf %34 : vector<4x64xf32> to vector<4x64xbf16>
    %c1_34 = arith.constant 1 : index
    %c0_35 = arith.constant 0 : index
    %c0_36 = arith.constant 0 : index
    %37 = vector.load %arg5[%c1_34, %c0_35, %c0_36] : memref<3x64x64xbf16, #tpu.memory_space<vmem>>, vector<1x64x64xbf16>
    %38 = vector.shape_cast %37 : vector<1x64x64xbf16> to vector<64x64xbf16>
    %cst_37 = arith.constant dense<0.000000e+00> : vector<4x64xf32>
    %39 = tpu.matmul %36, %38, %cst_37 {dimension_numbers = #tpu.dot_dimension_numbers<[1], [0], [0], [1], [0, 0, 1, 1], [], []>} : vector<4x64xbf16>, vector<64x64xbf16>, vector<4x64xf32> -> vector<4x64xf32>
    %c0_38 = arith.constant 0 : index
    %c0_39 = arith.constant 0 : index
    %40 = vector.load %arg14[%c0_38, %c0_39] : memref<8x64xf32, #tpu.memory_space<vmem>>, vector<4x64xf32>
    %41 = arith.truncf %40 : vector<4x64xf32> to vector<4x64xbf16>
    %c0_40 = arith.constant 0 : index
    %c0_41 = arith.constant 0 : index
    %c0_42 = arith.constant 0 : index
    %42 = vector.load %arg5[%c0_40, %c0_41, %c0_42] : memref<3x64x64xbf16, #tpu.memory_space<vmem>>, vector<1x64x64xbf16>
    %43 = vector.shape_cast %42 : vector<1x64x64xbf16> to vector<64x64xbf16>
    %cst_43 = arith.constant dense<0.000000e+00> : vector<4x64xf32>
    %44 = tpu.matmul %41, %43, %cst_43 {dimension_numbers = #tpu.dot_dimension_numbers<[1], [0], [0], [1], [0, 0, 1, 1], [], []>} : vector<4x64xbf16>, vector<64x64xbf16>, vector<4x64xf32> -> vector<4x64xf32>
    %45 = arith.addf %39, %44 : vector<4x64xf32>
    %c4 = arith.constant 4 : index
    %c0_44 = arith.constant 0 : index
    %46 = vector.load %arg14[%c4, %c0_44] : memref<8x64xf32, #tpu.memory_space<vmem>>, vector<4x64xf32>
    %47 = arith.truncf %46 : vector<4x64xf32> to vector<4x64xbf16>
    %c2_45 = arith.constant 2 : index
    %c0_46 = arith.constant 0 : index
    %c0_47 = arith.constant 0 : index
    %48 = vector.load %arg5[%c2_45, %c0_46, %c0_47] : memref<3x64x64xbf16, #tpu.memory_space<vmem>>, vector<1x64x64xbf16>
    %49 = vector.shape_cast %48 : vector<1x64x64xbf16> to vector<64x64xbf16>
    %cst_48 = arith.constant dense<0.000000e+00> : vector<4x64xf32>
    %50 = tpu.matmul %47, %49, %cst_48 {dimension_numbers = #tpu.dot_dimension_numbers<[1], [0], [0], [1], [0, 0, 1, 1], [], []>} : vector<4x64xbf16>, vector<64x64xbf16>, vector<4x64xf32> -> vector<4x64xf32>
    %51 = arith.addf %45, %50 : vector<4x64xf32>
    %c0_49 = arith.constant 0 : index
    %c0_50 = arith.constant 0 : index
    %52 = vector.load %arg6[%c0_49, %c0_50] : memref<1x64xf32, #tpu.memory_space<vmem>>, vector<1x64xf32>
    %53 = vector.broadcast %52 : vector<1x64xf32> to vector<4x64xf32>
    %54 = arith.mulf %51, %53 : vector<4x64xf32>
    %c0_51 = arith.constant 0 : index
    %c0_52 = arith.constant 0 : index
    %55 = vector.load %arg7[%c0_51, %c0_52] : memref<1x64xf32, #tpu.memory_space<vmem>>, vector<1x64xf32>
    %56 = vector.broadcast %55 : vector<1x64xf32> to vector<4x64xf32>
    %57 = arith.addf %54, %56 : vector<4x64xf32>
    %cst_53 = arith.constant dense<0.000000e+00> : vector<64xf32>
    %58 = vector.multi_reduction <add>, %57, %cst_53 [0] : vector<4x64xf32> to vector<64xf32>
    %59 = vector.shape_cast %58 : vector<64xf32> to vector<1x64xf32>
    %cst_54 = arith.constant 4.000000e+00 : f32
    %60 = vector.broadcast %cst_54 : f32 to vector<1x64xf32>
    %61 = arith.divf %59, %60 : vector<1x64xf32>
    %62 = arith.truncf %61 : vector<1x64xf32> to vector<1x64xbf16>
    %c0_55 = arith.constant 0 : index
    %c0_56 = arith.constant 0 : index
    %63 = vector.load %arg8[%c0_55, %c0_56] : memref<64x64xbf16, #tpu.memory_space<vmem>>, vector<64x64xbf16>
    %cst_57 = arith.constant dense<0.000000e+00> : vector<1x64xf32>
    %64 = tpu.matmul %62, %63, %cst_57 {dimension_numbers = #tpu.dot_dimension_numbers<[1], [0], [0], [1], [0, 0, 1, 1], [], []>} : vector<1x64xbf16>, vector<64x64xbf16>, vector<1x64xf32> -> vector<1x64xf32>
    %65 = arith.negf %64 : vector<1x64xf32>
    %66 = math.exp %65 : vector<1x64xf32>
    %cst_58 = arith.constant 1.000000e+00 : f32
    %67 = vector.broadcast %cst_58 : f32 to vector<1x64xf32>
    %68 = arith.addf %67, %66 : vector<1x64xf32>
    %69 = arith.divf %67, %68 : vector<1x64xf32>
    %70 = vector.broadcast %69 : vector<1x64xf32> to vector<4x64xf32>
    %71 = arith.mulf %57, %70 : vector<4x64xf32>
    %c0_59 = arith.constant 0 : index
    %c0_60 = arith.constant 0 : index
    %72 = vector.load %arg9[%c0_59, %c0_60] : memref<64x64xbf16, #tpu.memory_space<vmem>>, vector<64x64xbf16>
    %cst_61 = arith.constant dense<0.000000e+00> : vector<4x64xf32>
    %73 = tpu.matmul %9, %72, %cst_61 {dimension_numbers = #tpu.dot_dimension_numbers<[1], [0], [0], [1], [0, 0, 1, 1], [], []>} : vector<4x64xbf16>, vector<64x64xbf16>, vector<4x64xf32> -> vector<4x64xf32>
    %c0_62 = arith.constant 0 : index
    %c0_63 = arith.constant 0 : index
    %74 = vector.load %arg10[%c0_62, %c0_63] : memref<1x64xf32, #tpu.memory_space<vmem>>, vector<1x64xf32>
    %75 = vector.broadcast %74 : vector<1x64xf32> to vector<4x64xf32>
    %76 = arith.mulf %73, %75 : vector<4x64xf32>
    %c0_64 = arith.constant 0 : index
    %c0_65 = arith.constant 0 : index
    %77 = vector.load %arg11[%c0_64, %c0_65] : memref<1x64xf32, #tpu.memory_space<vmem>>, vector<1x64xf32>
    %78 = vector.broadcast %77 : vector<1x64xf32> to vector<4x64xf32>
    %79 = arith.addf %76, %78 : vector<4x64xf32>
    %80 = arith.addf %71, %79 : vector<4x64xf32>
    %cst_66 = arith.constant 0.000000e+00 : f32
    %81 = vector.broadcast %cst_66 : f32 to vector<4x64xf32>
    %82 = arith.maximumf %80, %81 : vector<4x64xf32>
    %83 = arith.truncf %82 : vector<4x64xf32> to vector<4x64xbf16>
    %c0_67 = arith.constant 0 : index
    %c0_68 = arith.constant 0 : index
    %c0_69 = arith.constant 0 : index
    %84 = vector.load %arg12[%c0_67, %c0_68, %c0_69] : memref<1x4x64xbf16, #tpu.memory_space<vmem>>, vector<1x4x64xbf16>
    %85 = vector.shape_cast %84 : vector<1x4x64xbf16> to vector<4x64xbf16>
    %86 = vector.shape_cast %83 : vector<4x64xbf16> to vector<1x4x64xbf16>
    tpu.vector_store %arg12[%c0_67, %c0_68, %c0_69], %86 {strides = array<i32>} : memref<1x4x64xbf16, #tpu.memory_space<vmem>>, vector<1x4x64xbf16>,
    return
  }
  func.func @transform_0(%arg0: i32) -> (i32, i32, i32) {
    %c0_i32 = arith.constant 0 : i32
    %c0_i32_0 = arith.constant 0 : i32
    %c0_i32_1 = arith.constant 0 : i32
    return %arg0, %c0_i32, %c0_i32_0 : i32, i32, i32
  }
  func.func @transform_1(%arg0: i32) -> (i32, i32, i32) {
    %c0_i32 = arith.constant 0 : i32
    %c0_i32_0 = arith.constant 0 : i32
    %c0_i32_1 = arith.constant 0 : i32
    %c0_i32_2 = arith.constant 0 : i32
    return %c0_i32, %c0_i32_0, %c0_i32_1 : i32, i32, i32
  }
  func.func @transform_2(%arg0: i32) -> (i32, i32) {
    %c0_i32 = arith.constant 0 : i32
    %c0_i32_0 = arith.constant 0 : i32
    %c0_i32_1 = arith.constant 0 : i32
    return %c0_i32, %c0_i32_0 : i32, i32
  }
  func.func @transform_3(%arg0: i32) -> (i32, i32) {
    %c0_i32 = arith.constant 0 : i32
    %c0_i32_0 = arith.constant 0 : i32
    %c0_i32_1 = arith.constant 0 : i32
    return %c0_i32, %c0_i32_0 : i32, i32
  }
  func.func @transform_4(%arg0: i32) -> (i32, i32, i32) {
    %c0_i32 = arith.constant 0 : i32
    %c0_i32_0 = arith.constant 0 : i32
    %c0_i32_1 = arith.constant 0 : i32
    %c0_i32_2 = arith.constant 0 : i32
    return %c0_i32, %c0_i32_0, %c0_i32_1 : i32, i32, i32
  }
  func.func @transform_5(%arg0: i32) -> (i32, i32) {
    %c0_i32 = arith.constant 0 : i32
    %c0_i32_0 = arith.constant 0 : i32
    %c0_i32_1 = arith.constant 0 : i32
    return %c0_i32, %c0_i32_0 : i32, i32
  }
  func.func @transform_6(%arg0: i32) -> (i32, i32) {
    %c0_i32 = arith.constant 0 : i32
    %c0_i32_0 = arith.constant 0 : i32
    %c0_i32_1 = arith.constant 0 : i32
    return %c0_i32, %c0_i32_0 : i32, i32
  }
  func.func @transform_7(%arg0: i32) -> (i32, i32) {
    %c0_i32 = arith.constant 0 : i32
    %c0_i32_0 = arith.constant 0 : i32
    %c0_i32_1 = arith.constant 0 : i32
    return %c0_i32, %c0_i32_0 : i32, i32
  }
  func.func @transform_8(%arg0: i32) -> (i32, i32) {
    %c0_i32 = arith.constant 0 : i32
    %c0_i32_0 = arith.constant 0 : i32
    %c0_i32_1 = arith.constant 0 : i32
    return %c0_i32, %c0_i32_0 : i32, i32
  }
  func.func @transform_9(%arg0: i32) -> (i32, i32) {
    %c0_i32 = arith.constant 0 : i32
    %c0_i32_0 = arith.constant 0 : i32
    %c0_i32_1 = arith.constant 0 : i32
    return %c0_i32, %c0_i32_0 : i32, i32
  }
  func.func @transform_10(%arg0: i32) -> (i32, i32) {
    %c0_i32 = arith.constant 0 : i32
    %c0_i32_0 = arith.constant 0 : i32
    %c0_i32_1 = arith.constant 0 : i32
    return %c0_i32, %c0_i32_0 : i32, i32
  }
  func.func @transform_11(%arg0: i32) -> (i32, i32, i32) {
    %c0_i32 = arith.constant 0 : i32
    %c0_i32_0 = arith.constant 0 : i32
    %c0_i32_1 = arith.constant 0 : i32
    return %arg0, %c0_i32, %c0_i32_0 : i32, i32, i32
  }
}

module attributes {stable_mosaic.version = 11 : i64} {
  func.func @_stem_kernel(%arg0: i32, %arg1: memref<1x8x28xbf16, #tpu.memory_space<vmem>>, %arg2: memref<28x64xbf16, #tpu.memory_space<vmem>>, %arg3: memref<1x64xf32, #tpu.memory_space<vmem>>, %arg4: memref<1x64xf32, #tpu.memory_space<vmem>>, %arg5: memref<1x8x64xbf16, #tpu.memory_space<vmem>>) attributes {dimension_semantics = [#tpu.dimension_semantics<parallel>], iteration_bounds = array<i64: 2>, scalar_prefetch = 0 : i64, scratch_operands = 0 : i64, tpu.core_type = #tpu.core_type<tc>, window_params = [{transform_indices = @transform_0, window_bounds = array<i64: 1, 8, 28>}, {pipeline_mode = #tpu.pipeline_mode<synchronous>, transform_indices = @transform_1, window_bounds = array<i64: 28, 64>}, {pipeline_mode = #tpu.pipeline_mode<synchronous>, transform_indices = @transform_2, window_bounds = array<i64: 1, 64>}, {pipeline_mode = #tpu.pipeline_mode<synchronous>, transform_indices = @transform_3, window_bounds = array<i64: 1, 64>}, {transform_indices = @transform_4, window_bounds = array<i64: 1, 8, 64>}]} {
    %c0 = arith.constant 0 : index
    %c0_0 = arith.constant 0 : index
    %c0_1 = arith.constant 0 : index
    %0 = vector.load %arg1[%c0, %c0_0, %c0_1] : memref<1x8x28xbf16, #tpu.memory_space<vmem>>, vector<1x8x28xbf16>
    %1 = vector.shape_cast %0 : vector<1x8x28xbf16> to vector<8x28xbf16>
    %c0_2 = arith.constant 0 : index
    %c0_3 = arith.constant 0 : index
    %2 = vector.load %arg2[%c0_2, %c0_3] : memref<28x64xbf16, #tpu.memory_space<vmem>>, vector<28x64xbf16>
    %cst = arith.constant dense<0.000000e+00> : vector<8x64xf32>
    %3 = tpu.matmul %1, %2, %cst {dimension_numbers = #tpu.dot_dimension_numbers<[1], [0], [0], [1], [0, 0, 1, 1], [], []>} : vector<8x28xbf16>, vector<28x64xbf16>, vector<8x64xf32> -> vector<8x64xf32>
    %cst_4 = arith.constant 0.000000e+00 : f32
    %4 = vector.broadcast %cst_4 : f32 to vector<8x64xf32>
    %5 = arith.cmpf oge, %3, %4 : vector<8x64xf32>
    %cst_5 = arith.constant 0.00999999977 : f32
    %6 = vector.broadcast %cst_5 : f32 to vector<8x64xf32>
    %7 = arith.mulf %6, %3 : vector<8x64xf32>
    %8 = arith.select %5, %3, %7 : vector<8x64xi1>, vector<8x64xf32>
    %c0_6 = arith.constant 0 : index
    %c0_7 = arith.constant 0 : index
    %9 = vector.load %arg3[%c0_6, %c0_7] : memref<1x64xf32, #tpu.memory_space<vmem>>, vector<1x64xf32>
    %10 = vector.broadcast %9 : vector<1x64xf32> to vector<8x64xf32>
    %11 = arith.mulf %8, %10 : vector<8x64xf32>
    %c0_8 = arith.constant 0 : index
    %c0_9 = arith.constant 0 : index
    %12 = vector.load %arg4[%c0_8, %c0_9] : memref<1x64xf32, #tpu.memory_space<vmem>>, vector<1x64xf32>
    %13 = vector.broadcast %12 : vector<1x64xf32> to vector<8x64xf32>
    %14 = arith.addf %11, %13 : vector<8x64xf32>
    %15 = arith.truncf %14 : vector<8x64xf32> to vector<8x64xbf16>
    %c0_10 = arith.constant 0 : index
    %c0_11 = arith.constant 0 : index
    %c0_12 = arith.constant 0 : index
    %16 = vector.load %arg5[%c0_10, %c0_11, %c0_12] : memref<1x8x64xbf16, #tpu.memory_space<vmem>>, vector<1x8x64xbf16>
    %17 = vector.shape_cast %16 : vector<1x8x64xbf16> to vector<8x64xbf16>
    %18 = vector.shape_cast %15 : vector<8x64xbf16> to vector<1x8x64xbf16>
    tpu.vector_store %arg5[%c0_10, %c0_11, %c0_12], %18 {strides = array<i32>} : memref<1x8x64xbf16, #tpu.memory_space<vmem>>, vector<1x8x64xbf16>,
    return
  }
  func.func @transform_0(%arg0: i32) -> (i32, i32, i32) {
    %c0_i32 = arith.constant 0 : i32
    %c0_i32_0 = arith.constant 0 : i32
    %c0_i32_1 = arith.constant 0 : i32
    return %arg0, %c0_i32, %c0_i32_0 : i32, i32, i32
  }
  func.func @transform_1(%arg0: i32) -> (i32, i32) {
    %c0_i32 = arith.constant 0 : i32
    %c0_i32_0 = arith.constant 0 : i32
    %c0_i32_1 = arith.constant 0 : i32
    return %c0_i32, %c0_i32_0 : i32, i32
  }
  func.func @transform_2(%arg0: i32) -> (i32, i32) {
    %c0_i32 = arith.constant 0 : i32
    %c0_i32_0 = arith.constant 0 : i32
    %c0_i32_1 = arith.constant 0 : i32
    return %c0_i32, %c0_i32_0 : i32, i32
  }
  func.func @transform_3(%arg0: i32) -> (i32, i32) {
    %c0_i32 = arith.constant 0 : i32
    %c0_i32_0 = arith.constant 0 : i32
    %c0_i32_1 = arith.constant 0 : i32
    return %c0_i32, %c0_i32_0 : i32, i32
  }
  func.func @transform_4(%arg0: i32) -> (i32, i32, i32) {
    %c0_i32 = arith.constant 0 : i32
    %c0_i32_0 = arith.constant 0 : i32
    %c0_i32_1 = arith.constant 0 : i32
    return %arg0, %c0_i32, %c0_i32_0 : i32, i32, i32
  }
}

module attributes {stable_mosaic.version = 11 : i64} {
  func.func @_block_kernel(%arg0: i32, %arg1: memref<1x8x64xbf16, #tpu.memory_space<vmem>>, %arg2: memref<3x64x64xbf16, #tpu.memory_space<vmem>>, %arg3: memref<1x64xf32, #tpu.memory_space<vmem>>, %arg4: memref<1x64xf32, #tpu.memory_space<vmem>>, %arg5: memref<3x64x64xbf16, #tpu.memory_space<vmem>>, %arg6: memref<1x64xf32, #tpu.memory_space<vmem>>, %arg7: memref<1x64xf32, #tpu.memory_space<vmem>>, %arg8: memref<64x64xbf16, #tpu.memory_space<vmem>>, %arg9: memref<1x8x64xbf16, #tpu.memory_space<vmem>>, %arg10: memref<10x64xf32, #tpu.memory_space<vmem>>, %arg11: memref<10x64xf32, #tpu.memory_space<vmem>>) attributes {dimension_semantics = [#tpu.dimension_semantics<parallel>], iteration_bounds = array<i64: 2>, scalar_prefetch = 0 : i64, scratch_operands = 2 : i64, tpu.core_type = #tpu.core_type<tc>, window_params = [{transform_indices = @transform_0, window_bounds = array<i64: 1, 8, 64>}, {pipeline_mode = #tpu.pipeline_mode<synchronous>, transform_indices = @transform_1, window_bounds = array<i64: 3, 64, 64>}, {pipeline_mode = #tpu.pipeline_mode<synchronous>, transform_indices = @transform_2, window_bounds = array<i64: 1, 64>}, {pipeline_mode = #tpu.pipeline_mode<synchronous>, transform_indices = @transform_3, window_bounds = array<i64: 1, 64>}, {pipeline_mode = #tpu.pipeline_mode<synchronous>, transform_indices = @transform_4, window_bounds = array<i64: 3, 64, 64>}, {pipeline_mode = #tpu.pipeline_mode<synchronous>, transform_indices = @transform_5, window_bounds = array<i64: 1, 64>}, {pipeline_mode = #tpu.pipeline_mode<synchronous>, transform_indices = @transform_6, window_bounds = array<i64: 1, 64>}, {pipeline_mode = #tpu.pipeline_mode<synchronous>, transform_indices = @transform_7, window_bounds = array<i64: 64, 64>}, {transform_indices = @transform_8, window_bounds = array<i64: 1, 8, 64>}]} {
    %cst = arith.constant 0.000000e+00 : f32
    %0 = vector.broadcast %cst : f32 to vector<1x64xf32>
    %c0 = arith.constant 0 : index
    %c0_0 = arith.constant 0 : index
    %1 = vector.load %arg10[%c0, %c0_0] : memref<10x64xf32, #tpu.memory_space<vmem>>, vector<1x64xf32>
    tpu.vector_store %arg10[%c0, %c0_0], %0 {strides = array<i32>} : memref<10x64xf32, #tpu.memory_space<vmem>>, vector<1x64xf32>,
    %cst_1 = arith.constant 0.000000e+00 : f32
    %2 = vector.broadcast %cst_1 : f32 to vector<1x64xf32>
    %c9 = arith.constant 9 : index
    %c0_2 = arith.constant 0 : index
    %3 = vector.load %arg10[%c9, %c0_2] : memref<10x64xf32, #tpu.memory_space<vmem>>, vector<1x64xf32>
    tpu.vector_store %arg10[%c9, %c0_2], %2 {strides = array<i32>} : memref<10x64xf32, #tpu.memory_space<vmem>>, vector<1x64xf32>,
    %cst_3 = arith.constant 0.000000e+00 : f32
    %4 = vector.broadcast %cst_3 : f32 to vector<1x64xf32>
    %c0_4 = arith.constant 0 : index
    %c0_5 = arith.constant 0 : index
    %5 = vector.load %arg11[%c0_4, %c0_5] : memref<10x64xf32, #tpu.memory_space<vmem>>, vector<1x64xf32>
    tpu.vector_store %arg11[%c0_4, %c0_5], %4 {strides = array<i32>} : memref<10x64xf32, #tpu.memory_space<vmem>>, vector<1x64xf32>,
    %cst_6 = arith.constant 0.000000e+00 : f32
    %6 = vector.broadcast %cst_6 : f32 to vector<1x64xf32>
    %c9_7 = arith.constant 9 : index
    %c0_8 = arith.constant 0 : index
    %7 = vector.load %arg11[%c9_7, %c0_8] : memref<10x64xf32, #tpu.memory_space<vmem>>, vector<1x64xf32>
    tpu.vector_store %arg11[%c9_7, %c0_8], %6 {strides = array<i32>} : memref<10x64xf32, #tpu.memory_space<vmem>>, vector<1x64xf32>,
    %c0_9 = arith.constant 0 : index
    %c0_10 = arith.constant 0 : index
    %c0_11 = arith.constant 0 : index
    %8 = vector.load %arg1[%c0_9, %c0_10, %c0_11] : memref<1x8x64xbf16, #tpu.memory_space<vmem>>, vector<1x8x64xbf16>
    %9 = vector.shape_cast %8 : vector<1x8x64xbf16> to vector<8x64xbf16>
    %10 = arith.extf %9 : vector<8x64xbf16> to vector<8x64xf32>
    %c1 = arith.constant 1 : index
    %c0_12 = arith.constant 0 : index
    %11 = vector.load %arg10[%c1, %c0_12] : memref<10x64xf32, #tpu.memory_space<vmem>>, vector<8x64xf32>
    tpu.vector_store %arg10[%c1, %c0_12], %10 {strides = array<i32>} : memref<10x64xf32, #tpu.memory_space<vmem>>, vector<8x64xf32>,
    %c1_13 = arith.constant 1 : index
    %c0_14 = arith.constant 0 : index
    %c0_15 = arith.constant 0 : index
    %12 = vector.load %arg2[%c1_13, %c0_14, %c0_15] : memref<3x64x64xbf16, #tpu.memory_space<vmem>>, vector<1x64x64xbf16>
    %13 = vector.shape_cast %12 : vector<1x64x64xbf16> to vector<64x64xbf16>
    %cst_16 = arith.constant dense<0.000000e+00> : vector<8x64xf32>
    %14 = tpu.matmul %9, %13, %cst_16 {dimension_numbers = #tpu.dot_dimension_numbers<[1], [0], [0], [1], [0, 0, 1, 1], [], []>} : vector<8x64xbf16>, vector<64x64xbf16>, vector<8x64xf32> -> vector<8x64xf32>
    %c0_17 = arith.constant 0 : index
    %c0_18 = arith.constant 0 : index
    %15 = vector.load %arg10[%c0_17, %c0_18] : memref<10x64xf32, #tpu.memory_space<vmem>>, vector<8x64xf32>
    %16 = arith.truncf %15 : vector<8x64xf32> to vector<8x64xbf16>
    %c0_19 = arith.constant 0 : index
    %c0_20 = arith.constant 0 : index
    %c0_21 = arith.constant 0 : index
    %17 = vector.load %arg2[%c0_19, %c0_20, %c0_21] : memref<3x64x64xbf16, #tpu.memory_space<vmem>>, vector<1x64x64xbf16>
    %18 = vector.shape_cast %17 : vector<1x64x64xbf16> to vector<64x64xbf16>
    %cst_22 = arith.constant dense<0.000000e+00> : vector<8x64xf32>
    %19 = tpu.matmul %16, %18, %cst_22 {dimension_numbers = #tpu.dot_dimension_numbers<[1], [0], [0], [1], [0, 0, 1, 1], [], []>} : vector<8x64xbf16>, vector<64x64xbf16>, vector<8x64xf32> -> vector<8x64xf32>
    %20 = arith.addf %14, %19 : vector<8x64xf32>
    %c2 = arith.constant 2 : index
    %c0_23 = arith.constant 0 : index
    %21 = vector.load %arg10[%c2, %c0_23] : memref<10x64xf32, #tpu.memory_space<vmem>>, vector<8x64xf32>
    %22 = arith.truncf %21 : vector<8x64xf32> to vector<8x64xbf16>
    %c2_24 = arith.constant 2 : index
    %c0_25 = arith.constant 0 : index
    %c0_26 = arith.constant 0 : index
    %23 = vector.load %arg2[%c2_24, %c0_25, %c0_26] : memref<3x64x64xbf16, #tpu.memory_space<vmem>>, vector<1x64x64xbf16>
    %24 = vector.shape_cast %23 : vector<1x64x64xbf16> to vector<64x64xbf16>
    %cst_27 = arith.constant dense<0.000000e+00> : vector<8x64xf32>
    %25 = tpu.matmul %22, %24, %cst_27 {dimension_numbers = #tpu.dot_dimension_numbers<[1], [0], [0], [1], [0, 0, 1, 1], [], []>} : vector<8x64xbf16>, vector<64x64xbf16>, vector<8x64xf32> -> vector<8x64xf32>
    %26 = arith.addf %20, %25 : vector<8x64xf32>
    %c0_28 = arith.constant 0 : index
    %c0_29 = arith.constant 0 : index
    %27 = vector.load %arg3[%c0_28, %c0_29] : memref<1x64xf32, #tpu.memory_space<vmem>>, vector<1x64xf32>
    %28 = vector.broadcast %27 : vector<1x64xf32> to vector<8x64xf32>
    %29 = arith.mulf %26, %28 : vector<8x64xf32>
    %c0_30 = arith.constant 0 : index
    %c0_31 = arith.constant 0 : index
    %30 = vector.load %arg4[%c0_30, %c0_31] : memref<1x64xf32, #tpu.memory_space<vmem>>, vector<1x64xf32>
    %31 = vector.broadcast %30 : vector<1x64xf32> to vector<8x64xf32>
    %32 = arith.addf %29, %31 : vector<8x64xf32>
    %cst_32 = arith.constant 0.000000e+00 : f32
    %33 = vector.broadcast %cst_32 : f32 to vector<8x64xf32>
    %34 = arith.maximumf %32, %33 : vector<8x64xf32>
    %c1_33 = arith.constant 1 : index
    %c0_34 = arith.constant 0 : index
    %35 = vector.load %arg11[%c1_33, %c0_34] : memref<10x64xf32, #tpu.memory_space<vmem>>, vector<8x64xf32>
    tpu.vector_store %arg11[%c1_33, %c0_34], %34 {strides = array<i32>} : memref<10x64xf32, #tpu.memory_space<vmem>>, vector<8x64xf32>,
    %36 = arith.truncf %34 : vector<8x64xf32> to vector<8x64xbf16>
    %c1_35 = arith.constant 1 : index
    %c0_36 = arith.constant 0 : index
    %c0_37 = arith.constant 0 : index
    %37 = vector.load %arg5[%c1_35, %c0_36, %c0_37] : memref<3x64x64xbf16, #tpu.memory_space<vmem>>, vector<1x64x64xbf16>
    %38 = vector.shape_cast %37 : vector<1x64x64xbf16> to vector<64x64xbf16>
    %cst_38 = arith.constant dense<0.000000e+00> : vector<8x64xf32>
    %39 = tpu.matmul %36, %38, %cst_38 {dimension_numbers = #tpu.dot_dimension_numbers<[1], [0], [0], [1], [0, 0, 1, 1], [], []>} : vector<8x64xbf16>, vector<64x64xbf16>, vector<8x64xf32> -> vector<8x64xf32>
    %c0_39 = arith.constant 0 : index
    %c0_40 = arith.constant 0 : index
    %40 = vector.load %arg11[%c0_39, %c0_40] : memref<10x64xf32, #tpu.memory_space<vmem>>, vector<8x64xf32>
    %41 = arith.truncf %40 : vector<8x64xf32> to vector<8x64xbf16>
    %c0_41 = arith.constant 0 : index
    %c0_42 = arith.constant 0 : index
    %c0_43 = arith.constant 0 : index
    %42 = vector.load %arg5[%c0_41, %c0_42, %c0_43] : memref<3x64x64xbf16, #tpu.memory_space<vmem>>, vector<1x64x64xbf16>
    %43 = vector.shape_cast %42 : vector<1x64x64xbf16> to vector<64x64xbf16>
    %cst_44 = arith.constant dense<0.000000e+00> : vector<8x64xf32>
    %44 = tpu.matmul %41, %43, %cst_44 {dimension_numbers = #tpu.dot_dimension_numbers<[1], [0], [0], [1], [0, 0, 1, 1], [], []>} : vector<8x64xbf16>, vector<64x64xbf16>, vector<8x64xf32> -> vector<8x64xf32>
    %45 = arith.addf %39, %44 : vector<8x64xf32>
    %c2_45 = arith.constant 2 : index
    %c0_46 = arith.constant 0 : index
    %46 = vector.load %arg11[%c2_45, %c0_46] : memref<10x64xf32, #tpu.memory_space<vmem>>, vector<8x64xf32>
    %47 = arith.truncf %46 : vector<8x64xf32> to vector<8x64xbf16>
    %c2_47 = arith.constant 2 : index
    %c0_48 = arith.constant 0 : index
    %c0_49 = arith.constant 0 : index
    %48 = vector.load %arg5[%c2_47, %c0_48, %c0_49] : memref<3x64x64xbf16, #tpu.memory_space<vmem>>, vector<1x64x64xbf16>
    %49 = vector.shape_cast %48 : vector<1x64x64xbf16> to vector<64x64xbf16>
    %cst_50 = arith.constant dense<0.000000e+00> : vector<8x64xf32>
    %50 = tpu.matmul %47, %49, %cst_50 {dimension_numbers = #tpu.dot_dimension_numbers<[1], [0], [0], [1], [0, 0, 1, 1], [], []>} : vector<8x64xbf16>, vector<64x64xbf16>, vector<8x64xf32> -> vector<8x64xf32>
    %51 = arith.addf %45, %50 : vector<8x64xf32>
    %c0_51 = arith.constant 0 : index
    %c0_52 = arith.constant 0 : index
    %52 = vector.load %arg6[%c0_51, %c0_52] : memref<1x64xf32, #tpu.memory_space<vmem>>, vector<1x64xf32>
    %53 = vector.broadcast %52 : vector<1x64xf32> to vector<8x64xf32>
    %54 = arith.mulf %51, %53 : vector<8x64xf32>
    %c0_53 = arith.constant 0 : index
    %c0_54 = arith.constant 0 : index
    %55 = vector.load %arg7[%c0_53, %c0_54] : memref<1x64xf32, #tpu.memory_space<vmem>>, vector<1x64xf32>
    %56 = vector.broadcast %55 : vector<1x64xf32> to vector<8x64xf32>
    %57 = arith.addf %54, %56 : vector<8x64xf32>
    %cst_55 = arith.constant dense<0.000000e+00> : vector<64xf32>
    %58 = vector.multi_reduction <add>, %57, %cst_55 [0] : vector<8x64xf32> to vector<64xf32>
    %59 = vector.shape_cast %58 : vector<64xf32> to vector<1x64xf32>
    %cst_56 = arith.constant 8.000000e+00 : f32
    %60 = vector.broadcast %cst_56 : f32 to vector<1x64xf32>
    %61 = arith.divf %59, %60 : vector<1x64xf32>
    %62 = arith.truncf %61 : vector<1x64xf32> to vector<1x64xbf16>
    %c0_57 = arith.constant 0 : index
    %c0_58 = arith.constant 0 : index
    %63 = vector.load %arg8[%c0_57, %c0_58] : memref<64x64xbf16, #tpu.memory_space<vmem>>, vector<64x64xbf16>
    %cst_59 = arith.constant dense<0.000000e+00> : vector<1x64xf32>
    %64 = tpu.matmul %62, %63, %cst_59 {dimension_numbers = #tpu.dot_dimension_numbers<[1], [0], [0], [1], [0, 0, 1, 1], [], []>} : vector<1x64xbf16>, vector<64x64xbf16>, vector<1x64xf32> -> vector<1x64xf32>
    %65 = arith.negf %64 : vector<1x64xf32>
    %66 = math.exp %65 : vector<1x64xf32>
    %cst_60 = arith.constant 1.000000e+00 : f32
    %67 = vector.broadcast %cst_60 : f32 to vector<1x64xf32>
    %68 = arith.addf %67, %66 : vector<1x64xf32>
    %69 = arith.divf %67, %68 : vector<1x64xf32>
    %70 = vector.broadcast %69 : vector<1x64xf32> to vector<8x64xf32>
    %71 = arith.mulf %57, %70 : vector<8x64xf32>
    %72 = arith.extf %9 : vector<8x64xbf16> to vector<8x64xf32>
    %73 = arith.addf %71, %72 : vector<8x64xf32>
    %cst_61 = arith.constant 0.000000e+00 : f32
    %74 = vector.broadcast %cst_61 : f32 to vector<8x64xf32>
    %75 = arith.maximumf %73, %74 : vector<8x64xf32>
    %76 = arith.truncf %75 : vector<8x64xf32> to vector<8x64xbf16>
    %c0_62 = arith.constant 0 : index
    %c0_63 = arith.constant 0 : index
    %c0_64 = arith.constant 0 : index
    %77 = vector.load %arg9[%c0_62, %c0_63, %c0_64] : memref<1x8x64xbf16, #tpu.memory_space<vmem>>, vector<1x8x64xbf16>
    %78 = vector.shape_cast %77 : vector<1x8x64xbf16> to vector<8x64xbf16>
    %79 = vector.shape_cast %76 : vector<8x64xbf16> to vector<1x8x64xbf16>
    tpu.vector_store %arg9[%c0_62, %c0_63, %c0_64], %79 {strides = array<i32>} : memref<1x8x64xbf16, #tpu.memory_space<vmem>>, vector<1x8x64xbf16>,
    return
  }
  func.func @transform_0(%arg0: i32) -> (i32, i32, i32) {
    %c0_i32 = arith.constant 0 : i32
    %c0_i32_0 = arith.constant 0 : i32
    %c0_i32_1 = arith.constant 0 : i32
    return %arg0, %c0_i32, %c0_i32_0 : i32, i32, i32
  }
  func.func @transform_1(%arg0: i32) -> (i32, i32, i32) {
    %c0_i32 = arith.constant 0 : i32
    %c0_i32_0 = arith.constant 0 : i32
    %c0_i32_1 = arith.constant 0 : i32
    %c0_i32_2 = arith.constant 0 : i32
    return %c0_i32, %c0_i32_0, %c0_i32_1 : i32, i32, i32
  }
  func.func @transform_2(%arg0: i32) -> (i32, i32) {
    %c0_i32 = arith.constant 0 : i32
    %c0_i32_0 = arith.constant 0 : i32
    %c0_i32_1 = arith.constant 0 : i32
    return %c0_i32, %c0_i32_0 : i32, i32
  }
  func.func @transform_3(%arg0: i32) -> (i32, i32) {
    %c0_i32 = arith.constant 0 : i32
    %c0_i32_0 = arith.constant 0 : i32
    %c0_i32_1 = arith.constant 0 : i32
    return %c0_i32, %c0_i32_0 : i32, i32
  }
  func.func @transform_4(%arg0: i32) -> (i32, i32, i32) {
    %c0_i32 = arith.constant 0 : i32
    %c0_i32_0 = arith.constant 0 : i32
    %c0_i32_1 = arith.constant 0 : i32
    %c0_i32_2 = arith.constant 0 : i32
    return %c0_i32, %c0_i32_0, %c0_i32_1 : i32, i32, i32
  }
  func.func @transform_5(%arg0: i32) -> (i32, i32) {
    %c0_i32 = arith.constant 0 : i32
    %c0_i32_0 = arith.constant 0 : i32
    %c0_i32_1 = arith.constant 0 : i32
    return %c0_i32, %c0_i32_0 : i32, i32
  }
  func.func @transform_6(%arg0: i32) -> (i32, i32) {
    %c0_i32 = arith.constant 0 : i32
    %c0_i32_0 = arith.constant 0 : i32
    %c0_i32_1 = arith.constant 0 : i32
    return %c0_i32, %c0_i32_0 : i32, i32
  }
  func.func @transform_7(%arg0: i32) -> (i32, i32) {
    %c0_i32 = arith.constant 0 : i32
    %c0_i32_0 = arith.constant 0 : i32
    %c0_i32_1 = arith.constant 0 : i32
    return %c0_i32, %c0_i32_0 : i32, i32
  }
  func.func @transform_8(%arg0: i32) -> (i32, i32, i32) {
    %c0_i32 = arith.constant 0 : i32
    %c0_i32_0 = arith.constant 0 : i32
    %c0_i32_1 = arith.constant 0 : i32
    return %arg0, %c0_i32, %c0_i32_0 : i32, i32, i32
  }
}

module attributes {stable_mosaic.version = 11 : i64} {
  func.func @_block_kernel(%arg0: i32, %arg1: memref<1x2x64xbf16, #tpu.memory_space<vmem>>, %arg2: memref<3x64x64xbf16, #tpu.memory_space<vmem>>, %arg3: memref<1x64xf32, #tpu.memory_space<vmem>>, %arg4: memref<1x64xf32, #tpu.memory_space<vmem>>, %arg5: memref<3x64x64xbf16, #tpu.memory_space<vmem>>, %arg6: memref<1x64xf32, #tpu.memory_space<vmem>>, %arg7: memref<1x64xf32, #tpu.memory_space<vmem>>, %arg8: memref<64x64xbf16, #tpu.memory_space<vmem>>, %arg9: memref<64x64xbf16, #tpu.memory_space<vmem>>, %arg10: memref<1x64xf32, #tpu.memory_space<vmem>>, %arg11: memref<1x64xf32, #tpu.memory_space<vmem>>, %arg12: memref<1x2x64xbf16, #tpu.memory_space<vmem>>, %arg13: memref<6x64xf32, #tpu.memory_space<vmem>>, %arg14: memref<10x64xf32, #tpu.memory_space<vmem>>) attributes {dimension_semantics = [#tpu.dimension_semantics<parallel>], iteration_bounds = array<i64: 2>, scalar_prefetch = 0 : i64, scratch_operands = 2 : i64, tpu.core_type = #tpu.core_type<tc>, window_params = [{transform_indices = @transform_0, window_bounds = array<i64: 1, 2, 64>}, {pipeline_mode = #tpu.pipeline_mode<synchronous>, transform_indices = @transform_1, window_bounds = array<i64: 3, 64, 64>}, {pipeline_mode = #tpu.pipeline_mode<synchronous>, transform_indices = @transform_2, window_bounds = array<i64: 1, 64>}, {pipeline_mode = #tpu.pipeline_mode<synchronous>, transform_indices = @transform_3, window_bounds = array<i64: 1, 64>}, {pipeline_mode = #tpu.pipeline_mode<synchronous>, transform_indices = @transform_4, window_bounds = array<i64: 3, 64, 64>}, {pipeline_mode = #tpu.pipeline_mode<synchronous>, transform_indices = @transform_5, window_bounds = array<i64: 1, 64>}, {pipeline_mode = #tpu.pipeline_mode<synchronous>, transform_indices = @transform_6, window_bounds = array<i64: 1, 64>}, {pipeline_mode = #tpu.pipeline_mode<synchronous>, transform_indices = @transform_7, window_bounds = array<i64: 64, 64>}, {pipeline_mode = #tpu.pipeline_mode<synchronous>, transform_indices = @transform_8, window_bounds = array<i64: 64, 64>}, {pipeline_mode = #tpu.pipeline_mode<synchronous>, transform_indices = @transform_9, window_bounds = array<i64: 1, 64>}, {pipeline_mode = #tpu.pipeline_mode<synchronous>, transform_indices = @transform_10, window_bounds = array<i64: 1, 64>}, {transform_indices = @transform_11, window_bounds = array<i64: 1, 2, 64>}]} {
    %cst = arith.constant 0.000000e+00 : f32
    %0 = vector.broadcast %cst : f32 to vector<2x64xf32>
    %c0 = arith.constant 0 : index
    %c0_0 = arith.constant 0 : index
    %1 = vector.load %arg13[%c0, %c0_0] : memref<6x64xf32, #tpu.memory_space<vmem>>, vector<2x64xf32>
    tpu.vector_store %arg13[%c0, %c0_0], %0 {strides = array<i32>} : memref<6x64xf32, #tpu.memory_space<vmem>>, vector<2x64xf32>,
    %cst_1 = arith.constant 0.000000e+00 : f32
    %2 = vector.broadcast %cst_1 : f32 to vector<2x64xf32>
    %c4 = arith.constant 4 : index
    %c0_2 = arith.constant 0 : index
    %3 = vector.load %arg13[%c4, %c0_2] : memref<6x64xf32, #tpu.memory_space<vmem>>, vector<2x64xf32>
    tpu.vector_store %arg13[%c4, %c0_2], %2 {strides = array<i32>} : memref<6x64xf32, #tpu.memory_space<vmem>>, vector<2x64xf32>,
    %cst_3 = arith.constant 0.000000e+00 : f32
    %4 = vector.broadcast %cst_3 : f32 to vector<4x64xf32>
    %c0_4 = arith.constant 0 : index
    %c0_5 = arith.constant 0 : index
    %5 = vector.load %arg14[%c0_4, %c0_5] : memref<10x64xf32, #tpu.memory_space<vmem>>, vector<4x64xf32>
    tpu.vector_store %arg14[%c0_4, %c0_5], %4 {strides = array<i32>} : memref<10x64xf32, #tpu.memory_space<vmem>>, vector<4x64xf32>,
    %cst_6 = arith.constant 0.000000e+00 : f32
    %6 = vector.broadcast %cst_6 : f32 to vector<4x64xf32>
    %c6 = arith.constant 6 : index
    %c0_7 = arith.constant 0 : index
    %7 = vector.load %arg14[%c6, %c0_7] : memref<10x64xf32, #tpu.memory_space<vmem>>, vector<4x64xf32>
    tpu.vector_store %arg14[%c6, %c0_7], %6 {strides = array<i32>} : memref<10x64xf32, #tpu.memory_space<vmem>>, vector<4x64xf32>,
    %c0_8 = arith.constant 0 : index
    %c0_9 = arith.constant 0 : index
    %c0_10 = arith.constant 0 : index
    %8 = vector.load %arg1[%c0_8, %c0_9, %c0_10] : memref<1x2x64xbf16, #tpu.memory_space<vmem>>, vector<1x2x64xbf16>
    %9 = vector.shape_cast %8 : vector<1x2x64xbf16> to vector<2x64xbf16>
    %10 = arith.extf %9 : vector<2x64xbf16> to vector<2x64xf32>
    %c2 = arith.constant 2 : index
    %c0_11 = arith.constant 0 : index
    %11 = vector.load %arg13[%c2, %c0_11] : memref<6x64xf32, #tpu.memory_space<vmem>>, vector<2x64xf32>
    tpu.vector_store %arg13[%c2, %c0_11], %10 {strides = array<i32>} : memref<6x64xf32, #tpu.memory_space<vmem>>, vector<2x64xf32>,
    %c1 = arith.constant 1 : index
    %c0_12 = arith.constant 0 : index
    %c0_13 = arith.constant 0 : index
    %12 = vector.load %arg2[%c1, %c0_12, %c0_13] : memref<3x64x64xbf16, #tpu.memory_space<vmem>>, vector<1x64x64xbf16>
    %13 = vector.shape_cast %12 : vector<1x64x64xbf16> to vector<64x64xbf16>
    %cst_14 = arith.constant dense<0.000000e+00> : vector<2x64xf32>
    %14 = tpu.matmul %9, %13, %cst_14 {dimension_numbers = #tpu.dot_dimension_numbers<[1], [0], [0], [1], [0, 0, 1, 1], [], []>} : vector<2x64xbf16>, vector<64x64xbf16>, vector<2x64xf32> -> vector<2x64xf32>
    %c0_15 = arith.constant 0 : index
    %c0_16 = arith.constant 0 : index
    %15 = vector.load %arg13[%c0_15, %c0_16] : memref<6x64xf32, #tpu.memory_space<vmem>>, vector<2x64xf32>
    %16 = arith.truncf %15 : vector<2x64xf32> to vector<2x64xbf16>
    %c0_17 = arith.constant 0 : index
    %c0_18 = arith.constant 0 : index
    %c0_19 = arith.constant 0 : index
    %17 = vector.load %arg2[%c0_17, %c0_18, %c0_19] : memref<3x64x64xbf16, #tpu.memory_space<vmem>>, vector<1x64x64xbf16>
    %18 = vector.shape_cast %17 : vector<1x64x64xbf16> to vector<64x64xbf16>
    %cst_20 = arith.constant dense<0.000000e+00> : vector<2x64xf32>
    %19 = tpu.matmul %16, %18, %cst_20 {dimension_numbers = #tpu.dot_dimension_numbers<[1], [0], [0], [1], [0, 0, 1, 1], [], []>} : vector<2x64xbf16>, vector<64x64xbf16>, vector<2x64xf32> -> vector<2x64xf32>
    %20 = arith.addf %14, %19 : vector<2x64xf32>
    %c4_21 = arith.constant 4 : index
    %c0_22 = arith.constant 0 : index
    %21 = vector.load %arg13[%c4_21, %c0_22] : memref<6x64xf32, #tpu.memory_space<vmem>>, vector<2x64xf32>
    %22 = arith.truncf %21 : vector<2x64xf32> to vector<2x64xbf16>
    %c2_23 = arith.constant 2 : index
    %c0_24 = arith.constant 0 : index
    %c0_25 = arith.constant 0 : index
    %23 = vector.load %arg2[%c2_23, %c0_24, %c0_25] : memref<3x64x64xbf16, #tpu.memory_space<vmem>>, vector<1x64x64xbf16>
    %24 = vector.shape_cast %23 : vector<1x64x64xbf16> to vector<64x64xbf16>
    %cst_26 = arith.constant dense<0.000000e+00> : vector<2x64xf32>
    %25 = tpu.matmul %22, %24, %cst_26 {dimension_numbers = #tpu.dot_dimension_numbers<[1], [0], [0], [1], [0, 0, 1, 1], [], []>} : vector<2x64xbf16>, vector<64x64xbf16>, vector<2x64xf32> -> vector<2x64xf32>
    %26 = arith.addf %20, %25 : vector<2x64xf32>
    %c0_27 = arith.constant 0 : index
    %c0_28 = arith.constant 0 : index
    %27 = vector.load %arg3[%c0_27, %c0_28] : memref<1x64xf32, #tpu.memory_space<vmem>>, vector<1x64xf32>
    %28 = vector.broadcast %27 : vector<1x64xf32> to vector<2x64xf32>
    %29 = arith.mulf %26, %28 : vector<2x64xf32>
    %c0_29 = arith.constant 0 : index
    %c0_30 = arith.constant 0 : index
    %30 = vector.load %arg4[%c0_29, %c0_30] : memref<1x64xf32, #tpu.memory_space<vmem>>, vector<1x64xf32>
    %31 = vector.broadcast %30 : vector<1x64xf32> to vector<2x64xf32>
    %32 = arith.addf %29, %31 : vector<2x64xf32>
    %cst_31 = arith.constant 0.000000e+00 : f32
    %33 = vector.broadcast %cst_31 : f32 to vector<2x64xf32>
    %34 = arith.maximumf %32, %33 : vector<2x64xf32>
    %c4_32 = arith.constant 4 : index
    %c0_33 = arith.constant 0 : index
    %35 = vector.load %arg14[%c4_32, %c0_33] : memref<10x64xf32, #tpu.memory_space<vmem>>, vector<2x64xf32>
    tpu.vector_store %arg14[%c4_32, %c0_33], %34 {strides = array<i32>} : memref<10x64xf32, #tpu.memory_space<vmem>>, vector<2x64xf32>,
    %36 = arith.truncf %34 : vector<2x64xf32> to vector<2x64xbf16>
    %c1_34 = arith.constant 1 : index
    %c0_35 = arith.constant 0 : index
    %c0_36 = arith.constant 0 : index
    %37 = vector.load %arg5[%c1_34, %c0_35, %c0_36] : memref<3x64x64xbf16, #tpu.memory_space<vmem>>, vector<1x64x64xbf16>
    %38 = vector.shape_cast %37 : vector<1x64x64xbf16> to vector<64x64xbf16>
    %cst_37 = arith.constant dense<0.000000e+00> : vector<2x64xf32>
    %39 = tpu.matmul %36, %38, %cst_37 {dimension_numbers = #tpu.dot_dimension_numbers<[1], [0], [0], [1], [0, 0, 1, 1], [], []>} : vector<2x64xbf16>, vector<64x64xbf16>, vector<2x64xf32> -> vector<2x64xf32>
    %c0_38 = arith.constant 0 : index
    %c0_39 = arith.constant 0 : index
    %40 = vector.load %arg14[%c0_38, %c0_39] : memref<10x64xf32, #tpu.memory_space<vmem>>, vector<2x64xf32>
    %41 = arith.truncf %40 : vector<2x64xf32> to vector<2x64xbf16>
    %c0_40 = arith.constant 0 : index
    %c0_41 = arith.constant 0 : index
    %c0_42 = arith.constant 0 : index
    %42 = vector.load %arg5[%c0_40, %c0_41, %c0_42] : memref<3x64x64xbf16, #tpu.memory_space<vmem>>, vector<1x64x64xbf16>
    %43 = vector.shape_cast %42 : vector<1x64x64xbf16> to vector<64x64xbf16>
    %cst_43 = arith.constant dense<0.000000e+00> : vector<2x64xf32>
    %44 = tpu.matmul %41, %43, %cst_43 {dimension_numbers = #tpu.dot_dimension_numbers<[1], [0], [0], [1], [0, 0, 1, 1], [], []>} : vector<2x64xbf16>, vector<64x64xbf16>, vector<2x64xf32> -> vector<2x64xf32>
    %45 = arith.addf %39, %44 : vector<2x64xf32>
    %c8 = arith.constant 8 : index
    %c0_44 = arith.constant 0 : index
    %46 = vector.load %arg14[%c8, %c0_44] : memref<10x64xf32, #tpu.memory_space<vmem>>, vector<2x64xf32>
    %47 = arith.truncf %46 : vector<2x64xf32> to vector<2x64xbf16>
    %c2_45 = arith.constant 2 : index
    %c0_46 = arith.constant 0 : index
    %c0_47 = arith.constant 0 : index
    %48 = vector.load %arg5[%c2_45, %c0_46, %c0_47] : memref<3x64x64xbf16, #tpu.memory_space<vmem>>, vector<1x64x64xbf16>
    %49 = vector.shape_cast %48 : vector<1x64x64xbf16> to vector<64x64xbf16>
    %cst_48 = arith.constant dense<0.000000e+00> : vector<2x64xf32>
    %50 = tpu.matmul %47, %49, %cst_48 {dimension_numbers = #tpu.dot_dimension_numbers<[1], [0], [0], [1], [0, 0, 1, 1], [], []>} : vector<2x64xbf16>, vector<64x64xbf16>, vector<2x64xf32> -> vector<2x64xf32>
    %51 = arith.addf %45, %50 : vector<2x64xf32>
    %c0_49 = arith.constant 0 : index
    %c0_50 = arith.constant 0 : index
    %52 = vector.load %arg6[%c0_49, %c0_50] : memref<1x64xf32, #tpu.memory_space<vmem>>, vector<1x64xf32>
    %53 = vector.broadcast %52 : vector<1x64xf32> to vector<2x64xf32>
    %54 = arith.mulf %51, %53 : vector<2x64xf32>
    %c0_51 = arith.constant 0 : index
    %c0_52 = arith.constant 0 : index
    %55 = vector.load %arg7[%c0_51, %c0_52] : memref<1x64xf32, #tpu.memory_space<vmem>>, vector<1x64xf32>
    %56 = vector.broadcast %55 : vector<1x64xf32> to vector<2x64xf32>
    %57 = arith.addf %54, %56 : vector<2x64xf32>
    %cst_53 = arith.constant dense<0.000000e+00> : vector<64xf32>
    %58 = vector.multi_reduction <add>, %57, %cst_53 [0] : vector<2x64xf32> to vector<64xf32>
    %59 = vector.shape_cast %58 : vector<64xf32> to vector<1x64xf32>
    %cst_54 = arith.constant 2.000000e+00 : f32
    %60 = vector.broadcast %cst_54 : f32 to vector<1x64xf32>
    %61 = arith.divf %59, %60 : vector<1x64xf32>
    %62 = arith.truncf %61 : vector<1x64xf32> to vector<1x64xbf16>
    %c0_55 = arith.constant 0 : index
    %c0_56 = arith.constant 0 : index
    %63 = vector.load %arg8[%c0_55, %c0_56] : memref<64x64xbf16, #tpu.memory_space<vmem>>, vector<64x64xbf16>
    %cst_57 = arith.constant dense<0.000000e+00> : vector<1x64xf32>
    %64 = tpu.matmul %62, %63, %cst_57 {dimension_numbers = #tpu.dot_dimension_numbers<[1], [0], [0], [1], [0, 0, 1, 1], [], []>} : vector<1x64xbf16>, vector<64x64xbf16>, vector<1x64xf32> -> vector<1x64xf32>
    %65 = arith.negf %64 : vector<1x64xf32>
    %66 = math.exp %65 : vector<1x64xf32>
    %cst_58 = arith.constant 1.000000e+00 : f32
    %67 = vector.broadcast %cst_58 : f32 to vector<1x64xf32>
    %68 = arith.addf %67, %66 : vector<1x64xf32>
    %69 = arith.divf %67, %68 : vector<1x64xf32>
    %70 = vector.broadcast %69 : vector<1x64xf32> to vector<2x64xf32>
    %71 = arith.mulf %57, %70 : vector<2x64xf32>
    %c0_59 = arith.constant 0 : index
    %c0_60 = arith.constant 0 : index
    %72 = vector.load %arg9[%c0_59, %c0_60] : memref<64x64xbf16, #tpu.memory_space<vmem>>, vector<64x64xbf16>
    %cst_61 = arith.constant dense<0.000000e+00> : vector<2x64xf32>
    %73 = tpu.matmul %9, %72, %cst_61 {dimension_numbers = #tpu.dot_dimension_numbers<[1], [0], [0], [1], [0, 0, 1, 1], [], []>} : vector<2x64xbf16>, vector<64x64xbf16>, vector<2x64xf32> -> vector<2x64xf32>
    %c0_62 = arith.constant 0 : index
    %c0_63 = arith.constant 0 : index
    %74 = vector.load %arg10[%c0_62, %c0_63] : memref<1x64xf32, #tpu.memory_space<vmem>>, vector<1x64xf32>
    %75 = vector.broadcast %74 : vector<1x64xf32> to vector<2x64xf32>
    %76 = arith.mulf %73, %75 : vector<2x64xf32>
    %c0_64 = arith.constant 0 : index
    %c0_65 = arith.constant 0 : index
    %77 = vector.load %arg11[%c0_64, %c0_65] : memref<1x64xf32, #tpu.memory_space<vmem>>, vector<1x64xf32>
    %78 = vector.broadcast %77 : vector<1x64xf32> to vector<2x64xf32>
    %79 = arith.addf %76, %78 : vector<2x64xf32>
    %80 = arith.addf %71, %79 : vector<2x64xf32>
    %cst_66 = arith.constant 0.000000e+00 : f32
    %81 = vector.broadcast %cst_66 : f32 to vector<2x64xf32>
    %82 = arith.maximumf %80, %81 : vector<2x64xf32>
    %83 = arith.truncf %82 : vector<2x64xf32> to vector<2x64xbf16>
    %c0_67 = arith.constant 0 : index
    %c0_68 = arith.constant 0 : index
    %c0_69 = arith.constant 0 : index
    %84 = vector.load %arg12[%c0_67, %c0_68, %c0_69] : memref<1x2x64xbf16, #tpu.memory_space<vmem>>, vector<1x2x64xbf16>
    %85 = vector.shape_cast %84 : vector<1x2x64xbf16> to vector<2x64xbf16>
    %86 = vector.shape_cast %83 : vector<2x64xbf16> to vector<1x2x64xbf16>
    tpu.vector_store %arg12[%c0_67, %c0_68, %c0_69], %86 {strides = array<i32>} : memref<1x2x64xbf16, #tpu.memory_space<vmem>>, vector<1x2x64xbf16>,
    return
  }
  func.func @transform_0(%arg0: i32) -> (i32, i32, i32) {
    %c0_i32 = arith.constant 0 : i32
    %c0_i32_0 = arith.constant 0 : i32
    %c0_i32_1 = arith.constant 0 : i32
    return %arg0, %c0_i32, %c0_i32_0 : i32, i32, i32
  }
  func.func @transform_1(%arg0: i32) -> (i32, i32, i32) {
    %c0_i32 = arith.constant 0 : i32
    %c0_i32_0 = arith.constant 0 : i32
    %c0_i32_1 = arith.constant 0 : i32
    %c0_i32_2 = arith.constant 0 : i32
    return %c0_i32, %c0_i32_0, %c0_i32_1 : i32, i32, i32
  }
  func.func @transform_2(%arg0: i32) -> (i32, i32) {
    %c0_i32 = arith.constant 0 : i32
    %c0_i32_0 = arith.constant 0 : i32
    %c0_i32_1 = arith.constant 0 : i32
    return %c0_i32, %c0_i32_0 : i32, i32
  }
  func.func @transform_3(%arg0: i32) -> (i32, i32) {
    %c0_i32 = arith.constant 0 : i32
    %c0_i32_0 = arith.constant 0 : i32
    %c0_i32_1 = arith.constant 0 : i32
    return %c0_i32, %c0_i32_0 : i32, i32
  }
  func.func @transform_4(%arg0: i32) -> (i32, i32, i32) {
    %c0_i32 = arith.constant 0 : i32
    %c0_i32_0 = arith.constant 0 : i32
    %c0_i32_1 = arith.constant 0 : i32
    %c0_i32_2 = arith.constant 0 : i32
    return %c0_i32, %c0_i32_0, %c0_i32_1 : i32, i32, i32
  }
  func.func @transform_5(%arg0: i32) -> (i32, i32) {
    %c0_i32 = arith.constant 0 : i32
    %c0_i32_0 = arith.constant 0 : i32
    %c0_i32_1 = arith.constant 0 : i32
    return %c0_i32, %c0_i32_0 : i32, i32
  }
  func.func @transform_6(%arg0: i32) -> (i32, i32) {
    %c0_i32 = arith.constant 0 : i32
    %c0_i32_0 = arith.constant 0 : i32
    %c0_i32_1 = arith.constant 0 : i32
    return %c0_i32, %c0_i32_0 : i32, i32
  }
  func.func @transform_7(%arg0: i32) -> (i32, i32) {
    %c0_i32 = arith.constant 0 : i32
    %c0_i32_0 = arith.constant 0 : i32
    %c0_i32_1 = arith.constant 0 : i32
    return %c0_i32, %c0_i32_0 : i32, i32
  }
  func.func @transform_8(%arg0: i32) -> (i32, i32) {
    %c0_i32 = arith.constant 0 : i32
    %c0_i32_0 = arith.constant 0 : i32
    %c0_i32_1 = arith.constant 0 : i32
    return %c0_i32, %c0_i32_0 : i32, i32
  }
  func.func @transform_9(%arg0: i32) -> (i32, i32) {
    %c0_i32 = arith.constant 0 : i32
    %c0_i32_0 = arith.constant 0 : i32
    %c0_i32_1 = arith.constant 0 : i32
    return %c0_i32, %c0_i32_0 : i32, i32
  }
  func.func @transform_10(%arg0: i32) -> (i32, i32) {
    %c0_i32 = arith.constant 0 : i32
    %c0_i32_0 = arith.constant 0 : i32
    %c0_i32_1 = arith.constant 0 : i32
    return %c0_i32, %c0_i32_0 : i32, i32
  }
  func.func @transform_11(%arg0: i32) -> (i32, i32, i32) {
    %c0_i32 = arith.constant 0 : i32
    %c0_i32_0 = arith.constant 0 : i32
    %c0_i32_1 = arith.constant 0 : i32
    return %arg0, %c0_i32, %c0_i32_0 : i32, i32, i32
  }
}

module attributes {stable_mosaic.version = 11 : i64} {
  func.func @_block_kernel(%arg0: i32, %arg1: memref<1x1x64xbf16, #tpu.memory_space<vmem>>, %arg2: memref<3x64x64xbf16, #tpu.memory_space<vmem>>, %arg3: memref<1x64xf32, #tpu.memory_space<vmem>>, %arg4: memref<1x64xf32, #tpu.memory_space<vmem>>, %arg5: memref<3x64x64xbf16, #tpu.memory_space<vmem>>, %arg6: memref<1x64xf32, #tpu.memory_space<vmem>>, %arg7: memref<1x64xf32, #tpu.memory_space<vmem>>, %arg8: memref<64x64xbf16, #tpu.memory_space<vmem>>, %arg9: memref<64x64xbf16, #tpu.memory_space<vmem>>, %arg10: memref<1x64xf32, #tpu.memory_space<vmem>>, %arg11: memref<1x64xf32, #tpu.memory_space<vmem>>, %arg12: memref<64x64xbf16, #tpu.memory_space<vmem>>, %arg13: memref<1x64xf32, #tpu.memory_space<vmem>>, %arg14: memref<64x10xbf16, #tpu.memory_space<vmem>>, %arg15: memref<1x10xf32, #tpu.memory_space<vmem>>, %arg16: memref<1x1x10xf32, #tpu.memory_space<vmem>>, %arg17: memref<9x64xf32, #tpu.memory_space<vmem>>, %arg18: memref<17x64xf32, #tpu.memory_space<vmem>>) attributes {dimension_semantics = [#tpu.dimension_semantics<parallel>], iteration_bounds = array<i64: 2>, scalar_prefetch = 0 : i64, scratch_operands = 2 : i64, tpu.core_type = #tpu.core_type<tc>, window_params = [{transform_indices = @transform_0, window_bounds = array<i64: 1, 1, 64>}, {pipeline_mode = #tpu.pipeline_mode<synchronous>, transform_indices = @transform_1, window_bounds = array<i64: 3, 64, 64>}, {pipeline_mode = #tpu.pipeline_mode<synchronous>, transform_indices = @transform_2, window_bounds = array<i64: 1, 64>}, {pipeline_mode = #tpu.pipeline_mode<synchronous>, transform_indices = @transform_3, window_bounds = array<i64: 1, 64>}, {pipeline_mode = #tpu.pipeline_mode<synchronous>, transform_indices = @transform_4, window_bounds = array<i64: 3, 64, 64>}, {pipeline_mode = #tpu.pipeline_mode<synchronous>, transform_indices = @transform_5, window_bounds = array<i64: 1, 64>}, {pipeline_mode = #tpu.pipeline_mode<synchronous>, transform_indices = @transform_6, window_bounds = array<i64: 1, 64>}, {pipeline_mode = #tpu.pipeline_mode<synchronous>, transform_indices = @transform_7, window_bounds = array<i64: 64, 64>}, {pipeline_mode = #tpu.pipeline_mode<synchronous>, transform_indices = @transform_8, window_bounds = array<i64: 64, 64>}, {pipeline_mode = #tpu.pipeline_mode<synchronous>, transform_indices = @transform_9, window_bounds = array<i64: 1, 64>}, {pipeline_mode = #tpu.pipeline_mode<synchronous>, transform_indices = @transform_10, window_bounds = array<i64: 1, 64>}, {pipeline_mode = #tpu.pipeline_mode<synchronous>, transform_indices = @transform_11, window_bounds = array<i64: 64, 64>}, {pipeline_mode = #tpu.pipeline_mode<synchronous>, transform_indices = @transform_12, window_bounds = array<i64: 1, 64>}, {pipeline_mode = #tpu.pipeline_mode<synchronous>, transform_indices = @transform_13, window_bounds = array<i64: 64, 10>}, {pipeline_mode = #tpu.pipeline_mode<synchronous>, transform_indices = @transform_14, window_bounds = array<i64: 1, 10>}, {transform_indices = @transform_15, window_bounds = array<i64: 1, 1, 10>}]} {
    %cst = arith.constant 0.000000e+00 : f32
    %0 = vector.broadcast %cst : f32 to vector<4x64xf32>
    %c0 = arith.constant 0 : index
    %c0_0 = arith.constant 0 : index
    %1 = vector.load %arg17[%c0, %c0_0] : memref<9x64xf32, #tpu.memory_space<vmem>>, vector<4x64xf32>
    tpu.vector_store %arg17[%c0, %c0_0], %0 {strides = array<i32>} : memref<9x64xf32, #tpu.memory_space<vmem>>, vector<4x64xf32>,
    %cst_1 = arith.constant 0.000000e+00 : f32
    %2 = vector.broadcast %cst_1 : f32 to vector<4x64xf32>
    %c5 = arith.constant 5 : index
    %c0_2 = arith.constant 0 : index
    %3 = vector.load %arg17[%c5, %c0_2] : memref<9x64xf32, #tpu.memory_space<vmem>>, vector<4x64xf32>
    tpu.vector_store %arg17[%c5, %c0_2], %2 {strides = array<i32>} : memref<9x64xf32, #tpu.memory_space<vmem>>, vector<4x64xf32>,
    %cst_3 = arith.constant 0.000000e+00 : f32
    %4 = vector.broadcast %cst_3 : f32 to vector<8x64xf32>
    %c0_4 = arith.constant 0 : index
    %c0_5 = arith.constant 0 : index
    %5 = vector.load %arg18[%c0_4, %c0_5] : memref<17x64xf32, #tpu.memory_space<vmem>>, vector<8x64xf32>
    tpu.vector_store %arg18[%c0_4, %c0_5], %4 {strides = array<i32>} : memref<17x64xf32, #tpu.memory_space<vmem>>, vector<8x64xf32>,
    %cst_6 = arith.constant 0.000000e+00 : f32
    %6 = vector.broadcast %cst_6 : f32 to vector<8x64xf32>
    %c9 = arith.constant 9 : index
    %c0_7 = arith.constant 0 : index
    %7 = vector.load %arg18[%c9, %c0_7] : memref<17x64xf32, #tpu.memory_space<vmem>>, vector<8x64xf32>
    tpu.vector_store %arg18[%c9, %c0_7], %6 {strides = array<i32>} : memref<17x64xf32, #tpu.memory_space<vmem>>, vector<8x64xf32>,
    %c0_8 = arith.constant 0 : index
    %c0_9 = arith.constant 0 : index
    %c0_10 = arith.constant 0 : index
    %8 = vector.load %arg1[%c0_8, %c0_9, %c0_10] : memref<1x1x64xbf16, #tpu.memory_space<vmem>>, vector<1x1x64xbf16>
    %9 = vector.shape_cast %8 : vector<1x1x64xbf16> to vector<1x64xbf16>
    %10 = arith.extf %9 : vector<1x64xbf16> to vector<1x64xf32>
    %c4 = arith.constant 4 : index
    %c0_11 = arith.constant 0 : index
    %11 = vector.load %arg17[%c4, %c0_11] : memref<9x64xf32, #tpu.memory_space<vmem>>, vector<1x64xf32>
    tpu.vector_store %arg17[%c4, %c0_11], %10 {strides = array<i32>} : memref<9x64xf32, #tpu.memory_space<vmem>>, vector<1x64xf32>,
    %c1 = arith.constant 1 : index
    %c0_12 = arith.constant 0 : index
    %c0_13 = arith.constant 0 : index
    %12 = vector.load %arg2[%c1, %c0_12, %c0_13] : memref<3x64x64xbf16, #tpu.memory_space<vmem>>, vector<1x64x64xbf16>
    %13 = vector.shape_cast %12 : vector<1x64x64xbf16> to vector<64x64xbf16>
    %cst_14 = arith.constant dense<0.000000e+00> : vector<1x64xf32>
    %14 = tpu.matmul %9, %13, %cst_14 {dimension_numbers = #tpu.dot_dimension_numbers<[1], [0], [0], [1], [0, 0, 1, 1], [], []>} : vector<1x64xbf16>, vector<64x64xbf16>, vector<1x64xf32> -> vector<1x64xf32>
    %c0_15 = arith.constant 0 : index
    %c0_16 = arith.constant 0 : index
    %15 = vector.load %arg17[%c0_15, %c0_16] : memref<9x64xf32, #tpu.memory_space<vmem>>, vector<1x64xf32>
    %16 = arith.truncf %15 : vector<1x64xf32> to vector<1x64xbf16>
    %c0_17 = arith.constant 0 : index
    %c0_18 = arith.constant 0 : index
    %c0_19 = arith.constant 0 : index
    %17 = vector.load %arg2[%c0_17, %c0_18, %c0_19] : memref<3x64x64xbf16, #tpu.memory_space<vmem>>, vector<1x64x64xbf16>
    %18 = vector.shape_cast %17 : vector<1x64x64xbf16> to vector<64x64xbf16>
    %cst_20 = arith.constant dense<0.000000e+00> : vector<1x64xf32>
    %19 = tpu.matmul %16, %18, %cst_20 {dimension_numbers = #tpu.dot_dimension_numbers<[1], [0], [0], [1], [0, 0, 1, 1], [], []>} : vector<1x64xbf16>, vector<64x64xbf16>, vector<1x64xf32> -> vector<1x64xf32>
    %20 = arith.addf %14, %19 : vector<1x64xf32>
    %c8 = arith.constant 8 : index
    %c0_21 = arith.constant 0 : index
    %21 = vector.load %arg17[%c8, %c0_21] : memref<9x64xf32, #tpu.memory_space<vmem>>, vector<1x64xf32>
    %22 = arith.truncf %21 : vector<1x64xf32> to vector<1x64xbf16>
    %c2 = arith.constant 2 : index
    %c0_22 = arith.constant 0 : index
    %c0_23 = arith.constant 0 : index
    %23 = vector.load %arg2[%c2, %c0_22, %c0_23] : memref<3x64x64xbf16, #tpu.memory_space<vmem>>, vector<1x64x64xbf16>
    %24 = vector.shape_cast %23 : vector<1x64x64xbf16> to vector<64x64xbf16>
    %cst_24 = arith.constant dense<0.000000e+00> : vector<1x64xf32>
    %25 = tpu.matmul %22, %24, %cst_24 {dimension_numbers = #tpu.dot_dimension_numbers<[1], [0], [0], [1], [0, 0, 1, 1], [], []>} : vector<1x64xbf16>, vector<64x64xbf16>, vector<1x64xf32> -> vector<1x64xf32>
    %26 = arith.addf %20, %25 : vector<1x64xf32>
    %c0_25 = arith.constant 0 : index
    %c0_26 = arith.constant 0 : index
    %27 = vector.load %arg3[%c0_25, %c0_26] : memref<1x64xf32, #tpu.memory_space<vmem>>, vector<1x64xf32>
    %28 = arith.mulf %26, %27 : vector<1x64xf32>
    %c0_27 = arith.constant 0 : index
    %c0_28 = arith.constant 0 : index
    %29 = vector.load %arg4[%c0_27, %c0_28] : memref<1x64xf32, #tpu.memory_space<vmem>>, vector<1x64xf32>
    %30 = arith.addf %28, %29 : vector<1x64xf32>
    %cst_29 = arith.constant 0.000000e+00 : f32
    %31 = vector.broadcast %cst_29 : f32 to vector<1x64xf32>
    %32 = arith.maximumf %30, %31 : vector<1x64xf32>
    %c8_30 = arith.constant 8 : index
    %c0_31 = arith.constant 0 : index
    %33 = vector.load %arg18[%c8_30, %c0_31] : memref<17x64xf32, #tpu.memory_space<vmem>>, vector<1x64xf32>
    tpu.vector_store %arg18[%c8_30, %c0_31], %32 {strides = array<i32>} : memref<17x64xf32, #tpu.memory_space<vmem>>, vector<1x64xf32>,
    %34 = arith.truncf %32 : vector<1x64xf32> to vector<1x64xbf16>
    %c1_32 = arith.constant 1 : index
    %c0_33 = arith.constant 0 : index
    %c0_34 = arith.constant 0 : index
    %35 = vector.load %arg5[%c1_32, %c0_33, %c0_34] : memref<3x64x64xbf16, #tpu.memory_space<vmem>>, vector<1x64x64xbf16>
    %36 = vector.shape_cast %35 : vector<1x64x64xbf16> to vector<64x64xbf16>
    %cst_35 = arith.constant dense<0.000000e+00> : vector<1x64xf32>
    %37 = tpu.matmul %34, %36, %cst_35 {dimension_numbers = #tpu.dot_dimension_numbers<[1], [0], [0], [1], [0, 0, 1, 1], [], []>} : vector<1x64xbf16>, vector<64x64xbf16>, vector<1x64xf32> -> vector<1x64xf32>
    %c0_36 = arith.constant 0 : index
    %c0_37 = arith.constant 0 : index
    %38 = vector.load %arg18[%c0_36, %c0_37] : memref<17x64xf32, #tpu.memory_space<vmem>>, vector<1x64xf32>
    %39 = arith.truncf %38 : vector<1x64xf32> to vector<1x64xbf16>
    %c0_38 = arith.constant 0 : index
    %c0_39 = arith.constant 0 : index
    %c0_40 = arith.constant 0 : index
    %40 = vector.load %arg5[%c0_38, %c0_39, %c0_40] : memref<3x64x64xbf16, #tpu.memory_space<vmem>>, vector<1x64x64xbf16>
    %41 = vector.shape_cast %40 : vector<1x64x64xbf16> to vector<64x64xbf16>
    %cst_41 = arith.constant dense<0.000000e+00> : vector<1x64xf32>
    %42 = tpu.matmul %39, %41, %cst_41 {dimension_numbers = #tpu.dot_dimension_numbers<[1], [0], [0], [1], [0, 0, 1, 1], [], []>} : vector<1x64xbf16>, vector<64x64xbf16>, vector<1x64xf32> -> vector<1x64xf32>
    %43 = arith.addf %37, %42 : vector<1x64xf32>
    %c16 = arith.constant 16 : index
    %c0_42 = arith.constant 0 : index
    %44 = vector.load %arg18[%c16, %c0_42] : memref<17x64xf32, #tpu.memory_space<vmem>>, vector<1x64xf32>
    %45 = arith.truncf %44 : vector<1x64xf32> to vector<1x64xbf16>
    %c2_43 = arith.constant 2 : index
    %c0_44 = arith.constant 0 : index
    %c0_45 = arith.constant 0 : index
    %46 = vector.load %arg5[%c2_43, %c0_44, %c0_45] : memref<3x64x64xbf16, #tpu.memory_space<vmem>>, vector<1x64x64xbf16>
    %47 = vector.shape_cast %46 : vector<1x64x64xbf16> to vector<64x64xbf16>
    %cst_46 = arith.constant dense<0.000000e+00> : vector<1x64xf32>
    %48 = tpu.matmul %45, %47, %cst_46 {dimension_numbers = #tpu.dot_dimension_numbers<[1], [0], [0], [1], [0, 0, 1, 1], [], []>} : vector<1x64xbf16>, vector<64x64xbf16>, vector<1x64xf32> -> vector<1x64xf32>
    %49 = arith.addf %43, %48 : vector<1x64xf32>
    %c0_47 = arith.constant 0 : index
    %c0_48 = arith.constant 0 : index
    %50 = vector.load %arg6[%c0_47, %c0_48] : memref<1x64xf32, #tpu.memory_space<vmem>>, vector<1x64xf32>
    %51 = arith.mulf %49, %50 : vector<1x64xf32>
    %c0_49 = arith.constant 0 : index
    %c0_50 = arith.constant 0 : index
    %52 = vector.load %arg7[%c0_49, %c0_50] : memref<1x64xf32, #tpu.memory_space<vmem>>, vector<1x64xf32>
    %53 = arith.addf %51, %52 : vector<1x64xf32>
    %cst_51 = arith.constant dense<0.000000e+00> : vector<64xf32>
    %54 = vector.multi_reduction <add>, %53, %cst_51 [0] : vector<1x64xf32> to vector<64xf32>
    %55 = vector.shape_cast %54 : vector<64xf32> to vector<1x64xf32>
    %cst_52 = arith.constant 1.000000e+00 : f32
    %56 = vector.broadcast %cst_52 : f32 to vector<1x64xf32>
    %57 = arith.divf %55, %56 : vector<1x64xf32>
    %58 = arith.truncf %57 : vector<1x64xf32> to vector<1x64xbf16>
    %c0_53 = arith.constant 0 : index
    %c0_54 = arith.constant 0 : index
    %59 = vector.load %arg8[%c0_53, %c0_54] : memref<64x64xbf16, #tpu.memory_space<vmem>>, vector<64x64xbf16>
    %cst_55 = arith.constant dense<0.000000e+00> : vector<1x64xf32>
    %60 = tpu.matmul %58, %59, %cst_55 {dimension_numbers = #tpu.dot_dimension_numbers<[1], [0], [0], [1], [0, 0, 1, 1], [], []>} : vector<1x64xbf16>, vector<64x64xbf16>, vector<1x64xf32> -> vector<1x64xf32>
    %61 = arith.negf %60 : vector<1x64xf32>
    %62 = math.exp %61 : vector<1x64xf32>
    %cst_56 = arith.constant 1.000000e+00 : f32
    %63 = vector.broadcast %cst_56 : f32 to vector<1x64xf32>
    %64 = arith.addf %63, %62 : vector<1x64xf32>
    %65 = arith.divf %63, %64 : vector<1x64xf32>
    %66 = arith.mulf %53, %65 : vector<1x64xf32>
    %c0_57 = arith.constant 0 : index
    %c0_58 = arith.constant 0 : index
    %67 = vector.load %arg9[%c0_57, %c0_58] : memref<64x64xbf16, #tpu.memory_space<vmem>>, vector<64x64xbf16>
    %cst_59 = arith.constant dense<0.000000e+00> : vector<1x64xf32>
    %68 = tpu.matmul %9, %67, %cst_59 {dimension_numbers = #tpu.dot_dimension_numbers<[1], [0], [0], [1], [0, 0, 1, 1], [], []>} : vector<1x64xbf16>, vector<64x64xbf16>, vector<1x64xf32> -> vector<1x64xf32>
    %c0_60 = arith.constant 0 : index
    %c0_61 = arith.constant 0 : index
    %69 = vector.load %arg10[%c0_60, %c0_61] : memref<1x64xf32, #tpu.memory_space<vmem>>, vector<1x64xf32>
    %70 = arith.mulf %68, %69 : vector<1x64xf32>
    %c0_62 = arith.constant 0 : index
    %c0_63 = arith.constant 0 : index
    %71 = vector.load %arg11[%c0_62, %c0_63] : memref<1x64xf32, #tpu.memory_space<vmem>>, vector<1x64xf32>
    %72 = arith.addf %70, %71 : vector<1x64xf32>
    %73 = arith.addf %66, %72 : vector<1x64xf32>
    %cst_64 = arith.constant 0.000000e+00 : f32
    %74 = vector.broadcast %cst_64 : f32 to vector<1x64xf32>
    %75 = arith.maximumf %73, %74 : vector<1x64xf32>
    %cst_65 = arith.constant dense<0.000000e+00> : vector<64xf32>
    %76 = vector.multi_reduction <add>, %75, %cst_65 [0] : vector<1x64xf32> to vector<64xf32>
    %77 = vector.shape_cast %76 : vector<64xf32> to vector<1x64xf32>
    %cst_66 = arith.constant 1.000000e+00 : f32
    %78 = vector.broadcast %cst_66 : f32 to vector<1x64xf32>
    %79 = arith.divf %77, %78 : vector<1x64xf32>
    %80 = arith.truncf %79 : vector<1x64xf32> to vector<1x64xbf16>
    %c0_67 = arith.constant 0 : index
    %c0_68 = arith.constant 0 : index
    %81 = vector.load %arg12[%c0_67, %c0_68] : memref<64x64xbf16, #tpu.memory_space<vmem>>, vector<64x64xbf16>
    %cst_69 = arith.constant dense<0.000000e+00> : vector<1x64xf32>
    %82 = tpu.matmul %80, %81, %cst_69 {dimension_numbers = #tpu.dot_dimension_numbers<[1], [0], [0], [1], [0, 0, 1, 1], [], []>} : vector<1x64xbf16>, vector<64x64xbf16>, vector<1x64xf32> -> vector<1x64xf32>
    %c0_70 = arith.constant 0 : index
    %c0_71 = arith.constant 0 : index
    %83 = vector.load %arg13[%c0_70, %c0_71] : memref<1x64xf32, #tpu.memory_space<vmem>>, vector<1x64xf32>
    %84 = arith.addf %82, %83 : vector<1x64xf32>
    %cst_72 = arith.constant 0.000000e+00 : f32
    %85 = vector.broadcast %cst_72 : f32 to vector<1x64xf32>
    %86 = arith.maximumf %84, %85 : vector<1x64xf32>
    %87 = arith.truncf %86 : vector<1x64xf32> to vector<1x64xbf16>
    %c0_73 = arith.constant 0 : index
    %c0_74 = arith.constant 0 : index
    %88 = vector.load %arg14[%c0_73, %c0_74] : memref<64x10xbf16, #tpu.memory_space<vmem>>, vector<64x10xbf16>
    %cst_75 = arith.constant dense<0.000000e+00> : vector<1x10xf32>
    %89 = tpu.matmul %87, %88, %cst_75 {dimension_numbers = #tpu.dot_dimension_numbers<[1], [0], [0], [1], [0, 0, 1, 1], [], []>} : vector<1x64xbf16>, vector<64x10xbf16>, vector<1x10xf32> -> vector<1x10xf32>
    %c0_76 = arith.constant 0 : index
    %c0_77 = arith.constant 0 : index
    %90 = vector.load %arg15[%c0_76, %c0_77] : memref<1x10xf32, #tpu.memory_space<vmem>>, vector<1x10xf32>
    %91 = arith.addf %89, %90 : vector<1x10xf32>
    %c0_78 = arith.constant 0 : index
    %c0_79 = arith.constant 0 : index
    %c0_80 = arith.constant 0 : index
    %92 = vector.load %arg16[%c0_78, %c0_79, %c0_80] : memref<1x1x10xf32, #tpu.memory_space<vmem>>, vector<1x1x10xf32>
    %93 = vector.shape_cast %92 : vector<1x1x10xf32> to vector<1x10xf32>
    %94 = vector.shape_cast %91 : vector<1x10xf32> to vector<1x1x10xf32>
    tpu.vector_store %arg16[%c0_78, %c0_79, %c0_80], %94 {strides = array<i32>} : memref<1x1x10xf32, #tpu.memory_space<vmem>>, vector<1x1x10xf32>,
    return
  }
  func.func @transform_0(%arg0: i32) -> (i32, i32, i32) {
    %c0_i32 = arith.constant 0 : i32
    %c0_i32_0 = arith.constant 0 : i32
    %c0_i32_1 = arith.constant 0 : i32
    return %arg0, %c0_i32, %c0_i32_0 : i32, i32, i32
  }
  func.func @transform_1(%arg0: i32) -> (i32, i32, i32) {
    %c0_i32 = arith.constant 0 : i32
    %c0_i32_0 = arith.constant 0 : i32
    %c0_i32_1 = arith.constant 0 : i32
    %c0_i32_2 = arith.constant 0 : i32
    return %c0_i32, %c0_i32_0, %c0_i32_1 : i32, i32, i32
  }
  func.func @transform_2(%arg0: i32) -> (i32, i32) {
    %c0_i32 = arith.constant 0 : i32
    %c0_i32_0 = arith.constant 0 : i32
    %c0_i32_1 = arith.constant 0 : i32
    return %c0_i32, %c0_i32_0 : i32, i32
  }
  func.func @transform_3(%arg0: i32) -> (i32, i32) {
    %c0_i32 = arith.constant 0 : i32
    %c0_i32_0 = arith.constant 0 : i32
    %c0_i32_1 = arith.constant 0 : i32
    return %c0_i32, %c0_i32_0 : i32, i32
  }
  func.func @transform_4(%arg0: i32) -> (i32, i32, i32) {
    %c0_i32 = arith.constant 0 : i32
    %c0_i32_0 = arith.constant 0 : i32
    %c0_i32_1 = arith.constant 0 : i32
    %c0_i32_2 = arith.constant 0 : i32
    return %c0_i32, %c0_i32_0, %c0_i32_1 : i32, i32, i32
  }
  func.func @transform_5(%arg0: i32) -> (i32, i32) {
    %c0_i32 = arith.constant 0 : i32
    %c0_i32_0 = arith.constant 0 : i32
    %c0_i32_1 = arith.constant 0 : i32
    return %c0_i32, %c0_i32_0 : i32, i32
  }
  func.func @transform_6(%arg0: i32) -> (i32, i32) {
    %c0_i32 = arith.constant 0 : i32
    %c0_i32_0 = arith.constant 0 : i32
    %c0_i32_1 = arith.constant 0 : i32
    return %c0_i32, %c0_i32_0 : i32, i32
  }
  func.func @transform_7(%arg0: i32) -> (i32, i32) {
    %c0_i32 = arith.constant 0 : i32
    %c0_i32_0 = arith.constant 0 : i32
    %c0_i32_1 = arith.constant 0 : i32
    return %c0_i32, %c0_i32_0 : i32, i32
  }
  func.func @transform_8(%arg0: i32) -> (i32, i32) {
    %c0_i32 = arith.constant 0 : i32
    %c0_i32_0 = arith.constant 0 : i32
    %c0_i32_1 = arith.constant 0 : i32
    return %c0_i32, %c0_i32_0 : i32, i32
  }
  func.func @transform_9(%arg0: i32) -> (i32, i32) {
    %c0_i32 = arith.constant 0 : i32
    %c0_i32_0 = arith.constant 0 : i32
    %c0_i32_1 = arith.constant 0 : i32
    return %c0_i32, %c0_i32_0 : i32, i32
  }
  func.func @transform_10(%arg0: i32) -> (i32, i32) {
    %c0_i32 = arith.constant 0 : i32
    %c0_i32_0 = arith.constant 0 : i32
    %c0_i32_1 = arith.constant 0 : i32
    return %c0_i32, %c0_i32_0 : i32, i32
  }
  func.func @transform_11(%arg0: i32) -> (i32, i32) {
    %c0_i32 = arith.constant 0 : i32
    %c0_i32_0 = arith.constant 0 : i32
    %c0_i32_1 = arith.constant 0 : i32
    return %c0_i32, %c0_i32_0 : i32, i32
  }
  func.func @transform_12(%arg0: i32) -> (i32, i32) {
    %c0_i32 = arith.constant 0 : i32
    %c0_i32_0 = arith.constant 0 : i32
    %c0_i32_1 = arith.constant 0 : i32
    return %c0_i32, %c0_i32_0 : i32, i32
  }
  func.func @transform_13(%arg0: i32) -> (i32, i32) {
    %c0_i32 = arith.constant 0 : i32
    %c0_i32_0 = arith.constant 0 : i32
    %c0_i32_1 = arith.constant 0 : i32
    return %c0_i32, %c0_i32_0 : i32, i32
  }
  func.func @transform_14(%arg0: i32) -> (i32, i32) {
    %c0_i32 = arith.constant 0 : i32
    %c0_i32_0 = arith.constant 0 : i32
    %c0_i32_1 = arith.constant 0 : i32
    return %c0_i32, %c0_i32_0 : i32, i32
  }
  func.func @transform_15(%arg0: i32) -> (i32, i32, i32) {
    %c0_i32 = arith.constant 0 : i32
    %c0_i32_0 = arith.constant 0 : i32
    %c0_i32_1 = arith.constant 0 : i32
    return %arg0, %c0_i32, %c0_i32_0 : i32, i32, i32
  }
}

</mosaic_0001>

<llo_original>
// kernel: mini_eca_restcn_forward.5
$region0: #{mini_eca_restcn_forward.5}
  #allocation0 [shape = 'u32[]', space=smem, size = 0x4, offset = 0x4, fixed_abs, tag = 'smem constant byte address 0x4 - core index']
  #allocation1 [shape = 'u32[144,128]{1,0:T(1,128)}', space=vmem, size = 0x12000, scoped, tag = 'internal scratch']
  %s0 = inlined_call_operand.vmem [shape: bf16[2,8,28], index: 0, kind: input, shape index: {}]
  %s1 = inlined_call_operand.vmem [shape: bf16[28,64], index: 1, kind: input, shape index: {}]
  %s2 = inlined_call_operand.vmem [shape: f32[1,64], index: 2, kind: input, shape index: {}]
  %s3 = inlined_call_operand.vmem [shape: f32[1,64], index: 3, kind: input, shape index: {}]
  %s4 = inlined_call_operand.vmem [shape: bf16[2,8,64], index: 4, kind: output, shape index: {}]
  %s5 = sld [smem:[#allocation0]]
  $region49: #{mini_eca_restcn_forward.5} parent=0
    _
  %s7 = ssub.s32 1, %s5
  %s8 = scalar_select 0, %s7, %s5
  loop: start=0, step=1, limit=4
  $region2: #{mini_eca_restcn_forward.5} parent=0 // loop_pre_header
    _
  $region3: #{mini_eca_restcn_forward.5} parent=0 // loop_header
    %s10 = sphi 0, %s14
    %p11 = scmp.ge.s32.totalorder %s10, 4
    %s20 = sphi 0, %s22
    %s23 = sphi 0, %s20
    %s24 = sphi 0, %s23
    %s40 = sphi 0, %s24
    %s44 = sphi 0, %s44
    %s46 = sphi 0, %s44
    %s47 = sphi 0, %s46
    %s61 = sphi 0, %s47
    %s65 = sphi 0, %s65
    %s67 = sphi 0, %s65
    %s68 = sphi 0, %s67
    %s82 = sphi 0, %s68
    %s86 = sphi 0, %s86
    %s88 = sphi 0, %s86
    %s89 = sphi 0, %s88
    %s103 = sphi 0, %s89
    %s109 = sphi 0, %s111
    %s112 = sphi 0, %s109
    %s113 = sphi 0, %s112
    %s129 = sphi 0, %s113
  $region4: #{mini_eca_restcn_forward.5} parent=0 // loop_header_branch
    %13 = sbr.rel (%p11) target = $region8
  $region5: #{mini_eca_restcn_forward.5} parent=0 // loop_body
    %s15 = ssub.s32 %s10, 1
    %s16 = ssub.s32 %s10, 2
    %s17 = sadd.s32 %s10, 1
    %s18 = ssub.s32 %s10, %s17
    %p19 = scmp.eq.s32.totalorder %s18, 0
    %s21 = sadd.s32 %s20, 1
    %s22 = scalar_select %p19, %s20, %s21
    %p25 = pneg %p19
    %p26 = scmp.eq.s32.totalorder %s10, 1
    %p27 = por %p25, %p26
    %p28 = scmp.ne.s32.totalorder %s20, %s23
    %p29 = scmp.eq.s32.totalorder %s10, 0
    %p30 = por %p28, %p29
    %p31 = scmp.ne.s32.totalorder %s20, %s23
    %p32 = scmp.eq.s32.totalorder %s15, 1
    %p33 = por %p31, %p32
    %p34 = scmp.ne.s32.totalorder %s23, %s24
    %p35 = scmp.eq.s32.totalorder %s15, 0
    %p36 = por %p34, %p35
    %p37 = scmp.ne.s32.totalorder %s23, %s24
    %p38 = scmp.eq.s32.totalorder %s16, 1
    %p39 = por %p37, %p38
    %p41 = scmp.ne.s32.totalorder %s24, %s40
    %p42 = scmp.eq.s32.totalorder %s16, 0
    %p43 = por %p41, %p42
    %s45 = sadd.s32 %s44, 1
    %p48 = scmp.eq.s32.totalorder %s10, 1
    %p49 = scmp.ne.s32.totalorder %s44, %s46
    %p50 = scmp.eq.s32.totalorder %s10, 0
    %p51 = por %p49, %p50
    %p52 = scmp.ne.s32.totalorder %s44, %s46
    %p53 = scmp.eq.s32.totalorder %s15, 1
    %p54 = por %p52, %p53
    %p55 = scmp.ne.s32.totalorder %s46, %s47
    %p56 = scmp.eq.s32.totalorder %s15, 0
    %p57 = por %p55, %p56
    %p58 = scmp.ne.s32.totalorder %s46, %s47
    %p59 = scmp.eq.s32.totalorder %s16, 1
    %p60 = por %p58, %p59
    %p62 = scmp.ne.s32.totalorder %s47, %s61
    %p63 = scmp.eq.s32.totalorder %s16, 0
    %p64 = por %p62, %p63
    %s66 = sadd.s32 %s65, 1
    %p69 = scmp.eq.s32.totalorder %s10, 1
    %p70 = scmp.ne.s32.totalorder %s65, %s67
    %p71 = scmp.eq.s32.totalorder %s10, 0
    %p72 = por %p70, %p71
    %p73 = scmp.ne.s32.totalorder %s65, %s67
    %p74 = scmp.eq.s32.totalorder %s15, 1
    %p75 = por %p73, %p74
    %p76 = scmp.ne.s32.totalorder %s67, %s68
    %p77 = scmp.eq.s32.totalorder %s15, 0
    %p78 = por %p76, %p77
    %p79 = scmp.ne.s32.totalorder %s67, %s68
    %p80 = scmp.eq.s32.totalorder %s16, 1
    %p81 = por %p79, %p80
    %p83 = scmp.ne.s32.totalorder %s68, %s82
    %p84 = scmp.eq.s32.totalorder %s16, 0
    %p85 = por %p83, %p84
    %s87 = sadd.s32 %s86, 1
    %p90 = scmp.eq.s32.totalorder %s10, 1
    %p91 = scmp.ne.s32.totalorder %s86, %s88
    %p92 = scmp.eq.s32.totalorder %s10, 0
    %p93 = por %p91, %p92
    %p94 = scmp.ne.s32.totalorder %s86, %s88
    %p95 = scmp.eq.s32.totalorder %s15, 1
    %p96 = por %p94, %p95
    %p97 = scmp.ne.s32.totalorder %s88, %s89
    %p98 = scmp.eq.s32.totalorder %s15, 0
    %p99 = por %p97, %p98
    %p100 = scmp.ne.s32.totalorder %s88, %s89
    %p101 = scmp.eq.s32.totalorder %s16, 1
    %p102 = por %p100, %p101
    %p104 = scmp.ne.s32.totalorder %s89, %s103
    %p105 = scmp.eq.s32.totalorder %s16, 0
    %p106 = por %p104, %p105
    %s107 = ssub.s32 %s10, %s17
    %p108 = scmp.eq.s32.totalorder %s107, 0
    %s110 = sadd.s32 %s109, 1
    %s111 = scalar_select %p108, %s109, %s110
    %p114 = pneg %p108
    %p115 = scmp.eq.s32.totalorder %s10, 1
    %p116 = por %p114, %p115
    %p117 = scmp.ne.s32.totalorder %s109, %s112
    %p118 = scmp.eq.s32.totalorder %s10, 0
    %p119 = por %p117, %p118
    %p120 = scmp.ne.s32.totalorder %s109, %s112
    %p121 = scmp.eq.s32.totalorder %s15, 1
    %p122 = por %p120, %p121
    %p123 = scmp.ne.s32.totalorder %s112, %s113
    %p124 = scmp.eq.s32.totalorder %s15, 0
    %p125 = por %p123, %p124
    %p126 = scmp.ne.s32.totalorder %s112, %s113
    %p127 = scmp.eq.s32.totalorder %s16, 1
    %p128 = por %p126, %p127
    %p130 = scmp.ne.s32.totalorder %s113, %s129
    %p131 = scmp.eq.s32.totalorder %s16, 0
    %p132 = por %p130, %p131
    %p133 = scmp.le.s32.totalorder 1, %s10
    %p134 = scmp.lt.s32.totalorder %s10, 3
    %p135 = pnand %p133, %p134
    %p136 = pneg %p135
    // Predicated region
    $region9: #{mini_eca_restcn_forward.5} parent=5 // pred_check
      _
    $region10: #{mini_eca_restcn_forward.5} parent=5 // pred_check_branch
      %138 = sbr.rel (%p135) target = $region12
    $region11: #{mini_eca_restcn_forward.5} parent=5 // pred_region
      %s139 = ssub.s32 %s10, 1
      // Predicated region
      $region13: #{mini_eca_restcn_forward.5} parent=11 // pred_check
        %p140 = pneg %p57
      $region14: #{mini_eca_restcn_forward.5} parent=11 // pred_check_branch
        %142 = sbr.rel (%p140) target = $region16
      $region15: #{mini_eca_restcn_forward.5} parent=11 // pred_region
        _
      $region16: #{mini_eca_restcn_forward.5} parent=11 // pred_fallthru
        _
      // Predicated region
      $region17: #{mini_eca_restcn_forward.5} parent=11 // pred_check
        %p143 = pneg %p78
      $region18: #{mini_eca_restcn_forward.5} parent=11 // pred_check_branch
        %145 = sbr.rel (%p143) target = $region20
      $region19: #{mini_eca_restcn_forward.5} parent=11 // pred_region
        _
      $region20: #{mini_eca_restcn_forward.5} parent=11 // pred_fallthru
        _
      // Predicated region
      $region21: #{mini_eca_restcn_forward.5} parent=11 // pred_check
        %p146 = pneg %p99
      $region22: #{mini_eca_restcn_forward.5} parent=11 // pred_check_branch
        %148 = sbr.rel (%p146) target = $region24
      $region23: #{mini_eca_restcn_forward.5} parent=11 // pred_region
        _
      $region24: #{mini_eca_restcn_forward.5} parent=11 // pred_fallthru
        _
    $region12: #{mini_eca_restcn_forward.5} parent=5 // pred_fallthru
      _
    %p149 = scmp.lt.s32.totalorder %s10, 2
    // Predicated region
    $region25: #{mini_eca_restcn_forward.5} parent=5 // pred_check
      %p150 = pneg %p149
    $region26: #{mini_eca_restcn_forward.5} parent=5 // pred_check_branch
      %152 = sbr.rel (%p150) target = $region28
    $region27: #{mini_eca_restcn_forward.5} parent=5 // pred_region
      // Predicated region
      $region29: #{mini_eca_restcn_forward.5} parent=27 // pred_check
        %p153 = pneg %p30
      $region30: #{mini_eca_restcn_forward.5} parent=27 // pred_check_branch
        %155 = sbr.rel (%p153) target = $region32
      $region31: #{mini_eca_restcn_forward.5} parent=27 // pred_region
        %p156 = scmp.lt.s32.totalorder %s10, 1
        %s157 = scalar_select %p156, %s10, 1
        %s158 = smul.addr %s157, 4
        %s159 = scalar_lea.vmem %s0, %s158
      $region32: #{mini_eca_restcn_forward.5} parent=27 // pred_fallthru
        _
    $region28: #{mini_eca_restcn_forward.5} parent=5 // pred_fallthru
      _
    %p160 = scmp.le.s32.totalorder 1, %s10
    %p161 = scmp.lt.s32.totalorder %s10, 3
    %p162 = pnand %p160, %p161
    %p163 = pneg %p162
    // Predicated region
    $region33: #{mini_eca_restcn_forward.5} parent=5 // pred_check
      _
    $region34: #{mini_eca_restcn_forward.5} parent=5 // pred_check_branch
      %165 = sbr.rel (%p162) target = $region36
    $region35: #{mini_eca_restcn_forward.5} parent=5 // pred_region
      %s166 = ssub.s32 %s10, 1
      %p167 = scmp.lt.s32.totalorder %s15, 1
      %s168 = scalar_select %p167, %s15, 1
      %s169 = smul.addr %s168, 4
      %s170 = scalar_lea.vmem %s0, %s169
      %p171 = pneg %p36
      %p172 = pneg %p33
      %p173 = pneg %p57
      %p174 = pneg %p54
      %p175 = pneg %p78
      %p176 = pneg %p75
      %p177 = pneg %p99
      %p178 = pneg %p96
      %p179 = pneg %p125
      %p180 = pneg %p122
      %p181 = scmp.lt.s32.totalorder %s15, 1
      %s182 = scalar_select %p181, %s15, 1
      %s183 = smul.addr %s182, 4
      %s184 = scalar_lea.vmem %s4, %s183
      %p185 = scmp.lt.s32.totalorder %s15, 1
      %s186 = scalar_select %p185, %s15, 1
      %s187 = smul.addr %s186, 4
      %s188 = scalar_lea.vmem %s0, %s187
      %p189 = scmp.lt.s32.totalorder %s15, 1
      %s190 = scalar_select %p189, %s15, 1
      %s191 = smul.addr %s190, 4
      %s192 = scalar_lea.vmem %s4, %s191
      %v194 = vld [vmem:[%s188] sm:$0xf]
      %v195 = vld [vmem:[%s1] sm:$0xf]
      %v196 = vld [vmem:[%s1 + $0x4] sm:$0xf]
      %v197 = vld [vmem:[%s1 + $0x8] sm:$0xf]
      %v198 = vld [vmem:[%s1 + $0xc] sm:$0x3]
      %v203 = vunpack.c.l.b16 %v195
      %v204 = vunpack.c.l.b16 %v196
      %v205 = vunpack.c.l.b16 %v197
      %v206 = vunpack.c.l.b16 %v198
      %v207 = vpack.c.b16 %v204, %v203
      %v208 = vpack.c.b16 %v206, %v205
      %vm210 = vcmask 228352
      %v212 = vsel %vm210, %v194, 0
      %vm214 = vcmask 1045504
      %v216 = vsel %vm214, %v208, 0
      %218 = vmatprep.subr.bf16.mxu0 0
      %219 = vmatpush1.bf16.msra.mxu0 0
      %220 = vmatprep.subr.bf16.mxu0 0
      %221 = vmatpush1.bf16.msra.mxu0 0
      %222 = vmatprep.subr.bf16.mxu0 0
      %223 = vmatpush1.bf16.msra.mxu0 0
      %224 = vmatprep.subr.bf16.mxu0 0
      %225 = vmatpush1.bf16.msra.mxu0 0
      %226 = vmatprep.subr.bf16.mxu0 0
      %227 = vmatpush1.bf16.msra.mxu0 0
      %228 = vmatprep.subr.bf16.mxu0 0
      %229 = vmatpush1.bf16.msra.mxu0 0
      %230 = vmatprep.subr.bf16.mxu0 0
      %231 = vmatpush1.bf16.msra.mxu0 %v216
      %232 = vmatprep.subr.bf16.mxu0 0
      %233 = vmatpush1.bf16.msra.mxu0 %v207
      %234 = vmatprep.subr.bf16.mxu0 0
      %235 = vmatpush2.bf16.msra.mxu0 0
      %236 = vmatprep.subr.bf16.mxu0 0
      %237 = vmatpush2.bf16.msra.mxu0 0
      %238 = vmatprep.subr.bf16.mxu0 0
      %239 = vmatpush2.bf16.msra.mxu0 0
      %240 = vmatprep.subr.bf16.mxu0 0
      %241 = vmatpush2.bf16.msra.mxu0 0
      %242 = vmatprep.subr.bf16.mxu0 0
      %243 = vmatpush2.bf16.msra.mxu0 0
      %244 = vmatprep.subr.bf16.mxu0 0
      %245 = vmatpush2.bf16.msra.mxu0 0
      %246 = vmatprep.subr.bf16.mxu0 0
      %247 = vmatpush2.bf16.msra.mxu0 0
      %248 = vmatprep.subr.bf16.mxu0 0
      %249 = vmatpush2.bf16.msra.mxu0 0
      %250 = vmatprep.mubr.bf16.mxu0 0
      %251 = vmatmul.mubr.bf16.gmra.mxu0 %v212
      %v252 = vpop.f32.mrf.mxu0
      %v253 = vadd.f32 0.0, %v252
      %v254 = vpop.f32.mrf.mxu0
      %v255 = vpop.f32.mrf.mxu0
      %v256 = vpop.f32.mrf.mxu0
      %257 = vdwg.mxu0
      %vm258 = vcmp.ge.f32.partialorder %v253, 0.0
      %v259 = vmul.f32 %v253, 0.01
      %v260 = vsel %vm258, %v253, %v259
      %v261 = vld [vmem:[%s2] sm:$0x1]
      %v263 = vlaneseq
      %v264 = vshrl.u32 %v263, 7
      %v265 = vsub.s32 0, %v264
      %v266 = vrot.slane %v261, %v265
      %v268 = vmul.f32 %v260, %v266
      %v269 = vld [vmem:[%s3] sm:$0x1]
      %v271 = vlaneseq
      %v272 = vshrl.u32 %v271, 7
      %v273 = vsub.s32 0, %v272
      %v274 = vrot.slane %v269, %v273
      %v276 = vadd.f32 %v268, %v274
      %v277 = vpack.c.bf16 %v276, %v276
      %vm278 = vcmask 519168
      %279 = vst.msk [vmem:[%s192] sm:$0xf] %vm278, %v277
      %p280 = scmp.lt.s32.totalorder %s15, 1
      %s281 = scalar_select %p280, %s15, 1
      %s282 = smul.addr %s281, 4
      %s283 = scalar_lea.vmem %s4, %s282
      // Predicated region
      $region37: #{mini_eca_restcn_forward.5} parent=35 // pred_check
        %p284 = pneg %p122
      $region38: #{mini_eca_restcn_forward.5} parent=35 // pred_check_branch
        %286 = sbr.rel (%p284) target = $region40
      $region39: #{mini_eca_restcn_forward.5} parent=35 // pred_region
        _
      $region40: #{mini_eca_restcn_forward.5} parent=35 // pred_fallthru
        _
    $region36: #{mini_eca_restcn_forward.5} parent=5 // pred_fallthru
      _
    %p287 = scmp.le.s32.totalorder 2, %s10
    // Predicated region
    $region41: #{mini_eca_restcn_forward.5} parent=5 // pred_check
      %p288 = pneg %p287
    $region42: #{mini_eca_restcn_forward.5} parent=5 // pred_check_branch
      %290 = sbr.rel (%p288) target = $region44
    $region43: #{mini_eca_restcn_forward.5} parent=5 // pred_region
      %s291 = ssub.s32 %s10, 2
      // Predicated region
      $region45: #{mini_eca_restcn_forward.5} parent=43 // pred_check
        %p292 = pneg %p128
      $region46: #{mini_eca_restcn_forward.5} parent=43 // pred_check_branch
        %294 = sbr.rel (%p292) target = $region48
      $region47: #{mini_eca_restcn_forward.5} parent=43 // pred_region
        %p295 = scmp.lt.s32.totalorder %s16, 1
        %s296 = scalar_select %p295, %s16, 1
        %s297 = smul.addr %s296, 4
        %s298 = scalar_lea.vmem %s4, %s297
      $region48: #{mini_eca_restcn_forward.5} parent=43 // pred_fallthru
        _
    $region44: #{mini_eca_restcn_forward.5} parent=5 // pred_fallthru
      _
  $region6: #{mini_eca_restcn_forward.5} parent=0 // loop_footer
    %s14 = sadd.s32 1, %s10
  $region7: #{mini_eca_restcn_forward.5} parent=0 // loop_footer_branch
    %9 = sbr.rel target = $region3
  $region8: #{mini_eca_restcn_forward.5} parent=0 // loop_exit
    _

// kernel: mini_eca_restcn_forward.6
$region0: #{mini_eca_restcn_forward.6}
  #allocation0 [shape = 'u32[]', space=smem, size = 0x4, offset = 0x4, fixed_abs, tag = 'smem constant byte address 0x4 - core index']
  #allocation1 [shape = 'u32[144,128]{1,0:T(1,128)}', space=vmem, size = 0x12000, scoped, tag = 'internal scratch']
  #allocation2 [shape = 'f32[10,64]{1,0:T(8,128)}', space=vmem, size = 0x2000, scoped, tag = 'scratch operand']
  #allocation3 [shape = 'f32[10,64]{1,0:T(8,128)}', space=vmem, size = 0x2000, scoped, tag = 'scratch operand']
  %s0 = inlined_call_operand.vmem [shape: bf16[2,8,64], index: 0, kind: input, shape index: {}]
  %s1 = inlined_call_operand.vmem [shape: bf16[3,64,64], index: 1, kind: input, shape index: {}]
  %s2 = inlined_call_operand.vmem [shape: f32[1,64], index: 2, kind: input, shape index: {}]
  %s3 = inlined_call_operand.vmem [shape: f32[1,64], index: 3, kind: input, shape index: {}]
  %s4 = inlined_call_operand.vmem [shape: bf16[3,64,64], index: 4, kind: input, shape index: {}]
  %s5 = inlined_call_operand.vmem [shape: f32[1,64], index: 5, kind: input, shape index: {}]
  %s6 = inlined_call_operand.vmem [shape: f32[1,64], index: 6, kind: input, shape index: {}]
  %s7 = inlined_call_operand.vmem [shape: bf16[64,64], index: 7, kind: input, shape index: {}]
  %s8 = inlined_call_operand.vmem [shape: bf16[2,8,64], index: 8, kind: output, shape index: {}]
  %s9 = sld [smem:[#allocation0]]
  $region65: #{mini_eca_restcn_forward.6} parent=0
    _
  %s11 = ssub.s32 1, %s9
  %s12 = scalar_select 0, %s11, %s9
  loop: start=0, step=1, limit=4
  $region2: #{mini_eca_restcn_forward.6} parent=0 // loop_pre_header
    _
  $region3: #{mini_eca_restcn_forward.6} parent=0 // loop_header
    %s14 = sphi 0, %s18
    %p15 = scmp.ge.s32.totalorder %s14, 4
    %s24 = sphi 0, %s26
    %s27 = sphi 0, %s24
    %s28 = sphi 0, %s27
    %s44 = sphi 0, %s28
    %s48 = sphi 0, %s48
    %s50 = sphi 0, %s48
    %s51 = sphi 0, %s50
    %s65 = sphi 0, %s51
    %s69 = sphi 0, %s69
    %s71 = sphi 0, %s69
    %s72 = sphi 0, %s71
    %s86 = sphi 0, %s72
    %s90 = sphi 0, %s90
    %s92 = sphi 0, %s90
    %s93 = sphi 0, %s92
    %s107 = sphi 0, %s93
    %s111 = sphi 0, %s111
    %s113 = sphi 0, %s111
    %s114 = sphi 0, %s113
    %s128 = sphi 0, %s114
    %s132 = sphi 0, %s132
    %s134 = sphi 0, %s132
    %s135 = sphi 0, %s134
    %s149 = sphi 0, %s135
    %s153 = sphi 0, %s153
    %s155 = sphi 0, %s153
    %s156 = sphi 0, %s155
    %s170 = sphi 0, %s156
    %s174 = sphi 0, %s174
    %s176 = sphi 0, %s174
    %s177 = sphi 0, %s176
    %s191 = sphi 0, %s177
    %s197 = sphi 0, %s199
    %s200 = sphi 0, %s197
    %s201 = sphi 0, %s200
    %s217 = sphi 0, %s201
  $region4: #{mini_eca_restcn_forward.6} parent=0 // loop_header_branch
    %17 = sbr.rel (%p15) target = $region8
  $region5: #{mini_eca_restcn_forward.6} parent=0 // loop_body
    %s19 = ssub.s32 %s14, 1
    %s20 = ssub.s32 %s14, 2
    %s21 = sadd.s32 %s14, 1
    %s22 = ssub.s32 %s14, %s21
    %p23 = scmp.eq.s32.totalorder %s22, 0
    %s25 = sadd.s32 %s24, 1
    %s26 = scalar_select %p23, %s24, %s25
    %p29 = pneg %p23
    %p30 = scmp.eq.s32.totalorder %s14, 1
    %p31 = por %p29, %p30
    %p32 = scmp.ne.s32.totalorder %s24, %s27
    %p33 = scmp.eq.s32.totalorder %s14, 0
    %p34 = por %p32, %p33
    %p35 = scmp.ne.s32.totalorder %s24, %s27
    %p36 = scmp.eq.s32.totalorder %s19, 1
    %p37 = por %p35, %p36
    %p38 = scmp.ne.s32.totalorder %s27, %s28
    %p39 = scmp.eq.s32.totalorder %s19, 0
    %p40 = por %p38, %p39
    %p41 = scmp.ne.s32.totalorder %s27, %s28
    %p42 = scmp.eq.s32.totalorder %s20, 1
    %p43 = por %p41, %p42
    %p45 = scmp.ne.s32.totalorder %s28, %s44
    %p46 = scmp.eq.s32.totalorder %s20, 0
    %p47 = por %p45, %p46
    %s49 = sadd.s32 %s48, 1
    %p52 = scmp.eq.s32.totalorder %s14, 1
    %p53 = scmp.ne.s32.totalorder %s48, %s50
    %p54 = scmp.eq.s32.totalorder %s14, 0
    %p55 = por %p53, %p54
    %p56 = scmp.ne.s32.totalorder %s48, %s50
    %p57 = scmp.eq.s32.totalorder %s19, 1
    %p58 = por %p56, %p57
    %p59 = scmp.ne.s32.totalorder %s50, %s51
    %p60 = scmp.eq.s32.totalorder %s19, 0
    %p61 = por %p59, %p60
    %p62 = scmp.ne.s32.totalorder %s50, %s51
    %p63 = scmp.eq.s32.totalorder %s20, 1
    %p64 = por %p62, %p63
    %p66 = scmp.ne.s32.totalorder %s51, %s65
    %p67 = scmp.eq.s32.totalorder %s20, 0
    %p68 = por %p66, %p67
    %s70 = sadd.s32 %s69, 1
    %p73 = scmp.eq.s32.totalorder %s14, 1
    %p74 = scmp.ne.s32.totalorder %s69, %s71
    %p75 = scmp.eq.s32.totalorder %s14, 0
    %p76 = por %p74, %p75
    %p77 = scmp.ne.s32.totalorder %s69, %s71
    %p78 = scmp.eq.s32.totalorder %s19, 1
    %p79 = por %p77, %p78
    %p80 = scmp.ne.s32.totalorder %s71, %s72
    %p81 = scmp.eq.s32.totalorder %s19, 0
    %p82 = por %p80, %p81
    %p83 = scmp.ne.s32.totalorder %s71, %s72
    %p84 = scmp.eq.s32.totalorder %s20, 1
    %p85 = por %p83, %p84
    %p87 = scmp.ne.s32.totalorder %s72, %s86
    %p88 = scmp.eq.s32.totalorder %s20, 0
    %p89 = por %p87, %p88
    %s91 = sadd.s32 %s90, 1
    %p94 = scmp.eq.s32.totalorder %s14, 1
    %p95 = scmp.ne.s32.totalorder %s90, %s92
    %p96 = scmp.eq.s32.totalorder %s14, 0
    %p97 = por %p95, %p96
    %p98 = scmp.ne.s32.totalorder %s90, %s92
    %p99 = scmp.eq.s32.totalorder %s19, 1
    %p100 = por %p98, %p99
    %p101 = scmp.ne.s32.totalorder %s92, %s93
    %p102 = scmp.eq.s32.totalorder %s19, 0
    %p103 = por %p101, %p102
    %p104 = scmp.ne.s32.totalorder %s92, %s93
    %p105 = scmp.eq.s32.totalorder %s20, 1
    %p106 = por %p104, %p105
    %p108 = scmp.ne.s32.totalorder %s93, %s107
    %p109 = scmp.eq.s32.totalorder %s20, 0
    %p110 = por %p108, %p109
    %s112 = sadd.s32 %s111, 1
    %p115 = scmp.eq.s32.totalorder %s14, 1
    %p116 = scmp.ne.s32.totalorder %s111, %s113
    %p117 = scmp.eq.s32.totalorder %s14, 0
    %p118 = por %p116, %p117
    %p119 = scmp.ne.s32.totalorder %s111, %s113
    %p120 = scmp.eq.s32.totalorder %s19, 1
    %p121 = por %p119, %p120
    %p122 = scmp.ne.s32.totalorder %s113, %s114
    %p123 = scmp.eq.s32.totalorder %s19, 0
    %p124 = por %p122, %p123
    %p125 = scmp.ne.s32.totalorder %s113, %s114
    %p126 = scmp.eq.s32.totalorder %s20, 1
    %p127 = por %p125, %p126
    %p129 = scmp.ne.s32.totalorder %s114, %s128
    %p130 = scmp.eq.s32.totalorder %s20, 0
    %p131 = por %p129, %p130
    %s133 = sadd.s32 %s132, 1
    %p136 = scmp.eq.s32.totalorder %s14, 1
    %p137 = scmp.ne.s32.totalorder %s132, %s134
    %p138 = scmp.eq.s32.totalorder %s14, 0
    %p139 = por %p137, %p138
    %p140 = scmp.ne.s32.totalorder %s132, %s134
    %p141 = scmp.eq.s32.totalorder %s19, 1
    %p142 = por %p140, %p141
    %p143 = scmp.ne.s32.totalorder %s134, %s135
    %p144 = scmp.eq.s32.totalorder %s19, 0
    %p145 = por %p143, %p144
    %p146 = scmp.ne.s32.totalorder %s134, %s135
    %p147 = scmp.eq.s32.totalorder %s20, 1
    %p148 = por %p146, %p147
    %p150 = scmp.ne.s32.totalorder %s135, %s149
    %p151 = scmp.eq.s32.totalorder %s20, 0
    %p152 = por %p150, %p151
    %s154 = sadd.s32 %s153, 1
    %p157 = scmp.eq.s32.totalorder %s14, 1
    %p158 = scmp.ne.s32.totalorder %s153, %s155
    %p159 = scmp.eq.s32.totalorder %s14, 0
    %p160 = por %p158, %p159
    %p161 = scmp.ne.s32.totalorder %s153, %s155
    %p162 = scmp.eq.s32.totalorder %s19, 1
    %p163 = por %p161, %p162
    %p164 = scmp.ne.s32.totalorder %s155, %s156
    %p165 = scmp.eq.s32.totalorder %s19, 0
    %p166 = por %p164, %p165
    %p167 = scmp.ne.s32.totalorder %s155, %s156
    %p168 = scmp.eq.s32.totalorder %s20, 1
    %p169 = por %p167, %p168
    %p171 = scmp.ne.s32.totalorder %s156, %s170
    %p172 = scmp.eq.s32.totalorder %s20, 0
    %p173 = por %p171, %p172
    %s175 = sadd.s32 %s174, 1
    %p178 = scmp.eq.s32.totalorder %s14, 1
    %p179 = scmp.ne.s32.totalorder %s174, %s176
    %p180 = scmp.eq.s32.totalorder %s14, 0
    %p181 = por %p179, %p180
    %p182 = scmp.ne.s32.totalorder %s174, %s176
    %p183 = scmp.eq.s32.totalorder %s19, 1
    %p184 = por %p182, %p183
    %p185 = scmp.ne.s32.totalorder %s176, %s177
    %p186 = scmp.eq.s32.totalorder %s19, 0
    %p187 = por %p185, %p186
    %p188 = scmp.ne.s32.totalorder %s176, %s177
    %p189 = scmp.eq.s32.totalorder %s20, 1
    %p190 = por %p188, %p189
    %p192 = scmp.ne.s32.totalorder %s177, %s191
    %p193 = scmp.eq.s32.totalorder %s20, 0
    %p194 = por %p192, %p193
    %s195 = ssub.s32 %s14, %s21
    %p196 = scmp.eq.s32.totalorder %s195, 0
    %s198 = sadd.s32 %s197, 1
    %s199 = scalar_select %p196, %s197, %s198
    %p202 = pneg %p196
    %p203 = scmp.eq.s32.totalorder %s14, 1
    %p204 = por %p202, %p203
    %p205 = scmp.ne.s32.totalorder %s197, %s200
    %p206 = scmp.eq.s32.totalorder %s14, 0
    %p207 = por %p205, %p206
    %p208 = scmp.ne.s32.totalorder %s197, %s200
    %p209 = scmp.eq.s32.totalorder %s19, 1
    %p210 = por %p208, %p209
    %p211 = scmp.ne.s32.totalorder %s200, %s201
    %p212 = scmp.eq.s32.totalorder %s19, 0
    %p213 = por %p211, %p212
    %p214 = scmp.ne.s32.totalorder %s200, %s201
    %p215 = scmp.eq.s32.totalorder %s20, 1
    %p216 = por %p214, %p215
    %p218 = scmp.ne.s32.totalorder %s201, %s217
    %p219 = scmp.eq.s32.totalorder %s20, 0
    %p220 = por %p218, %p219
    %p221 = scmp.le.s32.totalorder 1, %s14
    %p222 = scmp.lt.s32.totalorder %s14, 3
    %p223 = pnand %p221, %p222
    %p224 = pneg %p223
    // Predicated region
    $region9: #{mini_eca_restcn_forward.6} parent=5 // pred_check
      _
    $region10: #{mini_eca_restcn_forward.6} parent=5 // pred_check_branch
      %226 = sbr.rel (%p223) target = $region12
    $region11: #{mini_eca_restcn_forward.6} parent=5 // pred_region
      %s227 = ssub.s32 %s14, 1
      // Predicated region
      $region13: #{mini_eca_restcn_forward.6} parent=11 // pred_check
        %p228 = pneg %p61
      $region14: #{mini_eca_restcn_forward.6} parent=11 // pred_check_branch
        %230 = sbr.rel (%p228) target = $region16
      $region15: #{mini_eca_restcn_forward.6} parent=11 // pred_region
        _
      $region16: #{mini_eca_restcn_forward.6} parent=11 // pred_fallthru
        _
      // Predicated region
      $region17: #{mini_eca_restcn_forward.6} parent=11 // pred_check
        %p231 = pneg %p82
      $region18: #{mini_eca_restcn_forward.6} parent=11 // pred_check_branch
        %233 = sbr.rel (%p231) target = $region20
      $region19: #{mini_eca_restcn_forward.6} parent=11 // pred_region
        _
      $region20: #{mini_eca_restcn_forward.6} parent=11 // pred_fallthru
        _
      // Predicated region
      $region21: #{mini_eca_restcn_forward.6} parent=11 // pred_check
        %p234 = pneg %p103
      $region22: #{mini_eca_restcn_forward.6} parent=11 // pred_check_branch
        %236 = sbr.rel (%p234) target = $region24
      $region23: #{mini_eca_restcn_forward.6} parent=11 // pred_region
        _
      $region24: #{mini_eca_restcn_forward.6} parent=11 // pred_fallthru
        _
      // Predicated region
      $region25: #{mini_eca_restcn_forward.6} parent=11 // pred_check
        %p237 = pneg %p124
      $region26: #{mini_eca_restcn_forward.6} parent=11 // pred_check_branch
        %239 = sbr.rel (%p237) target = $region28
      $region27: #{mini_eca_restcn_forward.6} parent=11 // pred_region
        _
      $region28: #{mini_eca_restcn_forward.6} parent=11 // pred_fallthru
        _
      // Predicated region
      $region29: #{mini_eca_restcn_forward.6} parent=11 // pred_check
        %p240 = pneg %p145
      $region30: #{mini_eca_restcn_forward.6} parent=11 // pred_check_branch
        %242 = sbr.rel (%p240) target = $region32
      $region31: #{mini_eca_restcn_forward.6} parent=11 // pred_region
        _
      $region32: #{mini_eca_restcn_forward.6} parent=11 // pred_fallthru
        _
      // Predicated region
      $region33: #{mini_eca_restcn_forward.6} parent=11 // pred_check
        %p243 = pneg %p166
      $region34: #{mini_eca_restcn_forward.6} parent=11 // pred_check_branch
        %245 = sbr.rel (%p243) target = $region36
      $region35: #{mini_eca_restcn_forward.6} parent=11 // pred_region
        _
      $region36: #{mini_eca_restcn_forward.6} parent=11 // pred_fallthru
        _
      // Predicated region
      $region37: #{mini_eca_restcn_forward.6} parent=11 // pred_check
        %p246 = pneg %p187
      $region38: #{mini_eca_restcn_forward.6} parent=11 // pred_check_branch
        %248 = sbr.rel (%p246) target = $region40
      $region39: #{mini_eca_restcn_forward.6} parent=11 // pred_region
        _
      $region40: #{mini_eca_restcn_forward.6} parent=11 // pred_fallthru
        _
    $region12: #{mini_eca_restcn_forward.6} parent=5 // pred_fallthru
      _
    %p249 = scmp.lt.s32.totalorder %s14, 2
    // Predicated region
    $region41: #{mini_eca_restcn_forward.6} parent=5 // pred_check
      %p250 = pneg %p249
    $region42: #{mini_eca_restcn_forward.6} parent=5 // pred_check_branch
      %252 = sbr.rel (%p250) target = $region44
    $region43: #{mini_eca_restcn_forward.6} parent=5 // pred_region
      // Predicated region
      $region45: #{mini_eca_restcn_forward.6} parent=43 // pred_check
        %p253 = pneg %p34
      $region46: #{mini_eca_restcn_forward.6} parent=43 // pred_check_branch
        %255 = sbr.rel (%p253) target = $region48
      $region47: #{mini_eca_restcn_forward.6} parent=43 // pred_region
        %p256 = scmp.lt.s32.totalorder %s14, 1
        %s257 = scalar_select %p256, %s14, 1
        %s258 = smul.addr %s257, 4
        %s259 = scalar_lea.vmem %s0, %s258
      $region48: #{mini_eca_restcn_forward.6} parent=43 // pred_fallthru
        _
    $region44: #{mini_eca_restcn_forward.6} parent=5 // pred_fallthru
      _
    %p260 = scmp.le.s32.totalorder 1, %s14
    %p261 = scmp.lt.s32.totalorder %s14, 3
    %p262 = pnand %p260, %p261
    %p263 = pneg %p262
    // Predicated region
    $region49: #{mini_eca_restcn_forward.6} parent=5 // pred_check
      _
    $region50: #{mini_eca_restcn_forward.6} parent=5 // pred_check_branch
      %265 = sbr.rel (%p262) target = $region52
    $region51: #{mini_eca_restcn_forward.6} parent=5 // pred_region
      %s266 = ssub.s32 %s14, 1
      %p267 = scmp.lt.s32.totalorder %s19, 1
      %s268 = scalar_select %p267, %s19, 1
      %s269 = smul.addr %s268, 4
      %s270 = scalar_lea.vmem %s0, %s269
      %p271 = pneg %p40
      %p272 = pneg %p37
      %p273 = pneg %p61
      %p274 = pneg %p58
      %p275 = pneg %p82
      %p276 = pneg %p79
      %p277 = pneg %p103
      %p278 = pneg %p100
      %p279 = pneg %p124
      %p280 = pneg %p121
      %p281 = pneg %p145
      %p282 = pneg %p142
      %p283 = pneg %p166
      %p284 = pneg %p163
      %p285 = pneg %p187
      %p286 = pneg %p184
      %p287 = pneg %p213
      %p288 = pneg %p210
      %p289 = scmp.lt.s32.totalorder %s19, 1
      %s290 = scalar_select %p289, %s19, 1
      %s291 = smul.addr %s290, 4
      %s292 = scalar_lea.vmem %s8, %s291
      %p293 = scmp.lt.s32.totalorder %s19, 1
      %s294 = scalar_select %p293, %s19, 1
      %s295 = smul.addr %s294, 4
      %s296 = scalar_lea.vmem %s0, %s295
      %p297 = scmp.lt.s32.totalorder %s19, 1
      %s298 = scalar_select %p297, %s19, 1
      %s299 = smul.addr %s298, 4
      %s300 = scalar_lea.vmem %s8, %s299
      %vm302 = vcmask 516096
      %303 = vst.msk [vmem:[#allocation2] sm:$0x1] %vm302, 0.0
      %304 = vst.msk [vmem:[#allocation2 + $0x9] sm:$0x1] %vm302, 0.0
      %305 = vst.msk [vmem:[#allocation3] sm:$0x1] %vm302, 0.0
      %306 = vst.msk [vmem:[#allocation3 + $0x9] sm:$0x1] %vm302, 0.0
      %v307 = vld [vmem:[%s296] sm:$0xf]
      %v308 = vunpack.c.l.bf16 %v307
      %vm309 = vcmask 523264
      %310 = vst.msk [vmem:[#allocation2 + $0x1] sm:$0xff] %vm309, %v308
      %s311 = scalar_lea.vmem %s1, 32
      %v312 = vld [vmem:[%s311] sm:$0xf]
      %v313 = vld [vmem:[%s311 + $0x4] sm:$0xf]
      %v314 = vld [vmem:[%s311 + $0x8] sm:$0xf]
      %v315 = vld [vmem:[%s311 + $0xc] sm:$0xf]
      %v316 = vld [vmem:[%s311 + $0x10] sm:$0xf]
      %v317 = vld [vmem:[%s311 + $0x14] sm:$0xf]
      %v318 = vld [vmem:[%s311 + $0x18] sm:$0xf]
      %v319 = vld [vmem:[%s311 + $0x1c] sm:$0xf]
      %v320 = vld [vmem:[#allocation2] sm:$0xff]
      %v321 = vpack.c.bf16 %v320, %v320
      %v322 = vld [vmem:[%s1] sm:$0xf]
      %v323 = vld [vmem:[%s1 + $0x4] sm:$0xf]
      %v324 = vld [vmem:[%s1 + $0x8] sm:$0xf]
      %v325 = vld [vmem:[%s1 + $0xc] sm:$0xf]
      %v326 = vld [vmem:[%s1 + $0x10] sm:$0xf]
      %v327 = vld [vmem:[%s1 + $0x14] sm:$0xf]
      %v328 = vld [vmem:[%s1 + $0x18] sm:$0xf]
      %v329 = vld [vmem:[%s1 + $0x1c] sm:$0xf]
      %v338 = vunpack.c.l.b16 %v322
      %v339 = vunpack.c.l.b16 %v323
      %v340 = vunpack.c.l.b16 %v324
      %v341 = vunpack.c.l.b16 %v325
      %v342 = vunpack.c.l.b16 %v326
      %v343 = vunpack.c.l.b16 %v327
      %v344 = vunpack.c.l.b16 %v328
      %v345 = vunpack.c.l.b16 %v329
      %v346 = vpack.c.b16 %v339, %v338
      %v347 = vpack.c.b16 %v341, %v340
      %v348 = vpack.c.b16 %v343, %v342
      %v349 = vpack.c.b16 %v345, %v344
      %v355 = vsel %vm309, %v321, 0
      %357 = vmatprep.subr.bf16.mxu0 0
      %358 = vmatpush1.bf16.msra.mxu0 0
      %359 = vmatprep.subr.bf16.mxu0 0
      %360 = vmatpush1.bf16.msra.mxu0 0
      %361 = vmatprep.subr.bf16.mxu0 0
      %362 = vmatpush1.bf16.msra.mxu0 0
      %363 = vmatprep.subr.bf16.mxu0 0
      %364 = vmatpush1.bf16.msra.mxu0 0
      %365 = vmatprep.subr.bf16.mxu0 0
      %366 = vmatpush1.bf16.msra.mxu0 %v349
      %367 = vmatprep.subr.bf16.mxu0 0
      %368 = vmatpush1.bf16.msra.mxu0 %v348
      %369 = vmatprep.subr.bf16.mxu0 0
      %370 = vmatpush1.bf16.msra.mxu0 %v347
      %371 = vmatprep.subr.bf16.mxu0 0
      %372 = vmatpush1.bf16.msra.mxu0 %v346
      %373 = vmatprep.subr.bf16.mxu0 0
      %374 = vmatpush2.bf16.msra.mxu0 0
      %375 = vmatprep.subr.bf16.mxu0 0
      %376 = vmatpush2.bf16.msra.mxu0 0
      %377 = vmatprep.subr.bf16.mxu0 0
      %378 = vmatpush2.bf16.msra.mxu0 0
      %379 = vmatprep.subr.bf16.mxu0 0
      %380 = vmatpush2.bf16.msra.mxu0 0
      %381 = vmatprep.subr.bf16.mxu0 0
      %382 = vmatpush2.bf16.msra.mxu0 0
      %383 = vmatprep.subr.bf16.mxu0 0
      %384 = vmatpush2.bf16.msra.mxu0 0
      %385 = vmatprep.subr.bf16.mxu0 0
      %386 = vmatpush2.bf16.msra.mxu0 0
      %387 = vmatprep.subr.bf16.mxu0 0
      %388 = vmatpush2.bf16.msra.mxu0 0
      %389 = vmatprep.mubr.bf16.mxu0 0
      %390 = vmatmul.mubr.bf16.gmra.mxu0 %v355
      %v391 = vpop.f32.mrf.mxu0
      %v392 = vadd.f32 0.0, %v391
      %v393 = vpop.f32.mrf.mxu0
      %v394 = vpop.f32.mrf.mxu0
      %v395 = vpop.f32.mrf.mxu0
      %396 = vdwg.mxu0
      %v405 = vunpack.c.l.b16 %v312
      %v406 = vunpack.c.l.b16 %v313
      %v407 = vunpack.c.l.b16 %v314
      %v408 = vunpack.c.l.b16 %v315
      %v409 = vunpack.c.l.b16 %v316
      %v410 = vunpack.c.l.b16 %v317
      %v411 = vunpack.c.l.b16 %v318
      %v412 = vunpack.c.l.b16 %v319
      %v413 = vpack.c.b16 %v406, %v405
      %v414 = vpack.c.b16 %v408, %v407
      %v415 = vpack.c.b16 %v410, %v409
      %v416 = vpack.c.b16 %v412, %v411
      %v422 = vsel %vm309, %v307, 0
      %424 = vmatprep.subr.bf16.mxu0 0
      %425 = vmatpush1.bf16.msra.mxu0 0
      %426 = vmatprep.subr.bf16.mxu0 0
      %427 = vmatpush1.bf16.msra.mxu0 0
      %428 = vmatprep.subr.bf16.mxu0 0
      %429 = vmatpush1.bf16.msra.mxu0 0
      %430 = vmatprep.subr.bf16.mxu0 0
      %431 = vmatpush1.bf16.msra.mxu0 0
      %432 = vmatprep.subr.bf16.mxu0 0
      %433 = vmatpush1.bf16.msra.mxu0 %v416
      %434 = vmatprep.subr.bf16.mxu0 0
      %435 = vmatpush1.bf16.msra.mxu0 %v415
      %436 = vmatprep.subr.bf16.mxu0 0
      %437 = vmatpush1.bf16.msra.mxu0 %v414
      %438 = vmatprep.subr.bf16.mxu0 0
      %439 = vmatpush1.bf16.msra.mxu0 %v413
      %440 = vmatprep.subr.bf16.mxu0 0
      %441 = vmatpush2.bf16.msra.mxu0 0
      %442 = vmatprep.subr.bf16.mxu0 0
      %443 = vmatpush2.bf16.msra.mxu0 0
      %444 = vmatprep.subr.bf16.mxu0 0
      %445 = vmatpush2.bf16.msra.mxu0 0
      %446 = vmatprep.subr.bf16.mxu0 0
      %447 = vmatpush2.bf16.msra.mxu0 0
      %448 = vmatprep.subr.bf16.mxu0 0
      %449 = vmatpush2.bf16.msra.mxu0 0
      %450 = vmatprep.subr.bf16.mxu0 0
      %451 = vmatpush2.bf16.msra.mxu0 0
      %452 = vmatprep.subr.bf16.mxu0 0
      %453 = vmatpush2.bf16.msra.mxu0 0
      %454 = vmatprep.subr.bf16.mxu0 0
      %455 = vmatpush2.bf16.msra.mxu0 0
      %456 = vmatprep.mubr.bf16.mxu0 0
      %457 = vmatmul.mubr.bf16.gmra.mxu0 %v422
      %v458 = vpop.f32.mrf.mxu0
      %v459 = vadd.f32 %v392, %v458
      %v460 = vpop.f32.mrf.mxu0
      %v461 = vpop.f32.mrf.mxu0
      %v462 = vpop.f32.mrf.mxu0
      %463 = vdwg.mxu0
      %v464 = vld [vmem:[#allocation2 + $0x2] sm:$0xff]
      %v465 = vpack.c.bf16 %v464, %v464
      %s466 = scalar_lea.vmem %s1, 64
      %v467 = vld [vmem:[%s466] sm:$0xf]
      %v468 = vld [vmem:[%s466 + $0x4] sm:$0xf]
      %v469 = vld [vmem:[%s466 + $0x8] sm:$0xf]
      %v470 = vld [vmem:[%s466 + $0xc] sm:$0xf]
      %v471 = vld [vmem:[%s466 + $0x10] sm:$0xf]
      %v472 = vld [vmem:[%s466 + $0x14] sm:$0xf]
      %v473 = vld [vmem:[%s466 + $0x18] sm:$0xf]
      %v474 = vld [vmem:[%s466 + $0x1c] sm:$0xf]
      %v483 = vunpack.c.l.b16 %v467
      %v484 = vunpack.c.l.b16 %v468
      %v485 = vunpack.c.l.b16 %v469
      %v486 = vunpack.c.l.b16 %v470
      %v487 = vunpack.c.l.b16 %v471
      %v488 = vunpack.c.l.b16 %v472
      %v489 = vunpack.c.l.b16 %v473
      %v490 = vunpack.c.l.b16 %v474
      %v491 = vpack.c.b16 %v484, %v483
      %v492 = vpack.c.b16 %v486, %v485
      %v493 = vpack.c.b16 %v488, %v487
      %v494 = vpack.c.b16 %v490, %v489
      %v500 = vsel %vm309, %v465, 0
      %502 = vmatprep.subr.bf16.mxu0 0
      %503 = vmatpush1.bf16.msra.mxu0 0
      %504 = vmatprep.subr.bf16.mxu0 0
      %505 = vmatpush1.bf16.msra.mxu0 0
      %506 = vmatprep.subr.bf16.mxu0 0
      %507 = vmatpush1.bf16.msra.mxu0 0
      %508 = vmatprep.subr.bf16.mxu0 0
      %509 = vmatpush1.bf16.msra.mxu0 0
      %510 = vmatprep.subr.bf16.mxu0 0
      %511 = vmatpush1.bf16.msra.mxu0 %v494
      %512 = vmatprep.subr.bf16.mxu0 0
      %513 = vmatpush1.bf16.msra.mxu0 %v493
      %514 = vmatprep.subr.bf16.mxu0 0
      %515 = vmatpush1.bf16.msra.mxu0 %v492
      %516 = vmatprep.subr.bf16.mxu0 0
      %517 = vmatpush1.bf16.msra.mxu0 %v491
      %518 = vmatprep.subr.bf16.mxu0 0
      %519 = vmatpush2.bf16.msra.mxu0 0
      %520 = vmatprep.subr.bf16.mxu0 0
      %521 = vmatpush2.bf16.msra.mxu0 0
      %522 = vmatprep.subr.bf16.mxu0 0
      %523 = vmatpush2.bf16.msra.mxu0 0
      %524 = vmatprep.subr.bf16.mxu0 0
      %525 = vmatpush2.bf16.msra.mxu0 0
      %526 = vmatprep.subr.bf16.mxu0 0
      %527 = vmatpush2.bf16.msra.mxu0 0
      %528 = vmatprep.subr.bf16.mxu0 0
      %529 = vmatpush2.bf16.msra.mxu0 0
      %530 = vmatprep.subr.bf16.mxu0 0
      %531 = vmatpush2.bf16.msra.mxu0 0
      %532 = vmatprep.subr.bf16.mxu0 0
      %533 = vmatpush2.bf16.msra.mxu0 0
      %534 = vmatprep.mubr.bf16.mxu0 0
      %535 = vmatmul.mubr.bf16.gmra.mxu0 %v500
      %v536 = vpop.f32.mrf.mxu0
      %v537 = vadd.f32 0.0, %v536
      %v538 = vpop.f32.mrf.mxu0
      %v539 = vpop.f32.mrf.mxu0
      %v540 = vpop.f32.mrf.mxu0
      %541 = vdwg.mxu0
      %v542 = vadd.f32 %v459, %v537
      %v543 = vld [vmem:[%s2] sm:$0x1]
      %v545 = vlaneseq
      %v546 = vshrl.u32 %v545, 7
      %v547 = vsub.s32 0, %v546
      %v548 = vrot.slane %v543, %v547
      %v550 = vmul.f32 %v542, %v548
      %v551 = vld [vmem:[%s3] sm:$0x1]
      %v553 = vlaneseq
      %v554 = vshrl.u32 %v553, 7
      %v555 = vsub.s32 0, %v554
      %v556 = vrot.slane %v551, %v555
      %v558 = vadd.f32 %v550, %v556
      %v559 = vmax.f32 %v558, 0.0
      %560 = vst.msk [vmem:[#allocation3 + $0x1] sm:$0xff] %vm309, %v559
      %v561 = vpack.c.bf16 %v559, %v559
      %s562 = scalar_lea.vmem %s4, 32
      %v563 = vld [vmem:[%s562] sm:$0xf]
      %v564 = vld [vmem:[%s562 + $0x4] sm:$0xf]
      %v565 = vld [vmem:[%s562 + $0x8] sm:$0xf]
      %v566 = vld [vmem:[%s562 + $0xc] sm:$0xf]
      %v567 = vld [vmem:[%s562 + $0x10] sm:$0xf]
      %v568 = vld [vmem:[%s562 + $0x14] sm:$0xf]
      %v569 = vld [vmem:[%s562 + $0x18] sm:$0xf]
      %v570 = vld [vmem:[%s562 + $0x1c] sm:$0xf]
      %v571 = vld [vmem:[#allocation3] sm:$0xff]
      %v572 = vpack.c.bf16 %v571, %v571
      %v573 = vld [vmem:[%s4] sm:$0xf]
      %v574 = vld [vmem:[%s4 + $0x4] sm:$0xf]
      %v575 = vld [vmem:[%s4 + $0x8] sm:$0xf]
      %v576 = vld [vmem:[%s4 + $0xc] sm:$0xf]
      %v577 = vld [vmem:[%s4 + $0x10] sm:$0xf]
      %v578 = vld [vmem:[%s4 + $0x14] sm:$0xf]
      %v579 = vld [vmem:[%s4 + $0x18] sm:$0xf]
      %v580 = vld [vmem:[%s4 + $0x1c] sm:$0xf]
      %v589 = vunpack.c.l.b16 %v573
      %v590 = vunpack.c.l.b16 %v574
      %v591 = vunpack.c.l.b16 %v575
      %v592 = vunpack.c.l.b16 %v576
      %v593 = vunpack.c.l.b16 %v577
      %v594 = vunpack.c.l.b16 %v578
      %v595 = vunpack.c.l.b16 %v579
      %v596 = vunpack.c.l.b16 %v580
      %v597 = vpack.c.b16 %v590, %v589
      %v598 = vpack.c.b16 %v592, %v591
      %v599 = vpack.c.b16 %v594, %v593
      %v600 = vpack.c.b16 %v596, %v595
      %v606 = vsel %vm309, %v572, 0
      %608 = vmatprep.subr.bf16.mxu0 0
      %609 = vmatpush1.bf16.msra.mxu0 0
      %610 = vmatprep.subr.bf16.mxu0 0
      %611 = vmatpush1.bf16.msra.mxu0 0
      %612 = vmatprep.subr.bf16.mxu0 0
      %613 = vmatpush1.bf16.msra.mxu0 0
      %614 = vmatprep.subr.bf16.mxu0 0
      %615 = vmatpush1.bf16.msra.mxu0 0
      %616 = vmatprep.subr.bf16.mxu0 0
      %617 = vmatpush1.bf16.msra.mxu0 %v600
      %618 = vmatprep.subr.bf16.mxu0 0
      %619 = vmatpush1.bf16.msra.mxu0 %v599
      %620 = vmatprep.subr.bf16.mxu0 0
      %621 = vmatpush1.bf16.msra.mxu0 %v598
      %622 = vmatprep.subr.bf16.mxu0 0
      %623 = vmatpush1.bf16.msra.mxu0 %v597
      %624 = vmatprep.subr.bf16.mxu0 0
      %625 = vmatpush2.bf16.msra.mxu0 0
      %626 = vmatprep.subr.bf16.mxu0 0
      %627 = vmatpush2.bf16.msra.mxu0 0
      %628 = vmatprep.subr.bf16.mxu0 0
      %629 = vmatpush2.bf16.msra.mxu0 0
      %630 = vmatprep.subr.bf16.mxu0 0
      %631 = vmatpush2.bf16.msra.mxu0 0
      %632 = vmatprep.subr.bf16.mxu0 0
      %633 = vmatpush2.bf16.msra.mxu0 0
      %634 = vmatprep.subr.bf16.mxu0 0
      %635 = vmatpush2.bf16.msra.mxu0 0
      %636 = vmatprep.subr.bf16.mxu0 0
      %637 = vmatpush2.bf16.msra.mxu0 0
      %638 = vmatprep.subr.bf16.mxu0 0
      %639 = vmatpush2.bf16.msra.mxu0 0
      %640 = vmatprep.mubr.bf16.mxu0 0
      %641 = vmatmul.mubr.bf16.gmra.mxu0 %v606
      %v642 = vpop.f32.mrf.mxu0
      %v643 = vadd.f32 0.0, %v642
      %v644 = vpop.f32.mrf.mxu0
      %v645 = vpop.f32.mrf.mxu0
      %v646 = vpop.f32.mrf.mxu0
      %647 = vdwg.mxu0
      %v656 = vunpack.c.l.b16 %v563
      %v657 = vunpack.c.l.b16 %v564
      %v658 = vunpack.c.l.b16 %v565
      %v659 = vunpack.c.l.b16 %v566
      %v660 = vunpack.c.l.b16 %v567
      %v661 = vunpack.c.l.b16 %v568
      %v662 = vunpack.c.l.b16 %v569
      %v663 = vunpack.c.l.b16 %v570
      %v664 = vpack.c.b16 %v657, %v656
      %v665 = vpack.c.b16 %v659, %v658
      %v666 = vpack.c.b16 %v661, %v660
      %v667 = vpack.c.b16 %v663, %v662
      %v673 = vsel %vm309, %v561, 0
      %675 = vmatprep.subr.bf16.mxu0 0
      %676 = vmatpush1.bf16.msra.mxu0 0
      %677 = vmatprep.subr.bf16.mxu0 0
      %678 = vmatpush1.bf16.msra.mxu0 0
      %679 = vmatprep.subr.bf16.mxu0 0
      %680 = vmatpush1.bf16.msra.mxu0 0
      %681 = vmatprep.subr.bf16.mxu0 0
      %682 = vmatpush1.bf16.msra.mxu0 0
      %683 = vmatprep.subr.bf16.mxu0 0
      %684 = vmatpush1.bf16.msra.mxu0 %v667
      %685 = vmatprep.subr.bf16.mxu0 0
      %686 = vmatpush1.bf16.msra.mxu0 %v666
      %687 = vmatprep.subr.bf16.mxu0 0
      %688 = vmatpush1.bf16.msra.mxu0 %v665
      %689 = vmatprep.subr.bf16.mxu0 0
      %690 = vmatpush1.bf16.msra.mxu0 %v664
      %691 = vmatprep.subr.bf16.mxu0 0
      %692 = vmatpush2.bf16.msra.mxu0 0
      %693 = vmatprep.subr.bf16.mxu0 0
      %694 = vmatpush2.bf16.msra.mxu0 0
      %695 = vmatprep.subr.bf16.mxu0 0
      %696 = vmatpush2.bf16.msra.mxu0 0
      %697 = vmatprep.subr.bf16.mxu0 0
      %698 = vmatpush2.bf16.msra.mxu0 0
      %699 = vmatprep.subr.bf16.mxu0 0
      %700 = vmatpush2.bf16.msra.mxu0 0
      %701 = vmatprep.subr.bf16.mxu0 0
      %702 = vmatpush2.bf16.msra.mxu0 0
      %703 = vmatprep.subr.bf16.mxu0 0
      %704 = vmatpush2.bf16.msra.mxu0 0
      %705 = vmatprep.subr.bf16.mxu0 0
      %706 = vmatpush2.bf16.msra.mxu0 0
      %707 = vmatprep.mubr.bf16.mxu0 0
      %708 = vmatmul.mubr.bf16.gmra.mxu0 %v673
      %v709 = vpop.f32.mrf.mxu0
      %v710 = vadd.f32 %v643, %v709
      %v711 = vpop.f32.mrf.mxu0
      %v712 = vpop.f32.mrf.mxu0
      %v713 = vpop.f32.mrf.mxu0
      %714 = vdwg.mxu0
      %v715 = vld [vmem:[#allocation3 + $0x2] sm:$0xff]
      %v716 = vpack.c.bf16 %v715, %v715
      %s717 = scalar_lea.vmem %s4, 64
      %v718 = vld [vmem:[%s717] sm:$0xf]
      %v719 = vld [vmem:[%s717 + $0x4] sm:$0xf]
      %v720 = vld [vmem:[%s717 + $0x8] sm:$0xf]
      %v721 = vld [vmem:[%s717 + $0xc] sm:$0xf]
      %v722 = vld [vmem:[%s717 + $0x10] sm:$0xf]
      %v723 = vld [vmem:[%s717 + $0x14] sm:$0xf]
      %v724 = vld [vmem:[%s717 + $0x18] sm:$0xf]
      %v725 = vld [vmem:[%s717 + $0x1c] sm:$0xf]
      %v734 = vunpack.c.l.b16 %v718
      %v735 = vunpack.c.l.b16 %v719
      %v736 = vunpack.c.l.b16 %v720
      %v737 = vunpack.c.l.b16 %v721
      %v738 = vunpack.c.l.b16 %v722
      %v739 = vunpack.c.l.b16 %v723
      %v740 = vunpack.c.l.b16 %v724
      %v741 = vunpack.c.l.b16 %v725
      %v742 = vpack.c.b16 %v735, %v734
      %v743 = vpack.c.b16 %v737, %v736
      %v744 = vpack.c.b16 %v739, %v738
      %v745 = vpack.c.b16 %v741, %v740
      %v751 = vsel %vm309, %v716, 0
      %753 = vmatprep.subr.bf16.mxu0 0
      %754 = vmatpush1.bf16.msra.mxu0 0
      %755 = vmatprep.subr.bf16.mxu0 0
      %756 = vmatpush1.bf16.msra.mxu0 0
      %757 = vmatprep.subr.bf16.mxu0 0
      %758 = vmatpush1.bf16.msra.mxu0 0
      %759 = vmatprep.subr.bf16.mxu0 0
      %760 = vmatpush1.bf16.msra.mxu0 0
      %761 = vmatprep.subr.bf16.mxu0 0
      %762 = vmatpush1.bf16.msra.mxu0 %v745
      %763 = vmatprep.subr.bf16.mxu0 0
      %764 = vmatpush1.bf16.msra.mxu0 %v744
      %765 = vmatprep.subr.bf16.mxu0 0
      %766 = vmatpush1.bf16.msra.mxu0 %v743
      %767 = vmatprep.subr.bf16.mxu0 0
      %768 = vmatpush1.bf16.msra.mxu0 %v742
      %769 = vmatprep.subr.bf16.mxu0 0
      %770 = vmatpush2.bf16.msra.mxu0 0
      %771 = vmatprep.subr.bf16.mxu0 0
      %772 = vmatpush2.bf16.msra.mxu0 0
      %773 = vmatprep.subr.bf16.mxu0 0
      %774 = vmatpush2.bf16.msra.mxu0 0
      %775 = vmatprep.subr.bf16.mxu0 0
      %776 = vmatpush2.bf16.msra.mxu0 0
      %777 = vmatprep.subr.bf16.mxu0 0
      %778 = vmatpush2.bf16.msra.mxu0 0
      %779 = vmatprep.subr.bf16.mxu0 0
      %780 = vmatpush2.bf16.msra.mxu0 0
      %781 = vmatprep.subr.bf16.mxu0 0
      %782 = vmatpush2.bf16.msra.mxu0 0
      %783 = vmatprep.subr.bf16.mxu0 0
      %784 = vmatpush2.bf16.msra.mxu0 0
      %785 = vmatprep.mubr.bf16.mxu0 0
      %786 = vmatmul.mubr.bf16.gmra.mxu0 %v751
      %v787 = vpop.f32.mrf.mxu0
      %v788 = vadd.f32 0.0, %v787
      %v789 = vpop.f32.mrf.mxu0
      %v790 = vpop.f32.mrf.mxu0
      %v791 = vpop.f32.mrf.mxu0
      %792 = vdwg.mxu0
      %v793 = vadd.f32 %v710, %v788
      %v794 = vld [vmem:[%s5] sm:$0x1]
      %v796 = vlaneseq
      %v797 = vshrl.u32 %v796, 7
      %v798 = vsub.s32 0, %v797
      %v799 = vrot.slane %v794, %v798
      %v801 = vmul.f32 %v793, %v799
      %v802 = vld [vmem:[%s6] sm:$0x1]
      %v804 = vlaneseq
      %v805 = vshrl.u32 %v804, 7
      %v806 = vsub.s32 0, %v805
      %v807 = vrot.slane %v802, %v806
      %v809 = vadd.f32 %v801, %v807
      %v810 = vsel %vm309, %v809, 0.0
      %v811 = vrot.slane %v810, 4
      %v812 = vadd.f32 %v810, %v811
      %v813 = vrot.slane %v812, 2
      %v814 = vadd.f32 %v812, %v813
      %v815 = vrot.slane %v814, 1
      %v816 = vadd.f32 %v814, %v815
      %v817 = vrcp.pop 8.0
      %v818 = vmul.f32 %v816, %v817
      %v819 = vpack.c.bf16 %v818, %v818
      %v820 = vld [vmem:[%s7] sm:$0xf]
      %v821 = vld [vmem:[%s7 + $0x4] sm:$0xf]
      %v822 = vld [vmem:[%s7 + $0x8] sm:$0xf]
      %v823 = vld [vmem:[%s7 + $0xc] sm:$0xf]
      %v824 = vld [vmem:[%s7 + $0x10] sm:$0xf]
      %v825 = vld [vmem:[%s7 + $0x14] sm:$0xf]
      %v826 = vld [vmem:[%s7 + $0x18] sm:$0xf]
      %v827 = vld [vmem:[%s7 + $0x1c] sm:$0xf]
      %v836 = vunpack.c.l.b16 %v820
      %v837 = vunpack.c.l.b16 %v821
      %v838 = vunpack.c.l.b16 %v822
      %v839 = vunpack.c.l.b16 %v823
      %v840 = vunpack.c.l.b16 %v824
      %v841 = vunpack.c.l.b16 %v825
      %v842 = vunpack.c.l.b16 %v826
      %v843 = vunpack.c.l.b16 %v827
      %v844 = vpack.c.b16 %v837, %v836
      %v845 = vpack.c.b16 %v839, %v838
      %v846 = vpack.c.b16 %v841, %v840
      %v847 = vpack.c.b16 %v843, %v842
      %v853 = vsel %vm309, %v819, 0
      %855 = vmatprep.subr.bf16.mxu0 0
      %856 = vmatpush1.bf16.msra.mxu0 0
      %857 = vmatprep.subr.bf16.mxu0 0
      %858 = vmatpush1.bf16.msra.mxu0 0
      %859 = vmatprep.subr.bf16.mxu0 0
      %860 = vmatpush1.bf16.msra.mxu0 0
      %861 = vmatprep.subr.bf16.mxu0 0
      %862 = vmatpush1.bf16.msra.mxu0 0
      %863 = vmatprep.subr.bf16.mxu0 0
      %864 = vmatpush1.bf16.msra.mxu0 %v847
      %865 = vmatprep.subr.bf16.mxu0 0
      %866 = vmatpush1.bf16.msra.mxu0 %v846
      %867 = vmatprep.subr.bf16.mxu0 0
      %868 = vmatpush1.bf16.msra.mxu0 %v845
      %869 = vmatprep.subr.bf16.mxu0 0
      %870 = vmatpush1.bf16.msra.mxu0 %v844
      %871 = vmatprep.subr.bf16.mxu0 0
      %872 = vmatpush2.bf16.msra.mxu0 0
      %873 = vmatprep.subr.bf16.mxu0 0
      %874 = vmatpush2.bf16.msra.mxu0 0
      %875 = vmatprep.subr.bf16.mxu0 0
      %876 = vmatpush2.bf16.msra.mxu0 0
      %877 = vmatprep.subr.bf16.mxu0 0
      %878 = vmatpush2.bf16.msra.mxu0 0
      %879 = vmatprep.subr.bf16.mxu0 0
      %880 = vmatpush2.bf16.msra.mxu0 0
      %881 = vmatprep.subr.bf16.mxu0 0
      %882 = vmatpush2.bf16.msra.mxu0 0
      %883 = vmatprep.subr.bf16.mxu0 0
      %884 = vmatpush2.bf16.msra.mxu0 0
      %885 = vmatprep.subr.bf16.mxu0 0
      %886 = vmatpush2.bf16.msra.mxu0 0
      %887 = vmatprep.mubr.bf16.mxu0 0
      %888 = vmatmul.mubr.bf16.gmra.mxu0 %v853
      %v889 = vpop.f32.mrf.mxu0
      %v890 = vadd.f32 0.0, %v889
      %v891 = vpop.f32.mrf.mxu0
      %v892 = vpop.f32.mrf.mxu0
      %v893 = vpop.f32.mrf.mxu0
      %894 = vdwg.mxu0
      %v895 = vxor.u32 %v890, 2147483648
      %v896 = vmul.f32 %v895, 1.442695
      %v897 = vpow.pop %v896
      %v898 = vadd.f32 %v897, 1.0
      %v899 = vrcp.pop %v898
      %v900 = vmul.f32 1.0, %v899
      %v901 = vlaneseq
      %v902 = vshrl.u32 %v901, 7
      %v903 = vsub.s32 0, %v902
      %v904 = vrot.slane %v900, %v903
      %v905 = vmul.f32 %v809, %v904
      %v906 = vadd.f32 %v905, %v308
      %v907 = vmax.f32 %v906, 0.0
      %v908 = vpack.c.bf16 %v907, %v907
      %vm909 = vcmask 519168
      %910 = vst.msk [vmem:[%s300] sm:$0xf] %vm909, %v908
      %p911 = scmp.lt.s32.totalorder %s19, 1
      %s912 = scalar_select %p911, %s19, 1
      %s913 = smul.addr %s912, 4
      %s914 = scalar_lea.vmem %s8, %s913
      // Predicated region
      $region53: #{mini_eca_restcn_forward.6} parent=51 // pred_check
        %p915 = pneg %p210
      $region54: #{mini_eca_restcn_forward.6} parent=51 // pred_check_branch
        %917 = sbr.rel (%p915) target = $region56
      $region55: #{mini_eca_restcn_forward.6} parent=51 // pred_region
        _
      $region56: #{mini_eca_restcn_forward.6} parent=51 // pred_fallthru
        _
    $region52: #{mini_eca_restcn_forward.6} parent=5 // pred_fallthru
      _
    %p918 = scmp.le.s32.totalorder 2, %s14
    // Predicated region
    $region57: #{mini_eca_restcn_forward.6} parent=5 // pred_check
      %p919 = pneg %p918
    $region58: #{mini_eca_restcn_forward.6} parent=5 // pred_check_branch
      %921 = sbr.rel (%p919) target = $region60
    $region59: #{mini_eca_restcn_forward.6} parent=5 // pred_region
      %s922 = ssub.s32 %s14, 2
      // Predicated region
      $region61: #{mini_eca_restcn_forward.6} parent=59 // pred_check
        %p923 = pneg %p216
      $region62: #{mini_eca_restcn_forward.6} parent=59 // pred_check_branch
        %925 = sbr.rel (%p923) target = $region64
      $region63: #{mini_eca_restcn_forward.6} parent=59 // pred_region
        %p926 = scmp.lt.s32.totalorder %s20, 1
        %s927 = scalar_select %p926, %s20, 1
        %s928 = smul.addr %s927, 4
        %s929 = scalar_lea.vmem %s8, %s928
      $region64: #{mini_eca_restcn_forward.6} parent=59 // pred_fallthru
        _
    $region60: #{mini_eca_restcn_forward.6} parent=5 // pred_fallthru
      _
  $region6: #{mini_eca_restcn_forward.6} parent=0 // loop_footer
    %s18 = sadd.s32 1, %s14
  $region7: #{mini_eca_restcn_forward.6} parent=0 // loop_footer_branch
    %13 = sbr.rel target = $region3
  $region8: #{mini_eca_restcn_forward.6} parent=0 // loop_exit
    _

// kernel: mini_eca_restcn_forward.7
$region0: #{mini_eca_restcn_forward.7}
  #allocation0 [shape = 'u32[]', space=smem, size = 0x4, offset = 0x4, fixed_abs, tag = 'smem constant byte address 0x4 - core index']
  #allocation1 [shape = 'u32[144,128]{1,0:T(1,128)}', space=vmem, size = 0x12000, scoped, tag = 'internal scratch']
  #allocation2 [shape = 'f32[6,64]{1,0:T(8,128)}', space=vmem, size = 0x1000, scoped, tag = 'scratch operand']
  #allocation3 [shape = 'f32[8,64]{1,0:T(8,128)}', space=vmem, size = 0x1000, scoped, tag = 'scratch operand']
  %s0 = inlined_call_operand.vmem [shape: bf16[2,4,64], index: 0, kind: input, shape index: {}]
  %s1 = inlined_call_operand.vmem [shape: bf16[3,64,64], index: 1, kind: input, shape index: {}]
  %s2 = inlined_call_operand.vmem [shape: f32[1,64], index: 2, kind: input, shape index: {}]
  %s3 = inlined_call_operand.vmem [shape: f32[1,64], index: 3, kind: input, shape index: {}]
  %s4 = inlined_call_operand.vmem [shape: bf16[3,64,64], index: 4, kind: input, shape index: {}]
  %s5 = inlined_call_operand.vmem [shape: f32[1,64], index: 5, kind: input, shape index: {}]
  %s6 = inlined_call_operand.vmem [shape: f32[1,64], index: 6, kind: input, shape index: {}]
  %s7 = inlined_call_operand.vmem [shape: bf16[64,64], index: 7, kind: input, shape index: {}]
  %s8 = inlined_call_operand.vmem [shape: bf16[64,64], index: 8, kind: input, shape index: {}]
  %s9 = inlined_call_operand.vmem [shape: f32[1,64], index: 9, kind: input, shape index: {}]
  %s10 = inlined_call_operand.vmem [shape: f32[1,64], index: 10, kind: input, shape index: {}]
  %s11 = inlined_call_operand.vmem [shape: bf16[2,4,64], index: 11, kind: output, shape index: {}]
  %s12 = sld [smem:[#allocation0]]
  $region77: #{mini_eca_restcn_forward.7} parent=0
    _
  %s14 = ssub.s32 1, %s12
  %s15 = scalar_select 0, %s14, %s12
  loop: start=0, step=1, limit=4
  $region2: #{mini_eca_restcn_forward.7} parent=0 // loop_pre_header
    _
  $region3: #{mini_eca_restcn_forward.7} parent=0 // loop_header
    %s17 = sphi 0, %s21
    %p18 = scmp.ge.s32.totalorder %s17, 4
    %s27 = sphi 0, %s29
    %s30 = sphi 0, %s27
    %s31 = sphi 0, %s30
    %s47 = sphi 0, %s31
    %s51 = sphi 0, %s51
    %s53 = sphi 0, %s51
    %s54 = sphi 0, %s53
    %s68 = sphi 0, %s54
    %s72 = sphi 0, %s72
    %s74 = sphi 0, %s72
    %s75 = sphi 0, %s74
    %s89 = sphi 0, %s75
    %s93 = sphi 0, %s93
    %s95 = sphi 0, %s93
    %s96 = sphi 0, %s95
    %s110 = sphi 0, %s96
    %s114 = sphi 0, %s114
    %s116 = sphi 0, %s114
    %s117 = sphi 0, %s116
    %s131 = sphi 0, %s117
    %s135 = sphi 0, %s135
    %s137 = sphi 0, %s135
    %s138 = sphi 0, %s137
    %s152 = sphi 0, %s138
    %s156 = sphi 0, %s156
    %s158 = sphi 0, %s156
    %s159 = sphi 0, %s158
    %s173 = sphi 0, %s159
    %s177 = sphi 0, %s177
    %s179 = sphi 0, %s177
    %s180 = sphi 0, %s179
    %s194 = sphi 0, %s180
    %s198 = sphi 0, %s198
    %s200 = sphi 0, %s198
    %s201 = sphi 0, %s200
    %s215 = sphi 0, %s201
    %s219 = sphi 0, %s219
    %s221 = sphi 0, %s219
    %s222 = sphi 0, %s221
    %s236 = sphi 0, %s222
    %s240 = sphi 0, %s240
    %s242 = sphi 0, %s240
    %s243 = sphi 0, %s242
    %s257 = sphi 0, %s243
    %s263 = sphi 0, %s265
    %s266 = sphi 0, %s263
    %s267 = sphi 0, %s266
    %s283 = sphi 0, %s267
  $region4: #{mini_eca_restcn_forward.7} parent=0 // loop_header_branch
    %20 = sbr.rel (%p18) target = $region8
  $region5: #{mini_eca_restcn_forward.7} parent=0 // loop_body
    %s22 = ssub.s32 %s17, 1
    %s23 = ssub.s32 %s17, 2
    %s24 = sadd.s32 %s17, 1
    %s25 = ssub.s32 %s17, %s24
    %p26 = scmp.eq.s32.totalorder %s25, 0
    %s28 = sadd.s32 %s27, 1
    %s29 = scalar_select %p26, %s27, %s28
    %p32 = pneg %p26
    %p33 = scmp.eq.s32.totalorder %s17, 1
    %p34 = por %p32, %p33
    %p35 = scmp.ne.s32.totalorder %s27, %s30
    %p36 = scmp.eq.s32.totalorder %s17, 0
    %p37 = por %p35, %p36
    %p38 = scmp.ne.s32.totalorder %s27, %s30
    %p39 = scmp.eq.s32.totalorder %s22, 1
    %p40 = por %p38, %p39
    %p41 = scmp.ne.s32.totalorder %s30, %s31
    %p42 = scmp.eq.s32.totalorder %s22, 0
    %p43 = por %p41, %p42
    %p44 = scmp.ne.s32.totalorder %s30, %s31
    %p45 = scmp.eq.s32.totalorder %s23, 1
    %p46 = por %p44, %p45
    %p48 = scmp.ne.s32.totalorder %s31, %s47
    %p49 = scmp.eq.s32.totalorder %s23, 0
    %p50 = por %p48, %p49
    %s52 = sadd.s32 %s51, 1
    %p55 = scmp.eq.s32.totalorder %s17, 1
    %p56 = scmp.ne.s32.totalorder %s51, %s53
    %p57 = scmp.eq.s32.totalorder %s17, 0
    %p58 = por %p56, %p57
    %p59 = scmp.ne.s32.totalorder %s51, %s53
    %p60 = scmp.eq.s32.totalorder %s22, 1
    %p61 = por %p59, %p60
    %p62 = scmp.ne.s32.totalorder %s53, %s54
    %p63 = scmp.eq.s32.totalorder %s22, 0
    %p64 = por %p62, %p63
    %p65 = scmp.ne.s32.totalorder %s53, %s54
    %p66 = scmp.eq.s32.totalorder %s23, 1
    %p67 = por %p65, %p66
    %p69 = scmp.ne.s32.totalorder %s54, %s68
    %p70 = scmp.eq.s32.totalorder %s23, 0
    %p71 = por %p69, %p70
    %s73 = sadd.s32 %s72, 1
    %p76 = scmp.eq.s32.totalorder %s17, 1
    %p77 = scmp.ne.s32.totalorder %s72, %s74
    %p78 = scmp.eq.s32.totalorder %s17, 0
    %p79 = por %p77, %p78
    %p80 = scmp.ne.s32.totalorder %s72, %s74
    %p81 = scmp.eq.s32.totalorder %s22, 1
    %p82 = por %p80, %p81
    %p83 = scmp.ne.s32.totalorder %s74, %s75
    %p84 = scmp.eq.s32.totalorder %s22, 0
    %p85 = por %p83, %p84
    %p86 = scmp.ne.s32.totalorder %s74, %s75
    %p87 = scmp.eq.s32.totalorder %s23, 1
    %p88 = por %p86, %p87
    %p90 = scmp.ne.s32.totalorder %s75, %s89
    %p91 = scmp.eq.s32.totalorder %s23, 0
    %p92 = por %p90, %p91
    %s94 = sadd.s32 %s93, 1
    %p97 = scmp.eq.s32.totalorder %s17, 1
    %p98 = scmp.ne.s32.totalorder %s93, %s95
    %p99 = scmp.eq.s32.totalorder %s17, 0
    %p100 = por %p98, %p99
    %p101 = scmp.ne.s32.totalorder %s93, %s95
    %p102 = scmp.eq.s32.totalorder %s22, 1
    %p103 = por %p101, %p102
    %p104 = scmp.ne.s32.totalorder %s95, %s96
    %p105 = scmp.eq.s32.totalorder %s22, 0
    %p106 = por %p104, %p105
    %p107 = scmp.ne.s32.totalorder %s95, %s96
    %p108 = scmp.eq.s32.totalorder %s23, 1
    %p109 = por %p107, %p108
    %p111 = scmp.ne.s32.totalorder %s96, %s110
    %p112 = scmp.eq.s32.totalorder %s23, 0
    %p113 = por %p111, %p112
    %s115 = sadd.s32 %s114, 1
    %p118 = scmp.eq.s32.totalorder %s17, 1
    %p119 = scmp.ne.s32.totalorder %s114, %s116
    %p120 = scmp.eq.s32.totalorder %s17, 0
    %p121 = por %p119, %p120
    %p122 = scmp.ne.s32.totalorder %s114, %s116
    %p123 = scmp.eq.s32.totalorder %s22, 1
    %p124 = por %p122, %p123
    %p125 = scmp.ne.s32.totalorder %s116, %s117
    %p126 = scmp.eq.s32.totalorder %s22, 0
    %p127 = por %p125, %p126
    %p128 = scmp.ne.s32.totalorder %s116, %s117
    %p129 = scmp.eq.s32.totalorder %s23, 1
    %p130 = por %p128, %p129
    %p132 = scmp.ne.s32.totalorder %s117, %s131
    %p133 = scmp.eq.s32.totalorder %s23, 0
    %p134 = por %p132, %p133
    %s136 = sadd.s32 %s135, 1
    %p139 = scmp.eq.s32.totalorder %s17, 1
    %p140 = scmp.ne.s32.totalorder %s135, %s137
    %p141 = scmp.eq.s32.totalorder %s17, 0
    %p142 = por %p140, %p141
    %p143 = scmp.ne.s32.totalorder %s135, %s137
    %p144 = scmp.eq.s32.totalorder %s22, 1
    %p145 = por %p143, %p144
    %p146 = scmp.ne.s32.totalorder %s137, %s138
    %p147 = scmp.eq.s32.totalorder %s22, 0
    %p148 = por %p146, %p147
    %p149 = scmp.ne.s32.totalorder %s137, %s138
    %p150 = scmp.eq.s32.totalorder %s23, 1
    %p151 = por %p149, %p150
    %p153 = scmp.ne.s32.totalorder %s138, %s152
    %p154 = scmp.eq.s32.totalorder %s23, 0
    %p155 = por %p153, %p154
    %s157 = sadd.s32 %s156, 1
    %p160 = scmp.eq.s32.totalorder %s17, 1
    %p161 = scmp.ne.s32.totalorder %s156, %s158
    %p162 = scmp.eq.s32.totalorder %s17, 0
    %p163 = por %p161, %p162
    %p164 = scmp.ne.s32.totalorder %s156, %s158
    %p165 = scmp.eq.s32.totalorder %s22, 1
    %p166 = por %p164, %p165
    %p167 = scmp.ne.s32.totalorder %s158, %s159
    %p168 = scmp.eq.s32.totalorder %s22, 0
    %p169 = por %p167, %p168
    %p170 = scmp.ne.s32.totalorder %s158, %s159
    %p171 = scmp.eq.s32.totalorder %s23, 1
    %p172 = por %p170, %p171
    %p174 = scmp.ne.s32.totalorder %s159, %s173
    %p175 = scmp.eq.s32.totalorder %s23, 0
    %p176 = por %p174, %p175
    %s178 = sadd.s32 %s177, 1
    %p181 = scmp.eq.s32.totalorder %s17, 1
    %p182 = scmp.ne.s32.totalorder %s177, %s179
    %p183 = scmp.eq.s32.totalorder %s17, 0
    %p184 = por %p182, %p183
    %p185 = scmp.ne.s32.totalorder %s177, %s179
    %p186 = scmp.eq.s32.totalorder %s22, 1
    %p187 = por %p185, %p186
    %p188 = scmp.ne.s32.totalorder %s179, %s180
    %p189 = scmp.eq.s32.totalorder %s22, 0
    %p190 = por %p188, %p189
    %p191 = scmp.ne.s32.totalorder %s179, %s180
    %p192 = scmp.eq.s32.totalorder %s23, 1
    %p193 = por %p191, %p192
    %p195 = scmp.ne.s32.totalorder %s180, %s194
    %p196 = scmp.eq.s32.totalorder %s23, 0
    %p197 = por %p195, %p196
    %s199 = sadd.s32 %s198, 1
    %p202 = scmp.eq.s32.totalorder %s17, 1
    %p203 = scmp.ne.s32.totalorder %s198, %s200
    %p204 = scmp.eq.s32.totalorder %s17, 0
    %p205 = por %p203, %p204
    %p206 = scmp.ne.s32.totalorder %s198, %s200
    %p207 = scmp.eq.s32.totalorder %s22, 1
    %p208 = por %p206, %p207
    %p209 = scmp.ne.s32.totalorder %s200, %s201
    %p210 = scmp.eq.s32.totalorder %s22, 0
    %p211 = por %p209, %p210
    %p212 = scmp.ne.s32.totalorder %s200, %s201
    %p213 = scmp.eq.s32.totalorder %s23, 1
    %p214 = por %p212, %p213
    %p216 = scmp.ne.s32.totalorder %s201, %s215
    %p217 = scmp.eq.s32.totalorder %s23, 0
    %p218 = por %p216, %p217
    %s220 = sadd.s32 %s219, 1
    %p223 = scmp.eq.s32.totalorder %s17, 1
    %p224 = scmp.ne.s32.totalorder %s219, %s221
    %p225 = scmp.eq.s32.totalorder %s17, 0
    %p226 = por %p224, %p225
    %p227 = scmp.ne.s32.totalorder %s219, %s221
    %p228 = scmp.eq.s32.totalorder %s22, 1
    %p229 = por %p227, %p228
    %p230 = scmp.ne.s32.totalorder %s221, %s222
    %p231 = scmp.eq.s32.totalorder %s22, 0
    %p232 = por %p230, %p231
    %p233 = scmp.ne.s32.totalorder %s221, %s222
    %p234 = scmp.eq.s32.totalorder %s23, 1
    %p235 = por %p233, %p234
    %p237 = scmp.ne.s32.totalorder %s222, %s236
    %p238 = scmp.eq.s32.totalorder %s23, 0
    %p239 = por %p237, %p238
    %s241 = sadd.s32 %s240, 1
    %p244 = scmp.eq.s32.totalorder %s17, 1
    %p245 = scmp.ne.s32.totalorder %s240, %s242
    %p246 = scmp.eq.s32.totalorder %s17, 0
    %p247 = por %p245, %p246
    %p248 = scmp.ne.s32.totalorder %s240, %s242
    %p249 = scmp.eq.s32.totalorder %s22, 1
    %p250 = por %p248, %p249
    %p251 = scmp.ne.s32.totalorder %s242, %s243
    %p252 = scmp.eq.s32.totalorder %s22, 0
    %p253 = por %p251, %p252
    %p254 = scmp.ne.s32.totalorder %s242, %s243
    %p255 = scmp.eq.s32.totalorder %s23, 1
    %p256 = por %p254, %p255
    %p258 = scmp.ne.s32.totalorder %s243, %s257
    %p259 = scmp.eq.s32.totalorder %s23, 0
    %p260 = por %p258, %p259
    %s261 = ssub.s32 %s17, %s24
    %p262 = scmp.eq.s32.totalorder %s261, 0
    %s264 = sadd.s32 %s263, 1
    %s265 = scalar_select %p262, %s263, %s264
    %p268 = pneg %p262
    %p269 = scmp.eq.s32.totalorder %s17, 1
    %p270 = por %p268, %p269
    %p271 = scmp.ne.s32.totalorder %s263, %s266
    %p272 = scmp.eq.s32.totalorder %s17, 0
    %p273 = por %p271, %p272
    %p274 = scmp.ne.s32.totalorder %s263, %s266
    %p275 = scmp.eq.s32.totalorder %s22, 1
    %p276 = por %p274, %p275
    %p277 = scmp.ne.s32.totalorder %s266, %s267
    %p278 = scmp.eq.s32.totalorder %s22, 0
    %p279 = por %p277, %p278
    %p280 = scmp.ne.s32.totalorder %s266, %s267
    %p281 = scmp.eq.s32.totalorder %s23, 1
    %p282 = por %p280, %p281
    %p284 = scmp.ne.s32.totalorder %s267, %s283
    %p285 = scmp.eq.s32.totalorder %s23, 0
    %p286 = por %p284, %p285
    %p287 = scmp.le.s32.totalorder 1, %s17
    %p288 = scmp.lt.s32.totalorder %s17, 3
    %p289 = pnand %p287, %p288
    %p290 = pneg %p289
    // Predicated region
    $region9: #{mini_eca_restcn_forward.7} parent=5 // pred_check
      _
    $region10: #{mini_eca_restcn_forward.7} parent=5 // pred_check_branch
      %292 = sbr.rel (%p289) target = $region12
    $region11: #{mini_eca_restcn_forward.7} parent=5 // pred_region
      %s293 = ssub.s32 %s17, 1
      // Predicated region
      $region13: #{mini_eca_restcn_forward.7} parent=11 // pred_check
        %p294 = pneg %p64
      $region14: #{mini_eca_restcn_forward.7} parent=11 // pred_check_branch
        %296 = sbr.rel (%p294) target = $region16
      $region15: #{mini_eca_restcn_forward.7} parent=11 // pred_region
        _
      $region16: #{mini_eca_restcn_forward.7} parent=11 // pred_fallthru
        _
      // Predicated region
      $region17: #{mini_eca_restcn_forward.7} parent=11 // pred_check
        %p297 = pneg %p85
      $region18: #{mini_eca_restcn_forward.7} parent=11 // pred_check_branch
        %299 = sbr.rel (%p297) target = $region20
      $region19: #{mini_eca_restcn_forward.7} parent=11 // pred_region
        _
      $region20: #{mini_eca_restcn_forward.7} parent=11 // pred_fallthru
        _
      // Predicated region
      $region21: #{mini_eca_restcn_forward.7} parent=11 // pred_check
        %p300 = pneg %p106
      $region22: #{mini_eca_restcn_forward.7} parent=11 // pred_check_branch
        %302 = sbr.rel (%p300) target = $region24
      $region23: #{mini_eca_restcn_forward.7} parent=11 // pred_region
        _
      $region24: #{mini_eca_restcn_forward.7} parent=11 // pred_fallthru
        _
      // Predicated region
      $region25: #{mini_eca_restcn_forward.7} parent=11 // pred_check
        %p303 = pneg %p127
      $region26: #{mini_eca_restcn_forward.7} parent=11 // pred_check_branch
        %305 = sbr.rel (%p303) target = $region28
      $region27: #{mini_eca_restcn_forward.7} parent=11 // pred_region
        _
      $region28: #{mini_eca_restcn_forward.7} parent=11 // pred_fallthru
        _
      // Predicated region
      $region29: #{mini_eca_restcn_forward.7} parent=11 // pred_check
        %p306 = pneg %p148
      $region30: #{mini_eca_restcn_forward.7} parent=11 // pred_check_branch
        %308 = sbr.rel (%p306) target = $region32
      $region31: #{mini_eca_restcn_forward.7} parent=11 // pred_region
        _
      $region32: #{mini_eca_restcn_forward.7} parent=11 // pred_fallthru
        _
      // Predicated region
      $region33: #{mini_eca_restcn_forward.7} parent=11 // pred_check
        %p309 = pneg %p169
      $region34: #{mini_eca_restcn_forward.7} parent=11 // pred_check_branch
        %311 = sbr.rel (%p309) target = $region36
      $region35: #{mini_eca_restcn_forward.7} parent=11 // pred_region
        _
      $region36: #{mini_eca_restcn_forward.7} parent=11 // pred_fallthru
        _
      // Predicated region
      $region37: #{mini_eca_restcn_forward.7} parent=11 // pred_check
        %p312 = pneg %p190
      $region38: #{mini_eca_restcn_forward.7} parent=11 // pred_check_branch
        %314 = sbr.rel (%p312) target = $region40
      $region39: #{mini_eca_restcn_forward.7} parent=11 // pred_region
        _
      $region40: #{mini_eca_restcn_forward.7} parent=11 // pred_fallthru
        _
      // Predicated region
      $region41: #{mini_eca_restcn_forward.7} parent=11 // pred_check
        %p315 = pneg %p211
      $region42: #{mini_eca_restcn_forward.7} parent=11 // pred_check_branch
        %317 = sbr.rel (%p315) target = $region44
      $region43: #{mini_eca_restcn_forward.7} parent=11 // pred_region
        _
      $region44: #{mini_eca_restcn_forward.7} parent=11 // pred_fallthru
        _
      // Predicated region
      $region45: #{mini_eca_restcn_forward.7} parent=11 // pred_check
        %p318 = pneg %p232
      $region46: #{mini_eca_restcn_forward.7} parent=11 // pred_check_branch
        %320 = sbr.rel (%p318) target = $region48
      $region47: #{mini_eca_restcn_forward.7} parent=11 // pred_region
        _
      $region48: #{mini_eca_restcn_forward.7} parent=11 // pred_fallthru
        _
      // Predicated region
      $region49: #{mini_eca_restcn_forward.7} parent=11 // pred_check
        %p321 = pneg %p253
      $region50: #{mini_eca_restcn_forward.7} parent=11 // pred_check_branch
        %323 = sbr.rel (%p321) target = $region52
      $region51: #{mini_eca_restcn_forward.7} parent=11 // pred_region
        _
      $region52: #{mini_eca_restcn_forward.7} parent=11 // pred_fallthru
        _
    $region12: #{mini_eca_restcn_forward.7} parent=5 // pred_fallthru
      _
    %p324 = scmp.lt.s32.totalorder %s17, 2
    // Predicated region
    $region53: #{mini_eca_restcn_forward.7} parent=5 // pred_check
      %p325 = pneg %p324
    $region54: #{mini_eca_restcn_forward.7} parent=5 // pred_check_branch
      %327 = sbr.rel (%p325) target = $region56
    $region55: #{mini_eca_restcn_forward.7} parent=5 // pred_region
      // Predicated region
      $region57: #{mini_eca_restcn_forward.7} parent=55 // pred_check
        %p328 = pneg %p37
      $region58: #{mini_eca_restcn_forward.7} parent=55 // pred_check_branch
        %330 = sbr.rel (%p328) target = $region60
      $region59: #{mini_eca_restcn_forward.7} parent=55 // pred_region
        %p331 = scmp.lt.s32.totalorder %s17, 1
        %s332 = scalar_select %p331, %s17, 1
        %s333 = smul.addr %s332, 2
        %s334 = scalar_lea.vmem %s0, %s333
      $region60: #{mini_eca_restcn_forward.7} parent=55 // pred_fallthru
        _
    $region56: #{mini_eca_restcn_forward.7} parent=5 // pred_fallthru
      _
    %p335 = scmp.le.s32.totalorder 1, %s17
    %p336 = scmp.lt.s32.totalorder %s17, 3
    %p337 = pnand %p335, %p336
    %p338 = pneg %p337
    // Predicated region
    $region61: #{mini_eca_restcn_forward.7} parent=5 // pred_check
      _
    $region62: #{mini_eca_restcn_forward.7} parent=5 // pred_check_branch
      %340 = sbr.rel (%p337) target = $region64
    $region63: #{mini_eca_restcn_forward.7} parent=5 // pred_region
      %s341 = ssub.s32 %s17, 1
      %p342 = scmp.lt.s32.totalorder %s22, 1
      %s343 = scalar_select %p342, %s22, 1
      %s344 = smul.addr %s343, 2
      %s345 = scalar_lea.vmem %s0, %s344
      %p346 = pneg %p43
      %p347 = pneg %p40
      %p348 = pneg %p64
      %p349 = pneg %p61
      %p350 = pneg %p85
      %p351 = pneg %p82
      %p352 = pneg %p106
      %p353 = pneg %p103
      %p354 = pneg %p127
      %p355 = pneg %p124
      %p356 = pneg %p148
      %p357 = pneg %p145
      %p358 = pneg %p169
      %p359 = pneg %p166
      %p360 = pneg %p190
      %p361 = pneg %p187
      %p362 = pneg %p211
      %p363 = pneg %p208
      %p364 = pneg %p232
      %p365 = pneg %p229
      %p366 = pneg %p253
      %p367 = pneg %p250
      %p368 = pneg %p279
      %p369 = pneg %p276
      %p370 = scmp.lt.s32.totalorder %s22, 1
      %s371 = scalar_select %p370, %s22, 1
      %s372 = smul.addr %s371, 2
      %s373 = scalar_lea.vmem %s11, %s372
      %p374 = scmp.lt.s32.totalorder %s22, 1
      %s375 = scalar_select %p374, %s22, 1
      %s376 = smul.addr %s375, 2
      %s377 = scalar_lea.vmem %s0, %s376
      %p378 = scmp.lt.s32.totalorder %s22, 1
      %s379 = scalar_select %p378, %s22, 1
      %s380 = smul.addr %s379, 2
      %s381 = scalar_lea.vmem %s11, %s380
      %vm383 = vcmask 516096
      %384 = vst.msk [vmem:[#allocation2] sm:$0x1] %vm383, 0.0
      %385 = vst.msk [vmem:[#allocation2 + $0x5] sm:$0x1] %vm383, 0.0
      %vm386 = vcmask 517120
      %387 = vst.msk [vmem:[#allocation3] sm:$0x3] %vm386, 0.0
      %388 = vst.msk [vmem:[#allocation3 + $0x6] sm:$0x3] %vm386, 0.0
      %v389 = vld [vmem:[%s377] sm:$0x3]
      %v390 = vunpack.c.l.bf16 %v389
      %vm391 = vcmask 519168
      %392 = vst.msk [vmem:[#allocation2 + $0x1] sm:$0xf] %vm391, %v390
      %s393 = scalar_lea.vmem %s1, 32
      %v394 = vld [vmem:[%s393] sm:$0xf]
      %v395 = vld [vmem:[%s393 + $0x4] sm:$0xf]
      %v396 = vld [vmem:[%s393 + $0x8] sm:$0xf]
      %v397 = vld [vmem:[%s393 + $0xc] sm:$0xf]
      %v398 = vld [vmem:[%s393 + $0x10] sm:$0xf]
      %v399 = vld [vmem:[%s393 + $0x14] sm:$0xf]
      %v400 = vld [vmem:[%s393 + $0x18] sm:$0xf]
      %v401 = vld [vmem:[%s393 + $0x1c] sm:$0xf]
      %v402 = vld [vmem:[#allocation2] sm:$0xf]
      %v403 = vpack.c.bf16 %v402, %v402
      %v404 = vld [vmem:[%s1] sm:$0xf]
      %v405 = vld [vmem:[%s1 + $0x4] sm:$0xf]
      %v406 = vld [vmem:[%s1 + $0x8] sm:$0xf]
      %v407 = vld [vmem:[%s1 + $0xc] sm:$0xf]
      %v408 = vld [vmem:[%s1 + $0x10] sm:$0xf]
      %v409 = vld [vmem:[%s1 + $0x14] sm:$0xf]
      %v410 = vld [vmem:[%s1 + $0x18] sm:$0xf]
      %v411 = vld [vmem:[%s1 + $0x1c] sm:$0xf]
      %v420 = vunpack.c.l.b16 %v404
      %v421 = vunpack.c.l.b16 %v405
      %v422 = vunpack.c.l.b16 %v406
      %v423 = vunpack.c.l.b16 %v407
      %v424 = vunpack.c.l.b16 %v408
      %v425 = vunpack.c.l.b16 %v409
      %v426 = vunpack.c.l.b16 %v410
      %v427 = vunpack.c.l.b16 %v411
      %v428 = vpack.c.b16 %v421, %v420
      %v429 = vpack.c.b16 %v423, %v422
      %v430 = vpack.c.b16 %v425, %v424
      %v431 = vpack.c.b16 %v427, %v426
      %vm436 = vcmask 523264
      %v438 = vsel %vm436, %v403, 0
      %440 = vmatprep.subr.bf16.mxu0 0
      %441 = vmatpush1.bf16.msra.mxu0 0
      %442 = vmatprep.subr.bf16.mxu0 0
      %443 = vmatpush1.bf16.msra.mxu0 0
      %444 = vmatprep.subr.bf16.mxu0 0
      %445 = vmatpush1.bf16.msra.mxu0 0
      %446 = vmatprep.subr.bf16.mxu0 0
      %447 = vmatpush1.bf16.msra.mxu0 0
      %448 = vmatprep.subr.bf16.mxu0 0
      %449 = vmatpush1.bf16.msra.mxu0 %v431
      %450 = vmatprep.subr.bf16.mxu0 0
      %451 = vmatpush1.bf16.msra.mxu0 %v430
      %452 = vmatprep.subr.bf16.mxu0 0
      %453 = vmatpush1.bf16.msra.mxu0 %v429
      %454 = vmatprep.subr.bf16.mxu0 0
      %455 = vmatpush1.bf16.msra.mxu0 %v428
      %456 = vmatprep.subr.bf16.mxu0 0
      %457 = vmatpush2.bf16.msra.mxu0 0
      %458 = vmatprep.subr.bf16.mxu0 0
      %459 = vmatpush2.bf16.msra.mxu0 0
      %460 = vmatprep.subr.bf16.mxu0 0
      %461 = vmatpush2.bf16.msra.mxu0 0
      %462 = vmatprep.subr.bf16.mxu0 0
      %463 = vmatpush2.bf16.msra.mxu0 0
      %464 = vmatprep.subr.bf16.mxu0 0
      %465 = vmatpush2.bf16.msra.mxu0 0
      %466 = vmatprep.subr.bf16.mxu0 0
      %467 = vmatpush2.bf16.msra.mxu0 0
      %468 = vmatprep.subr.bf16.mxu0 0
      %469 = vmatpush2.bf16.msra.mxu0 0
      %470 = vmatprep.subr.bf16.mxu0 0
      %471 = vmatpush2.bf16.msra.mxu0 0
      %472 = vmatprep.mubr.bf16.mxu0 0
      %473 = vmatmul.mubr.bf16.gmra.mxu0 %v438
      %v474 = vpop.f32.mrf.mxu0
      %v475 = vadd.f32 0.0, %v474
      %v476 = vpop.f32.mrf.mxu0
      %v477 = vpop.f32.mrf.mxu0
      %v478 = vpop.f32.mrf.mxu0
      %479 = vdwg.mxu0
      %v488 = vunpack.c.l.b16 %v394
      %v489 = vunpack.c.l.b16 %v395
      %v490 = vunpack.c.l.b16 %v396
      %v491 = vunpack.c.l.b16 %v397
      %v492 = vunpack.c.l.b16 %v398
      %v493 = vunpack.c.l.b16 %v399
      %v494 = vunpack.c.l.b16 %v400
      %v495 = vunpack.c.l.b16 %v401
      %v496 = vpack.c.b16 %v489, %v488
      %v497 = vpack.c.b16 %v491, %v490
      %v498 = vpack.c.b16 %v493, %v492
      %v499 = vpack.c.b16 %v495, %v494
      %v505 = vsel %vm436, %v389, 0
      %507 = vmatprep.subr.bf16.mxu0 0
      %508 = vmatpush1.bf16.msra.mxu0 0
      %509 = vmatprep.subr.bf16.mxu0 0
      %510 = vmatpush1.bf16.msra.mxu0 0
      %511 = vmatprep.subr.bf16.mxu0 0
      %512 = vmatpush1.bf16.msra.mxu0 0
      %513 = vmatprep.subr.bf16.mxu0 0
      %514 = vmatpush1.bf16.msra.mxu0 0
      %515 = vmatprep.subr.bf16.mxu0 0
      %516 = vmatpush1.bf16.msra.mxu0 %v499
      %517 = vmatprep.subr.bf16.mxu0 0
      %518 = vmatpush1.bf16.msra.mxu0 %v498
      %519 = vmatprep.subr.bf16.mxu0 0
      %520 = vmatpush1.bf16.msra.mxu0 %v497
      %521 = vmatprep.subr.bf16.mxu0 0
      %522 = vmatpush1.bf16.msra.mxu0 %v496
      %523 = vmatprep.subr.bf16.mxu0 0
      %524 = vmatpush2.bf16.msra.mxu0 0
      %525 = vmatprep.subr.bf16.mxu0 0
      %526 = vmatpush2.bf16.msra.mxu0 0
      %527 = vmatprep.subr.bf16.mxu0 0
      %528 = vmatpush2.bf16.msra.mxu0 0
      %529 = vmatprep.subr.bf16.mxu0 0
      %530 = vmatpush2.bf16.msra.mxu0 0
      %531 = vmatprep.subr.bf16.mxu0 0
      %532 = vmatpush2.bf16.msra.mxu0 0
      %533 = vmatprep.subr.bf16.mxu0 0
      %534 = vmatpush2.bf16.msra.mxu0 0
      %535 = vmatprep.subr.bf16.mxu0 0
      %536 = vmatpush2.bf16.msra.mxu0 0
      %537 = vmatprep.subr.bf16.mxu0 0
      %538 = vmatpush2.bf16.msra.mxu0 0
      %539 = vmatprep.mubr.bf16.mxu0 0
      %540 = vmatmul.mubr.bf16.gmra.mxu0 %v505
      %v541 = vpop.f32.mrf.mxu0
      %v542 = vadd.f32 %v475, %v541
      %v543 = vpop.f32.mrf.mxu0
      %v544 = vpop.f32.mrf.mxu0
      %v545 = vpop.f32.mrf.mxu0
      %546 = vdwg.mxu0
      %v547 = vld [vmem:[#allocation2 + $0x2] sm:$0xf]
      %v548 = vpack.c.bf16 %v547, %v547
      %s549 = scalar_lea.vmem %s1, 64
      %v550 = vld [vmem:[%s549] sm:$0xf]
      %v551 = vld [vmem:[%s549 + $0x4] sm:$0xf]
      %v552 = vld [vmem:[%s549 + $0x8] sm:$0xf]
      %v553 = vld [vmem:[%s549 + $0xc] sm:$0xf]
      %v554 = vld [vmem:[%s549 + $0x10] sm:$0xf]
      %v555 = vld [vmem:[%s549 + $0x14] sm:$0xf]
      %v556 = vld [vmem:[%s549 + $0x18] sm:$0xf]
      %v557 = vld [vmem:[%s549 + $0x1c] sm:$0xf]
      %v566 = vunpack.c.l.b16 %v550
      %v567 = vunpack.c.l.b16 %v551
      %v568 = vunpack.c.l.b16 %v552
      %v569 = vunpack.c.l.b16 %v553
      %v570 = vunpack.c.l.b16 %v554
      %v571 = vunpack.c.l.b16 %v555
      %v572 = vunpack.c.l.b16 %v556
      %v573 = vunpack.c.l.b16 %v557
      %v574 = vpack.c.b16 %v567, %v566
      %v575 = vpack.c.b16 %v569, %v568
      %v576 = vpack.c.b16 %v571, %v570
      %v577 = vpack.c.b16 %v573, %v572
      %v583 = vsel %vm436, %v548, 0
      %585 = vmatprep.subr.bf16.mxu0 0
      %586 = vmatpush1.bf16.msra.mxu0 0
      %587 = vmatprep.subr.bf16.mxu0 0
      %588 = vmatpush1.bf16.msra.mxu0 0
      %589 = vmatprep.subr.bf16.mxu0 0
      %590 = vmatpush1.bf16.msra.mxu0 0
      %591 = vmatprep.subr.bf16.mxu0 0
      %592 = vmatpush1.bf16.msra.mxu0 0
      %593 = vmatprep.subr.bf16.mxu0 0
      %594 = vmatpush1.bf16.msra.mxu0 %v577
      %595 = vmatprep.subr.bf16.mxu0 0
      %596 = vmatpush1.bf16.msra.mxu0 %v576
      %597 = vmatprep.subr.bf16.mxu0 0
      %598 = vmatpush1.bf16.msra.mxu0 %v575
      %599 = vmatprep.subr.bf16.mxu0 0
      %600 = vmatpush1.bf16.msra.mxu0 %v574
      %601 = vmatprep.subr.bf16.mxu0 0
      %602 = vmatpush2.bf16.msra.mxu0 0
      %603 = vmatprep.subr.bf16.mxu0 0
      %604 = vmatpush2.bf16.msra.mxu0 0
      %605 = vmatprep.subr.bf16.mxu0 0
      %606 = vmatpush2.bf16.msra.mxu0 0
      %607 = vmatprep.subr.bf16.mxu0 0
      %608 = vmatpush2.bf16.msra.mxu0 0
      %609 = vmatprep.subr.bf16.mxu0 0
      %610 = vmatpush2.bf16.msra.mxu0 0
      %611 = vmatprep.subr.bf16.mxu0 0
      %612 = vmatpush2.bf16.msra.mxu0 0
      %613 = vmatprep.subr.bf16.mxu0 0
      %614 = vmatpush2.bf16.msra.mxu0 0
      %615 = vmatprep.subr.bf16.mxu0 0
      %616 = vmatpush2.bf16.msra.mxu0 0
      %617 = vmatprep.mubr.bf16.mxu0 0
      %618 = vmatmul.mubr.bf16.gmra.mxu0 %v583
      %v619 = vpop.f32.mrf.mxu0
      %v620 = vadd.f32 0.0, %v619
      %v621 = vpop.f32.mrf.mxu0
      %v622 = vpop.f32.mrf.mxu0
      %v623 = vpop.f32.mrf.mxu0
      %624 = vdwg.mxu0
      %v625 = vadd.f32 %v542, %v620
      %v626 = vld [vmem:[%s2] sm:$0x1]
      %v628 = vlaneseq
      %v629 = vshrl.u32 %v628, 7
      %v630 = vsub.s32 0, %v629
      %v631 = vrot.slane %v626, %v630
      %v633 = vmul.f32 %v625, %v631
      %v634 = vld [vmem:[%s3] sm:$0x1]
      %v636 = vlaneseq
      %v637 = vshrl.u32 %v636, 7
      %v638 = vsub.s32 0, %v637
      %v639 = vrot.slane %v634, %v638
      %v641 = vadd.f32 %v633, %v639
      %v642 = vmax.f32 %v641, 0.0
      %643 = vst.msk [vmem:[#allocation3 + $0x2] sm:$0xf] %vm391, %v642
      %v644 = vpack.c.bf16 %v642, %v642
      %s645 = scalar_lea.vmem %s4, 32
      %v646 = vld [vmem:[%s645] sm:$0xf]
      %v647 = vld [vmem:[%s645 + $0x4] sm:$0xf]
      %v648 = vld [vmem:[%s645 + $0x8] sm:$0xf]
      %v649 = vld [vmem:[%s645 + $0xc] sm:$0xf]
      %v650 = vld [vmem:[%s645 + $0x10] sm:$0xf]
      %v651 = vld [vmem:[%s645 + $0x14] sm:$0xf]
      %v652 = vld [vmem:[%s645 + $0x18] sm:$0xf]
      %v653 = vld [vmem:[%s645 + $0x1c] sm:$0xf]
      %v654 = vld [vmem:[#allocation3] sm:$0xf]
      %v655 = vpack.c.bf16 %v654, %v654
      %v656 = vld [vmem:[%s4] sm:$0xf]
      %v657 = vld [vmem:[%s4 + $0x4] sm:$0xf]
      %v658 = vld [vmem:[%s4 + $0x8] sm:$0xf]
      %v659 = vld [vmem:[%s4 + $0xc] sm:$0xf]
      %v660 = vld [vmem:[%s4 + $0x10] sm:$0xf]
      %v661 = vld [vmem:[%s4 + $0x14] sm:$0xf]
      %v662 = vld [vmem:[%s4 + $0x18] sm:$0xf]
      %v663 = vld [vmem:[%s4 + $0x1c] sm:$0xf]
      %v672 = vunpack.c.l.b16 %v656
      %v673 = vunpack.c.l.b16 %v657
      %v674 = vunpack.c.l.b16 %v658
      %v675 = vunpack.c.l.b16 %v659
      %v676 = vunpack.c.l.b16 %v660
      %v677 = vunpack.c.l.b16 %v661
      %v678 = vunpack.c.l.b16 %v662
      %v679 = vunpack.c.l.b16 %v663
      %v680 = vpack.c.b16 %v673, %v672
      %v681 = vpack.c.b16 %v675, %v674
      %v682 = vpack.c.b16 %v677, %v676
      %v683 = vpack.c.b16 %v679, %v678
      %v689 = vsel %vm436, %v655, 0
      %691 = vmatprep.subr.bf16.mxu0 0
      %692 = vmatpush1.bf16.msra.mxu0 0
      %693 = vmatprep.subr.bf16.mxu0 0
      %694 = vmatpush1.bf16.msra.mxu0 0
      %695 = vmatprep.subr.bf16.mxu0 0
      %696 = vmatpush1.bf16.msra.mxu0 0
      %697 = vmatprep.subr.bf16.mxu0 0
      %698 = vmatpush1.bf16.msra.mxu0 0
      %699 = vmatprep.subr.bf16.mxu0 0
      %700 = vmatpush1.bf16.msra.mxu0 %v683
      %701 = vmatprep.subr.bf16.mxu0 0
      %702 = vmatpush1.bf16.msra.mxu0 %v682
      %703 = vmatprep.subr.bf16.mxu0 0
      %704 = vmatpush1.bf16.msra.mxu0 %v681
      %705 = vmatprep.subr.bf16.mxu0 0
      %706 = vmatpush1.bf16.msra.mxu0 %v680
      %707 = vmatprep.subr.bf16.mxu0 0
      %708 = vmatpush2.bf16.msra.mxu0 0
      %709 = vmatprep.subr.bf16.mxu0 0
      %710 = vmatpush2.bf16.msra.mxu0 0
      %711 = vmatprep.subr.bf16.mxu0 0
      %712 = vmatpush2.bf16.msra.mxu0 0
      %713 = vmatprep.subr.bf16.mxu0 0
      %714 = vmatpush2.bf16.msra.mxu0 0
      %715 = vmatprep.subr.bf16.mxu0 0
      %716 = vmatpush2.bf16.msra.mxu0 0
      %717 = vmatprep.subr.bf16.mxu0 0
      %718 = vmatpush2.bf16.msra.mxu0 0
      %719 = vmatprep.subr.bf16.mxu0 0
      %720 = vmatpush2.bf16.msra.mxu0 0
      %721 = vmatprep.subr.bf16.mxu0 0
      %722 = vmatpush2.bf16.msra.mxu0 0
      %723 = vmatprep.mubr.bf16.mxu0 0
      %724 = vmatmul.mubr.bf16.gmra.mxu0 %v689
      %v725 = vpop.f32.mrf.mxu0
      %v726 = vadd.f32 0.0, %v725
      %v727 = vpop.f32.mrf.mxu0
      %v728 = vpop.f32.mrf.mxu0
      %v729 = vpop.f32.mrf.mxu0
      %730 = vdwg.mxu0
      %v739 = vunpack.c.l.b16 %v646
      %v740 = vunpack.c.l.b16 %v647
      %v741 = vunpack.c.l.b16 %v648
      %v742 = vunpack.c.l.b16 %v649
      %v743 = vunpack.c.l.b16 %v650
      %v744 = vunpack.c.l.b16 %v651
      %v745 = vunpack.c.l.b16 %v652
      %v746 = vunpack.c.l.b16 %v653
      %v747 = vpack.c.b16 %v740, %v739
      %v748 = vpack.c.b16 %v742, %v741
      %v749 = vpack.c.b16 %v744, %v743
      %v750 = vpack.c.b16 %v746, %v745
      %v756 = vsel %vm436, %v644, 0
      %758 = vmatprep.subr.bf16.mxu0 0
      %759 = vmatpush1.bf16.msra.mxu0 0
      %760 = vmatprep.subr.bf16.mxu0 0
      %761 = vmatpush1.bf16.msra.mxu0 0
      %762 = vmatprep.subr.bf16.mxu0 0
      %763 = vmatpush1.bf16.msra.mxu0 0
      %764 = vmatprep.subr.bf16.mxu0 0
      %765 = vmatpush1.bf16.msra.mxu0 0
      %766 = vmatprep.subr.bf16.mxu0 0
      %767 = vmatpush1.bf16.msra.mxu0 %v750
      %768 = vmatprep.subr.bf16.mxu0 0
      %769 = vmatpush1.bf16.msra.mxu0 %v749
      %770 = vmatprep.subr.bf16.mxu0 0
      %771 = vmatpush1.bf16.msra.mxu0 %v748
      %772 = vmatprep.subr.bf16.mxu0 0
      %773 = vmatpush1.bf16.msra.mxu0 %v747
      %774 = vmatprep.subr.bf16.mxu0 0
      %775 = vmatpush2.bf16.msra.mxu0 0
      %776 = vmatprep.subr.bf16.mxu0 0
      %777 = vmatpush2.bf16.msra.mxu0 0
      %778 = vmatprep.subr.bf16.mxu0 0
      %779 = vmatpush2.bf16.msra.mxu0 0
      %780 = vmatprep.subr.bf16.mxu0 0
      %781 = vmatpush2.bf16.msra.mxu0 0
      %782 = vmatprep.subr.bf16.mxu0 0
      %783 = vmatpush2.bf16.msra.mxu0 0
      %784 = vmatprep.subr.bf16.mxu0 0
      %785 = vmatpush2.bf16.msra.mxu0 0
      %786 = vmatprep.subr.bf16.mxu0 0
      %787 = vmatpush2.bf16.msra.mxu0 0
      %788 = vmatprep.subr.bf16.mxu0 0
      %789 = vmatpush2.bf16.msra.mxu0 0
      %790 = vmatprep.mubr.bf16.mxu0 0
      %791 = vmatmul.mubr.bf16.gmra.mxu0 %v756
      %v792 = vpop.f32.mrf.mxu0
      %v793 = vadd.f32 %v726, %v792
      %v794 = vpop.f32.mrf.mxu0
      %v795 = vpop.f32.mrf.mxu0
      %v796 = vpop.f32.mrf.mxu0
      %797 = vdwg.mxu0
      %v798 = vld [vmem:[#allocation3 + $0x4] sm:$0xf]
      %v799 = vpack.c.bf16 %v798, %v798
      %s800 = scalar_lea.vmem %s4, 64
      %v801 = vld [vmem:[%s800] sm:$0xf]
      %v802 = vld [vmem:[%s800 + $0x4] sm:$0xf]
      %v803 = vld [vmem:[%s800 + $0x8] sm:$0xf]
      %v804 = vld [vmem:[%s800 + $0xc] sm:$0xf]
      %v805 = vld [vmem:[%s800 + $0x10] sm:$0xf]
      %v806 = vld [vmem:[%s800 + $0x14] sm:$0xf]
      %v807 = vld [vmem:[%s800 + $0x18] sm:$0xf]
      %v808 = vld [vmem:[%s800 + $0x1c] sm:$0xf]
      %v817 = vunpack.c.l.b16 %v801
      %v818 = vunpack.c.l.b16 %v802
      %v819 = vunpack.c.l.b16 %v803
      %v820 = vunpack.c.l.b16 %v804
      %v821 = vunpack.c.l.b16 %v805
      %v822 = vunpack.c.l.b16 %v806
      %v823 = vunpack.c.l.b16 %v807
      %v824 = vunpack.c.l.b16 %v808
      %v825 = vpack.c.b16 %v818, %v817
      %v826 = vpack.c.b16 %v820, %v819
      %v827 = vpack.c.b16 %v822, %v821
      %v828 = vpack.c.b16 %v824, %v823
      %v834 = vsel %vm436, %v799, 0
      %836 = vmatprep.subr.bf16.mxu0 0
      %837 = vmatpush1.bf16.msra.mxu0 0
      %838 = vmatprep.subr.bf16.mxu0 0
      %839 = vmatpush1.bf16.msra.mxu0 0
      %840 = vmatprep.subr.bf16.mxu0 0
      %841 = vmatpush1.bf16.msra.mxu0 0
      %842 = vmatprep.subr.bf16.mxu0 0
      %843 = vmatpush1.bf16.msra.mxu0 0
      %844 = vmatprep.subr.bf16.mxu0 0
      %845 = vmatpush1.bf16.msra.mxu0 %v828
      %846 = vmatprep.subr.bf16.mxu0 0
      %847 = vmatpush1.bf16.msra.mxu0 %v827
      %848 = vmatprep.subr.bf16.mxu0 0
      %849 = vmatpush1.bf16.msra.mxu0 %v826
      %850 = vmatprep.subr.bf16.mxu0 0
      %851 = vmatpush1.bf16.msra.mxu0 %v825
      %852 = vmatprep.subr.bf16.mxu0 0
      %853 = vmatpush2.bf16.msra.mxu0 0
      %854 = vmatprep.subr.bf16.mxu0 0
      %855 = vmatpush2.bf16.msra.mxu0 0
      %856 = vmatprep.subr.bf16.mxu0 0
      %857 = vmatpush2.bf16.msra.mxu0 0
      %858 = vmatprep.subr.bf16.mxu0 0
      %859 = vmatpush2.bf16.msra.mxu0 0
      %860 = vmatprep.subr.bf16.mxu0 0
      %861 = vmatpush2.bf16.msra.mxu0 0
      %862 = vmatprep.subr.bf16.mxu0 0
      %863 = vmatpush2.bf16.msra.mxu0 0
      %864 = vmatprep.subr.bf16.mxu0 0
      %865 = vmatpush2.bf16.msra.mxu0 0
      %866 = vmatprep.subr.bf16.mxu0 0
      %867 = vmatpush2.bf16.msra.mxu0 0
      %868 = vmatprep.mubr.bf16.mxu0 0
      %869 = vmatmul.mubr.bf16.gmra.mxu0 %v834
      %v870 = vpop.f32.mrf.mxu0
      %v871 = vadd.f32 0.0, %v870
      %v872 = vpop.f32.mrf.mxu0
      %v873 = vpop.f32.mrf.mxu0
      %v874 = vpop.f32.mrf.mxu0
      %875 = vdwg.mxu0
      %v876 = vadd.f32 %v793, %v871
      %v877 = vld [vmem:[%s5] sm:$0x1]
      %v879 = vlaneseq
      %v880 = vshrl.u32 %v879, 7
      %v881 = vsub.s32 0, %v880
      %v882 = vrot.slane %v877, %v881
      %v884 = vmul.f32 %v876, %v882
      %v885 = vld [vmem:[%s6] sm:$0x1]
      %v887 = vlaneseq
      %v888 = vshrl.u32 %v887, 7
      %v889 = vsub.s32 0, %v888
      %v890 = vrot.slane %v885, %v889
      %v892 = vadd.f32 %v884, %v890
      %v893 = vsel %vm391, %v892, 0.0
      %v894 = vrot.slane %v893, 4
      %v895 = vadd.f32 %v893, %v894
      %v896 = vrot.slane %v895, 2
      %v897 = vadd.f32 %v895, %v896
      %v898 = vrot.slane %v897, 1
      %v899 = vadd.f32 %v897, %v898
      %v900 = vrcp.pop 4.0
      %v901 = vmul.f32 %v899, %v900
      %v902 = vpack.c.bf16 %v901, %v901
      %v903 = vld [vmem:[%s7] sm:$0xf]
      %v904 = vld [vmem:[%s7 + $0x4] sm:$0xf]
      %v905 = vld [vmem:[%s7 + $0x8] sm:$0xf]
      %v906 = vld [vmem:[%s7 + $0xc] sm:$0xf]
      %v907 = vld [vmem:[%s7 + $0x10] sm:$0xf]
      %v908 = vld [vmem:[%s7 + $0x14] sm:$0xf]
      %v909 = vld [vmem:[%s7 + $0x18] sm:$0xf]
      %v910 = vld [vmem:[%s7 + $0x1c] sm:$0xf]
      %v919 = vunpack.c.l.b16 %v903
      %v920 = vunpack.c.l.b16 %v904
      %v921 = vunpack.c.l.b16 %v905
      %v922 = vunpack.c.l.b16 %v906
      %v923 = vunpack.c.l.b16 %v907
      %v924 = vunpack.c.l.b16 %v908
      %v925 = vunpack.c.l.b16 %v909
      %v926 = vunpack.c.l.b16 %v910
      %v927 = vpack.c.b16 %v920, %v919
      %v928 = vpack.c.b16 %v922, %v921
      %v929 = vpack.c.b16 %v924, %v923
      %v930 = vpack.c.b16 %v926, %v925
      %v936 = vsel %vm436, %v902, 0
      %938 = vmatprep.subr.bf16.mxu0 0
      %939 = vmatpush1.bf16.msra.mxu0 0
      %940 = vmatprep.subr.bf16.mxu0 0
      %941 = vmatpush1.bf16.msra.mxu0 0
      %942 = vmatprep.subr.bf16.mxu0 0
      %943 = vmatpush1.bf16.msra.mxu0 0
      %944 = vmatprep.subr.bf16.mxu0 0
      %945 = vmatpush1.bf16.msra.mxu0 0
      %946 = vmatprep.subr.bf16.mxu0 0
      %947 = vmatpush1.bf16.msra.mxu0 %v930
      %948 = vmatprep.subr.bf16.mxu0 0
      %949 = vmatpush1.bf16.msra.mxu0 %v929
      %950 = vmatprep.subr.bf16.mxu0 0
      %951 = vmatpush1.bf16.msra.mxu0 %v928
      %952 = vmatprep.subr.bf16.mxu0 0
      %953 = vmatpush1.bf16.msra.mxu0 %v927
      %954 = vmatprep.subr.bf16.mxu0 0
      %955 = vmatpush2.bf16.msra.mxu0 0
      %956 = vmatprep.subr.bf16.mxu0 0
      %957 = vmatpush2.bf16.msra.mxu0 0
      %958 = vmatprep.subr.bf16.mxu0 0
      %959 = vmatpush2.bf16.msra.mxu0 0
      %960 = vmatprep.subr.bf16.mxu0 0
      %961 = vmatpush2.bf16.msra.mxu0 0
      %962 = vmatprep.subr.bf16.mxu0 0
      %963 = vmatpush2.bf16.msra.mxu0 0
      %964 = vmatprep.subr.bf16.mxu0 0
      %965 = vmatpush2.bf16.msra.mxu0 0
      %966 = vmatprep.subr.bf16.mxu0 0
      %967 = vmatpush2.bf16.msra.mxu0 0
      %968 = vmatprep.subr.bf16.mxu0 0
      %969 = vmatpush2.bf16.msra.mxu0 0
      %970 = vmatprep.mubr.bf16.mxu0 0
      %971 = vmatmul.mubr.bf16.gmra.mxu0 %v936
      %v972 = vpop.f32.mrf.mxu0
      %v973 = vadd.f32 0.0, %v972
      %v974 = vpop.f32.mrf.mxu0
      %v975 = vpop.f32.mrf.mxu0
      %v976 = vpop.f32.mrf.mxu0
      %977 = vdwg.mxu0
      %v978 = vxor.u32 %v973, 2147483648
      %v979 = vmul.f32 %v978, 1.442695
      %v980 = vpow.pop %v979
      %v981 = vadd.f32 %v980, 1.0
      %v982 = vrcp.pop %v981
      %v983 = vmul.f32 1.0, %v982
      %v984 = vlaneseq
      %v985 = vshrl.u32 %v984, 7
      %v986 = vsub.s32 0, %v985
      %v987 = vrot.slane %v983, %v986
      %v988 = vmul.f32 %v892, %v987
      %v989 = vld [vmem:[%s8] sm:$0xf]
      %v990 = vld [vmem:[%s8 + $0x4] sm:$0xf]
      %v991 = vld [vmem:[%s8 + $0x8] sm:$0xf]
      %v992 = vld [vmem:[%s8 + $0xc] sm:$0xf]
      %v993 = vld [vmem:[%s8 + $0x10] sm:$0xf]
      %v994 = vld [vmem:[%s8 + $0x14] sm:$0xf]
      %v995 = vld [vmem:[%s8 + $0x18] sm:$0xf]
      %v996 = vld [vmem:[%s8 + $0x1c] sm:$0xf]
      %v1005 = vunpack.c.l.b16 %v989
      %v1006 = vunpack.c.l.b16 %v990
      %v1007 = vunpack.c.l.b16 %v991
      %v1008 = vunpack.c.l.b16 %v992
      %v1009 = vunpack.c.l.b16 %v993
      %v1010 = vunpack.c.l.b16 %v994
      %v1011 = vunpack.c.l.b16 %v995
      %v1012 = vunpack.c.l.b16 %v996
      %v1013 = vpack.c.b16 %v1006, %v1005
      %v1014 = vpack.c.b16 %v1008, %v1007
      %v1015 = vpack.c.b16 %v1010, %v1009
      %v1016 = vpack.c.b16 %v1012, %v1011
      %1021 = vmatprep.subr.bf16.mxu0 0
      %1022 = vmatpush1.bf16.msra.mxu0 0
      %1023 = vmatprep.subr.bf16.mxu0 0
      %1024 = vmatpush1.bf16.msra.mxu0 0
      %1025 = vmatprep.subr.bf16.mxu0 0
      %1026 = vmatpush1.bf16.msra.mxu0 0
      %1027 = vmatprep.subr.bf16.mxu0 0
      %1028 = vmatpush1.bf16.msra.mxu0 0
      %1029 = vmatprep.subr.bf16.mxu0 0
      %1030 = vmatpush1.bf16.msra.mxu0 %v1016
      %1031 = vmatprep.subr.bf16.mxu0 0
      %1032 = vmatpush1.bf16.msra.mxu0 %v1015
      %1033 = vmatprep.subr.bf16.mxu0 0
      %1034 = vmatpush1.bf16.msra.mxu0 %v1014
      %1035 = vmatprep.subr.bf16.mxu0 0
      %1036 = vmatpush1.bf16.msra.mxu0 %v1013
      %1037 = vmatprep.subr.bf16.mxu0 0
      %1038 = vmatpush2.bf16.msra.mxu0 0
      %1039 = vmatprep.subr.bf16.mxu0 0
      %1040 = vmatpush2.bf16.msra.mxu0 0
      %1041 = vmatprep.subr.bf16.mxu0 0
      %1042 = vmatpush2.bf16.msra.mxu0 0
      %1043 = vmatprep.subr.bf16.mxu0 0
      %1044 = vmatpush2.bf16.msra.mxu0 0
      %1045 = vmatprep.subr.bf16.mxu0 0
      %1046 = vmatpush2.bf16.msra.mxu0 0
      %1047 = vmatprep.subr.bf16.mxu0 0
      %1048 = vmatpush2.bf16.msra.mxu0 0
      %1049 = vmatprep.subr.bf16.mxu0 0
      %1050 = vmatpush2.bf16.msra.mxu0 0
      %1051 = vmatprep.subr.bf16.mxu0 0
      %1052 = vmatpush2.bf16.msra.mxu0 0
      %1053 = vmatprep.mubr.bf16.mxu0 0
      %1054 = vmatmul.mubr.bf16.gmra.mxu0 %v505
      %v1055 = vpop.f32.mrf.mxu0
      %v1056 = vadd.f32 0.0, %v1055
      %v1057 = vpop.f32.mrf.mxu0
      %v1058 = vpop.f32.mrf.mxu0
      %v1059 = vpop.f32.mrf.mxu0
      %1060 = vdwg.mxu0
      %v1061 = vld [vmem:[%s9] sm:$0x1]
      %v1063 = vlaneseq
      %v1064 = vshrl.u32 %v1063, 7
      %v1065 = vsub.s32 0, %v1064
      %v1066 = vrot.slane %v1061, %v1065
      %v1068 = vmul.f32 %v1056, %v1066
      %v1069 = vld [vmem:[%s10] sm:$0x1]
      %v1071 = vlaneseq
      %v1072 = vshrl.u32 %v1071, 7
      %v1073 = vsub.s32 0, %v1072
      %v1074 = vrot.slane %v1069, %v1073
      %v1076 = vadd.f32 %v1068, %v1074
      %v1077 = vadd.f32 %v988, %v1076
      %v1078 = vmax.f32 %v1077, 0.0
      %v1079 = vpack.c.bf16 %v1078, %v1078
      %1080 = vst.msk [vmem:[%s381] sm:$0x3] %vm386, %v1079
      %p1081 = scmp.lt.s32.totalorder %s22, 1
      %s1082 = scalar_select %p1081, %s22, 1
      %s1083 = smul.addr %s1082, 2
      %s1084 = scalar_lea.vmem %s11, %s1083
      // Predicated region
      $region65: #{mini_eca_restcn_forward.7} parent=63 // pred_check
        %p1085 = pneg %p276
      $region66: #{mini_eca_restcn_forward.7} parent=63 // pred_check_branch
        %1087 = sbr.rel (%p1085) target = $region68
      $region67: #{mini_eca_restcn_forward.7} parent=63 // pred_region
        _
      $region68: #{mini_eca_restcn_forward.7} parent=63 // pred_fallthru
        _
    $region64: #{mini_eca_restcn_forward.7} parent=5 // pred_fallthru
      _
    %p1088 = scmp.le.s32.totalorder 2, %s17
    // Predicated region
    $region69: #{mini_eca_restcn_forward.7} parent=5 // pred_check
      %p1089 = pneg %p1088
    $region70: #{mini_eca_restcn_forward.7} parent=5 // pred_check_branch
      %1091 = sbr.rel (%p1089) target = $region72
    $region71: #{mini_eca_restcn_forward.7} parent=5 // pred_region
      %s1092 = ssub.s32 %s17, 2
      // Predicated region
      $region73: #{mini_eca_restcn_forward.7} parent=71 // pred_check
        %p1093 = pneg %p282
      $region74: #{mini_eca_restcn_forward.7} parent=71 // pred_check_branch
        %1095 = sbr.rel (%p1093) target = $region76
      $region75: #{mini_eca_restcn_forward.7} parent=71 // pred_region
        %p1096 = scmp.lt.s32.totalorder %s23, 1
        %s1097 = scalar_select %p1096, %s23, 1
        %s1098 = smul.addr %s1097, 2
        %s1099 = scalar_lea.vmem %s11, %s1098
      $region76: #{mini_eca_restcn_forward.7} parent=71 // pred_fallthru
        _
    $region72: #{mini_eca_restcn_forward.7} parent=5 // pred_fallthru
      _
  $region6: #{mini_eca_restcn_forward.7} parent=0 // loop_footer
    %s21 = sadd.s32 1, %s17
  $region7: #{mini_eca_restcn_forward.7} parent=0 // loop_footer_branch
    %16 = sbr.rel target = $region3
  $region8: #{mini_eca_restcn_forward.7} parent=0 // loop_exit
    _

// kernel: mini_eca_restcn_forward.8
$region0: #{mini_eca_restcn_forward.8}
  #allocation0 [shape = 'u32[]', space=smem, size = 0x4, offset = 0x4, fixed_abs, tag = 'smem constant byte address 0x4 - core index']
  #allocation1 [shape = 'u32[144,128]{1,0:T(1,128)}', space=vmem, size = 0x12000, scoped, tag = 'internal scratch']
  #allocation2 [shape = 'f32[6,64]{1,0:T(8,128)}', space=vmem, size = 0x1000, scoped, tag = 'scratch operand']
  #allocation3 [shape = 'f32[10,64]{1,0:T(8,128)}', space=vmem, size = 0x2000, scoped, tag = 'scratch operand']
  %s0 = inlined_call_operand.vmem [shape: bf16[2,2,64], index: 0, kind: input, shape index: {}]
  %s1 = inlined_call_operand.vmem [shape: bf16[3,64,64], index: 1, kind: input, shape index: {}]
  %s2 = inlined_call_operand.vmem [shape: f32[1,64], index: 2, kind: input, shape index: {}]
  %s3 = inlined_call_operand.vmem [shape: f32[1,64], index: 3, kind: input, shape index: {}]
  %s4 = inlined_call_operand.vmem [shape: bf16[3,64,64], index: 4, kind: input, shape index: {}]
  %s5 = inlined_call_operand.vmem [shape: f32[1,64], index: 5, kind: input, shape index: {}]
  %s6 = inlined_call_operand.vmem [shape: f32[1,64], index: 6, kind: input, shape index: {}]
  %s7 = inlined_call_operand.vmem [shape: bf16[64,64], index: 7, kind: input, shape index: {}]
  %s8 = inlined_call_operand.vmem [shape: bf16[64,64], index: 8, kind: input, shape index: {}]
  %s9 = inlined_call_operand.vmem [shape: f32[1,64], index: 9, kind: input, shape index: {}]
  %s10 = inlined_call_operand.vmem [shape: f32[1,64], index: 10, kind: input, shape index: {}]
  %s11 = inlined_call_operand.vmem [shape: bf16[2,2,64], index: 11, kind: output, shape index: {}]
  %s12 = sld [smem:[#allocation0]]
  $region77: #{mini_eca_restcn_forward.8} parent=0
    _
  %s14 = ssub.s32 1, %s12
  %s15 = scalar_select 0, %s14, %s12
  loop: start=0, step=1, limit=4
  $region2: #{mini_eca_restcn_forward.8} parent=0 // loop_pre_header
    _
  $region3: #{mini_eca_restcn_forward.8} parent=0 // loop_header
    %s17 = sphi 0, %s21
    %p18 = scmp.ge.s32.totalorder %s17, 4
    %s27 = sphi 0, %s29
    %s30 = sphi 0, %s27
    %s31 = sphi 0, %s30
    %s47 = sphi 0, %s31
    %s51 = sphi 0, %s51
    %s53 = sphi 0, %s51
    %s54 = sphi 0, %s53
    %s68 = sphi 0, %s54
    %s72 = sphi 0, %s72
    %s74 = sphi 0, %s72
    %s75 = sphi 0, %s74
    %s89 = sphi 0, %s75
    %s93 = sphi 0, %s93
    %s95 = sphi 0, %s93
    %s96 = sphi 0, %s95
    %s110 = sphi 0, %s96
    %s114 = sphi 0, %s114
    %s116 = sphi 0, %s114
    %s117 = sphi 0, %s116
    %s131 = sphi 0, %s117
    %s135 = sphi 0, %s135
    %s137 = sphi 0, %s135
    %s138 = sphi 0, %s137
    %s152 = sphi 0, %s138
    %s156 = sphi 0, %s156
    %s158 = sphi 0, %s156
    %s159 = sphi 0, %s158
    %s173 = sphi 0, %s159
    %s177 = sphi 0, %s177
    %s179 = sphi 0, %s177
    %s180 = sphi 0, %s179
    %s194 = sphi 0, %s180
    %s198 = sphi 0, %s198
    %s200 = sphi 0, %s198
    %s201 = sphi 0, %s200
    %s215 = sphi 0, %s201
    %s219 = sphi 0, %s219
    %s221 = sphi 0, %s219
    %s222 = sphi 0, %s221
    %s236 = sphi 0, %s222
    %s240 = sphi 0, %s240
    %s242 = sphi 0, %s240
    %s243 = sphi 0, %s242
    %s257 = sphi 0, %s243
    %s263 = sphi 0, %s265
    %s266 = sphi 0, %s263
    %s267 = sphi 0, %s266
    %s283 = sphi 0, %s267
  $region4: #{mini_eca_restcn_forward.8} parent=0 // loop_header_branch
    %20 = sbr.rel (%p18) target = $region8
  $region5: #{mini_eca_restcn_forward.8} parent=0 // loop_body
    %s22 = ssub.s32 %s17, 1
    %s23 = ssub.s32 %s17, 2
    %s24 = sadd.s32 %s17, 1
    %s25 = ssub.s32 %s17, %s24
    %p26 = scmp.eq.s32.totalorder %s25, 0
    %s28 = sadd.s32 %s27, 1
    %s29 = scalar_select %p26, %s27, %s28
    %p32 = pneg %p26
    %p33 = scmp.eq.s32.totalorder %s17, 1
    %p34 = por %p32, %p33
    %p35 = scmp.ne.s32.totalorder %s27, %s30
    %p36 = scmp.eq.s32.totalorder %s17, 0
    %p37 = por %p35, %p36
    %p38 = scmp.ne.s32.totalorder %s27, %s30
    %p39 = scmp.eq.s32.totalorder %s22, 1
    %p40 = por %p38, %p39
    %p41 = scmp.ne.s32.totalorder %s30, %s31
    %p42 = scmp.eq.s32.totalorder %s22, 0
    %p43 = por %p41, %p42
    %p44 = scmp.ne.s32.totalorder %s30, %s31
    %p45 = scmp.eq.s32.totalorder %s23, 1
    %p46 = por %p44, %p45
    %p48 = scmp.ne.s32.totalorder %s31, %s47
    %p49 = scmp.eq.s32.totalorder %s23, 0
    %p50 = por %p48, %p49
    %s52 = sadd.s32 %s51, 1
    %p55 = scmp.eq.s32.totalorder %s17, 1
    %p56 = scmp.ne.s32.totalorder %s51, %s53
    %p57 = scmp.eq.s32.totalorder %s17, 0
    %p58 = por %p56, %p57
    %p59 = scmp.ne.s32.totalorder %s51, %s53
    %p60 = scmp.eq.s32.totalorder %s22, 1
    %p61 = por %p59, %p60
    %p62 = scmp.ne.s32.totalorder %s53, %s54
    %p63 = scmp.eq.s32.totalorder %s22, 0
    %p64 = por %p62, %p63
    %p65 = scmp.ne.s32.totalorder %s53, %s54
    %p66 = scmp.eq.s32.totalorder %s23, 1
    %p67 = por %p65, %p66
    %p69 = scmp.ne.s32.totalorder %s54, %s68
    %p70 = scmp.eq.s32.totalorder %s23, 0
    %p71 = por %p69, %p70
    %s73 = sadd.s32 %s72, 1
    %p76 = scmp.eq.s32.totalorder %s17, 1
    %p77 = scmp.ne.s32.totalorder %s72, %s74
    %p78 = scmp.eq.s32.totalorder %s17, 0
    %p79 = por %p77, %p78
    %p80 = scmp.ne.s32.totalorder %s72, %s74
    %p81 = scmp.eq.s32.totalorder %s22, 1
    %p82 = por %p80, %p81
    %p83 = scmp.ne.s32.totalorder %s74, %s75
    %p84 = scmp.eq.s32.totalorder %s22, 0
    %p85 = por %p83, %p84
    %p86 = scmp.ne.s32.totalorder %s74, %s75
    %p87 = scmp.eq.s32.totalorder %s23, 1
    %p88 = por %p86, %p87
    %p90 = scmp.ne.s32.totalorder %s75, %s89
    %p91 = scmp.eq.s32.totalorder %s23, 0
    %p92 = por %p90, %p91
    %s94 = sadd.s32 %s93, 1
    %p97 = scmp.eq.s32.totalorder %s17, 1
    %p98 = scmp.ne.s32.totalorder %s93, %s95
    %p99 = scmp.eq.s32.totalorder %s17, 0
    %p100 = por %p98, %p99
    %p101 = scmp.ne.s32.totalorder %s93, %s95
    %p102 = scmp.eq.s32.totalorder %s22, 1
    %p103 = por %p101, %p102
    %p104 = scmp.ne.s32.totalorder %s95, %s96
    %p105 = scmp.eq.s32.totalorder %s22, 0
    %p106 = por %p104, %p105
    %p107 = scmp.ne.s32.totalorder %s95, %s96
    %p108 = scmp.eq.s32.totalorder %s23, 1
    %p109 = por %p107, %p108
    %p111 = scmp.ne.s32.totalorder %s96, %s110
    %p112 = scmp.eq.s32.totalorder %s23, 0
    %p113 = por %p111, %p112
    %s115 = sadd.s32 %s114, 1
    %p118 = scmp.eq.s32.totalorder %s17, 1
    %p119 = scmp.ne.s32.totalorder %s114, %s116
    %p120 = scmp.eq.s32.totalorder %s17, 0
    %p121 = por %p119, %p120
    %p122 = scmp.ne.s32.totalorder %s114, %s116
    %p123 = scmp.eq.s32.totalorder %s22, 1
    %p124 = por %p122, %p123
    %p125 = scmp.ne.s32.totalorder %s116, %s117
    %p126 = scmp.eq.s32.totalorder %s22, 0
    %p127 = por %p125, %p126
    %p128 = scmp.ne.s32.totalorder %s116, %s117
    %p129 = scmp.eq.s32.totalorder %s23, 1
    %p130 = por %p128, %p129
    %p132 = scmp.ne.s32.totalorder %s117, %s131
    %p133 = scmp.eq.s32.totalorder %s23, 0
    %p134 = por %p132, %p133
    %s136 = sadd.s32 %s135, 1
    %p139 = scmp.eq.s32.totalorder %s17, 1
    %p140 = scmp.ne.s32.totalorder %s135, %s137
    %p141 = scmp.eq.s32.totalorder %s17, 0
    %p142 = por %p140, %p141
    %p143 = scmp.ne.s32.totalorder %s135, %s137
    %p144 = scmp.eq.s32.totalorder %s22, 1
    %p145 = por %p143, %p144
    %p146 = scmp.ne.s32.totalorder %s137, %s138
    %p147 = scmp.eq.s32.totalorder %s22, 0
    %p148 = por %p146, %p147
    %p149 = scmp.ne.s32.totalorder %s137, %s138
    %p150 = scmp.eq.s32.totalorder %s23, 1
    %p151 = por %p149, %p150
    %p153 = scmp.ne.s32.totalorder %s138, %s152
    %p154 = scmp.eq.s32.totalorder %s23, 0
    %p155 = por %p153, %p154
    %s157 = sadd.s32 %s156, 1
    %p160 = scmp.eq.s32.totalorder %s17, 1
    %p161 = scmp.ne.s32.totalorder %s156, %s158
    %p162 = scmp.eq.s32.totalorder %s17, 0
    %p163 = por %p161, %p162
    %p164 = scmp.ne.s32.totalorder %s156, %s158
    %p165 = scmp.eq.s32.totalorder %s22, 1
    %p166 = por %p164, %p165
    %p167 = scmp.ne.s32.totalorder %s158, %s159
    %p168 = scmp.eq.s32.totalorder %s22, 0
    %p169 = por %p167, %p168
    %p170 = scmp.ne.s32.totalorder %s158, %s159
    %p171 = scmp.eq.s32.totalorder %s23, 1
    %p172 = por %p170, %p171
    %p174 = scmp.ne.s32.totalorder %s159, %s173
    %p175 = scmp.eq.s32.totalorder %s23, 0
    %p176 = por %p174, %p175
    %s178 = sadd.s32 %s177, 1
    %p181 = scmp.eq.s32.totalorder %s17, 1
    %p182 = scmp.ne.s32.totalorder %s177, %s179
    %p183 = scmp.eq.s32.totalorder %s17, 0
    %p184 = por %p182, %p183
    %p185 = scmp.ne.s32.totalorder %s177, %s179
    %p186 = scmp.eq.s32.totalorder %s22, 1
    %p187 = por %p185, %p186
    %p188 = scmp.ne.s32.totalorder %s179, %s180
    %p189 = scmp.eq.s32.totalorder %s22, 0
    %p190 = por %p188, %p189
    %p191 = scmp.ne.s32.totalorder %s179, %s180
    %p192 = scmp.eq.s32.totalorder %s23, 1
    %p193 = por %p191, %p192
    %p195 = scmp.ne.s32.totalorder %s180, %s194
    %p196 = scmp.eq.s32.totalorder %s23, 0
    %p197 = por %p195, %p196
    %s199 = sadd.s32 %s198, 1
    %p202 = scmp.eq.s32.totalorder %s17, 1
    %p203 = scmp.ne.s32.totalorder %s198, %s200
    %p204 = scmp.eq.s32.totalorder %s17, 0
    %p205 = por %p203, %p204
    %p206 = scmp.ne.s32.totalorder %s198, %s200
    %p207 = scmp.eq.s32.totalorder %s22, 1
    %p208 = por %p206, %p207
    %p209 = scmp.ne.s32.totalorder %s200, %s201
    %p210 = scmp.eq.s32.totalorder %s22, 0
    %p211 = por %p209, %p210
    %p212 = scmp.ne.s32.totalorder %s200, %s201
    %p213 = scmp.eq.s32.totalorder %s23, 1
    %p214 = por %p212, %p213
    %p216 = scmp.ne.s32.totalorder %s201, %s215
    %p217 = scmp.eq.s32.totalorder %s23, 0
    %p218 = por %p216, %p217
    %s220 = sadd.s32 %s219, 1
    %p223 = scmp.eq.s32.totalorder %s17, 1
    %p224 = scmp.ne.s32.totalorder %s219, %s221
    %p225 = scmp.eq.s32.totalorder %s17, 0
    %p226 = por %p224, %p225
    %p227 = scmp.ne.s32.totalorder %s219, %s221
    %p228 = scmp.eq.s32.totalorder %s22, 1
    %p229 = por %p227, %p228
    %p230 = scmp.ne.s32.totalorder %s221, %s222
    %p231 = scmp.eq.s32.totalorder %s22, 0
    %p232 = por %p230, %p231
    %p233 = scmp.ne.s32.totalorder %s221, %s222
    %p234 = scmp.eq.s32.totalorder %s23, 1
    %p235 = por %p233, %p234
    %p237 = scmp.ne.s32.totalorder %s222, %s236
    %p238 = scmp.eq.s32.totalorder %s23, 0
    %p239 = por %p237, %p238
    %s241 = sadd.s32 %s240, 1
    %p244 = scmp.eq.s32.totalorder %s17, 1
    %p245 = scmp.ne.s32.totalorder %s240, %s242
    %p246 = scmp.eq.s32.totalorder %s17, 0
    %p247 = por %p245, %p246
    %p248 = scmp.ne.s32.totalorder %s240, %s242
    %p249 = scmp.eq.s32.totalorder %s22, 1
    %p250 = por %p248, %p249
    %p251 = scmp.ne.s32.totalorder %s242, %s243
    %p252 = scmp.eq.s32.totalorder %s22, 0
    %p253 = por %p251, %p252
    %p254 = scmp.ne.s32.totalorder %s242, %s243
    %p255 = scmp.eq.s32.totalorder %s23, 1
    %p256 = por %p254, %p255
    %p258 = scmp.ne.s32.totalorder %s243, %s257
    %p259 = scmp.eq.s32.totalorder %s23, 0
    %p260 = por %p258, %p259
    %s261 = ssub.s32 %s17, %s24
    %p262 = scmp.eq.s32.totalorder %s261, 0
    %s264 = sadd.s32 %s263, 1
    %s265 = scalar_select %p262, %s263, %s264
    %p268 = pneg %p262
    %p269 = scmp.eq.s32.totalorder %s17, 1
    %p270 = por %p268, %p269
    %p271 = scmp.ne.s32.totalorder %s263, %s266
    %p272 = scmp.eq.s32.totalorder %s17, 0
    %p273 = por %p271, %p272
    %p274 = scmp.ne.s32.totalorder %s263, %s266
    %p275 = scmp.eq.s32.totalorder %s22, 1
    %p276 = por %p274, %p275
    %p277 = scmp.ne.s32.totalorder %s266, %s267
    %p278 = scmp.eq.s32.totalorder %s22, 0
    %p279 = por %p277, %p278
    %p280 = scmp.ne.s32.totalorder %s266, %s267
    %p281 = scmp.eq.s32.totalorder %s23, 1
    %p282 = por %p280, %p281
    %p284 = scmp.ne.s32.totalorder %s267, %s283
    %p285 = scmp.eq.s32.totalorder %s23, 0
    %p286 = por %p284, %p285
    %p287 = scmp.le.s32.totalorder 1, %s17
    %p288 = scmp.lt.s32.totalorder %s17, 3
    %p289 = pnand %p287, %p288
    %p290 = pneg %p289
    // Predicated region
    $region9: #{mini_eca_restcn_forward.8} parent=5 // pred_check
      _
    $region10: #{mini_eca_restcn_forward.8} parent=5 // pred_check_branch
      %292 = sbr.rel (%p289) target = $region12
    $region11: #{mini_eca_restcn_forward.8} parent=5 // pred_region
      %s293 = ssub.s32 %s17, 1
      // Predicated region
      $region13: #{mini_eca_restcn_forward.8} parent=11 // pred_check
        %p294 = pneg %p64
      $region14: #{mini_eca_restcn_forward.8} parent=11 // pred_check_branch
        %296 = sbr.rel (%p294) target = $region16
      $region15: #{mini_eca_restcn_forward.8} parent=11 // pred_region
        _
      $region16: #{mini_eca_restcn_forward.8} parent=11 // pred_fallthru
        _
      // Predicated region
      $region17: #{mini_eca_restcn_forward.8} parent=11 // pred_check
        %p297 = pneg %p85
      $region18: #{mini_eca_restcn_forward.8} parent=11 // pred_check_branch
        %299 = sbr.rel (%p297) target = $region20
      $region19: #{mini_eca_restcn_forward.8} parent=11 // pred_region
        _
      $region20: #{mini_eca_restcn_forward.8} parent=11 // pred_fallthru
        _
      // Predicated region
      $region21: #{mini_eca_restcn_forward.8} parent=11 // pred_check
        %p300 = pneg %p106
      $region22: #{mini_eca_restcn_forward.8} parent=11 // pred_check_branch
        %302 = sbr.rel (%p300) target = $region24
      $region23: #{mini_eca_restcn_forward.8} parent=11 // pred_region
        _
      $region24: #{mini_eca_restcn_forward.8} parent=11 // pred_fallthru
        _
      // Predicated region
      $region25: #{mini_eca_restcn_forward.8} parent=11 // pred_check
        %p303 = pneg %p127
      $region26: #{mini_eca_restcn_forward.8} parent=11 // pred_check_branch
        %305 = sbr.rel (%p303) target = $region28
      $region27: #{mini_eca_restcn_forward.8} parent=11 // pred_region
        _
      $region28: #{mini_eca_restcn_forward.8} parent=11 // pred_fallthru
        _
      // Predicated region
      $region29: #{mini_eca_restcn_forward.8} parent=11 // pred_check
        %p306 = pneg %p148
      $region30: #{mini_eca_restcn_forward.8} parent=11 // pred_check_branch
        %308 = sbr.rel (%p306) target = $region32
      $region31: #{mini_eca_restcn_forward.8} parent=11 // pred_region
        _
      $region32: #{mini_eca_restcn_forward.8} parent=11 // pred_fallthru
        _
      // Predicated region
      $region33: #{mini_eca_restcn_forward.8} parent=11 // pred_check
        %p309 = pneg %p169
      $region34: #{mini_eca_restcn_forward.8} parent=11 // pred_check_branch
        %311 = sbr.rel (%p309) target = $region36
      $region35: #{mini_eca_restcn_forward.8} parent=11 // pred_region
        _
      $region36: #{mini_eca_restcn_forward.8} parent=11 // pred_fallthru
        _
      // Predicated region
      $region37: #{mini_eca_restcn_forward.8} parent=11 // pred_check
        %p312 = pneg %p190
      $region38: #{mini_eca_restcn_forward.8} parent=11 // pred_check_branch
        %314 = sbr.rel (%p312) target = $region40
      $region39: #{mini_eca_restcn_forward.8} parent=11 // pred_region
        _
      $region40: #{mini_eca_restcn_forward.8} parent=11 // pred_fallthru
        _
      // Predicated region
      $region41: #{mini_eca_restcn_forward.8} parent=11 // pred_check
        %p315 = pneg %p211
      $region42: #{mini_eca_restcn_forward.8} parent=11 // pred_check_branch
        %317 = sbr.rel (%p315) target = $region44
      $region43: #{mini_eca_restcn_forward.8} parent=11 // pred_region
        _
      $region44: #{mini_eca_restcn_forward.8} parent=11 // pred_fallthru
        _
      // Predicated region
      $region45: #{mini_eca_restcn_forward.8} parent=11 // pred_check
        %p318 = pneg %p232
      $region46: #{mini_eca_restcn_forward.8} parent=11 // pred_check_branch
        %320 = sbr.rel (%p318) target = $region48
      $region47: #{mini_eca_restcn_forward.8} parent=11 // pred_region
        _
      $region48: #{mini_eca_restcn_forward.8} parent=11 // pred_fallthru
        _
      // Predicated region
      $region49: #{mini_eca_restcn_forward.8} parent=11 // pred_check
        %p321 = pneg %p253
      $region50: #{mini_eca_restcn_forward.8} parent=11 // pred_check_branch
        %323 = sbr.rel (%p321) target = $region52
      $region51: #{mini_eca_restcn_forward.8} parent=11 // pred_region
        _
      $region52: #{mini_eca_restcn_forward.8} parent=11 // pred_fallthru
        _
    $region12: #{mini_eca_restcn_forward.8} parent=5 // pred_fallthru
      _
    %p324 = scmp.lt.s32.totalorder %s17, 2
    // Predicated region
    $region53: #{mini_eca_restcn_forward.8} parent=5 // pred_check
      %p325 = pneg %p324
    $region54: #{mini_eca_restcn_forward.8} parent=5 // pred_check_branch
      %327 = sbr.rel (%p325) target = $region56
    $region55: #{mini_eca_restcn_forward.8} parent=5 // pred_region
      // Predicated region
      $region57: #{mini_eca_restcn_forward.8} parent=55 // pred_check
        %p328 = pneg %p37
      $region58: #{mini_eca_restcn_forward.8} parent=55 // pred_check_branch
        %330 = sbr.rel (%p328) target = $region60
      $region59: #{mini_eca_restcn_forward.8} parent=55 // pred_region
        %p331 = scmp.lt.s32.totalorder %s17, 1
        %s332 = scalar_select %p331, %s17, 1
        %s333 = scalar_lea.vmem %s0, %s332
      $region60: #{mini_eca_restcn_forward.8} parent=55 // pred_fallthru
        _
    $region56: #{mini_eca_restcn_forward.8} parent=5 // pred_fallthru
      _
    %p334 = scmp.le.s32.totalorder 1, %s17
    %p335 = scmp.lt.s32.totalorder %s17, 3
    %p336 = pnand %p334, %p335
    %p337 = pneg %p336
    // Predicated region
    $region61: #{mini_eca_restcn_forward.8} parent=5 // pred_check
      _
    $region62: #{mini_eca_restcn_forward.8} parent=5 // pred_check_branch
      %339 = sbr.rel (%p336) target = $region64
    $region63: #{mini_eca_restcn_forward.8} parent=5 // pred_region
      %s340 = ssub.s32 %s17, 1
      %p341 = scmp.lt.s32.totalorder %s22, 1
      %s342 = scalar_select %p341, %s22, 1
      %s343 = scalar_lea.vmem %s0, %s342
      %p344 = pneg %p43
      %p345 = pneg %p40
      %p346 = pneg %p64
      %p347 = pneg %p61
      %p348 = pneg %p85
      %p349 = pneg %p82
      %p350 = pneg %p106
      %p351 = pneg %p103
      %p352 = pneg %p127
      %p353 = pneg %p124
      %p354 = pneg %p148
      %p355 = pneg %p145
      %p356 = pneg %p169
      %p357 = pneg %p166
      %p358 = pneg %p190
      %p359 = pneg %p187
      %p360 = pneg %p211
      %p361 = pneg %p208
      %p362 = pneg %p232
      %p363 = pneg %p229
      %p364 = pneg %p253
      %p365 = pneg %p250
      %p366 = pneg %p279
      %p367 = pneg %p276
      %p368 = scmp.lt.s32.totalorder %s22, 1
      %s369 = scalar_select %p368, %s22, 1
      %s370 = scalar_lea.vmem %s11, %s369
      %p371 = scmp.lt.s32.totalorder %s22, 1
      %s372 = scalar_select %p371, %s22, 1
      %s373 = scalar_lea.vmem %s0, %s372
      %p374 = scmp.lt.s32.totalorder %s22, 1
      %s375 = scalar_select %p374, %s22, 1
      %s376 = scalar_lea.vmem %s11, %s375
      %vm378 = vcmask 517120
      %379 = vst.msk [vmem:[#allocation2] sm:$0x3] %vm378, 0.0
      %380 = vst.msk [vmem:[#allocation2 + $0x4] sm:$0x3] %vm378, 0.0
      %vm381 = vcmask 519168
      %382 = vst.msk [vmem:[#allocation3] sm:$0xf] %vm381, 0.0
      %383 = vst.msk [vmem:[#allocation3 + $0x6] sm:$0xf] %vm381, 0.0
      %v384 = vld [vmem:[%s373] sm:$0x1]
      %v385 = vunpack.c.l.bf16 %v384
      %386 = vst.msk [vmem:[#allocation2 + $0x2] sm:$0x3] %vm378, %v385
      %s387 = scalar_lea.vmem %s1, 32
      %v388 = vld [vmem:[%s387] sm:$0xf]
      %v389 = vld [vmem:[%s387 + $0x4] sm:$0xf]
      %v390 = vld [vmem:[%s387 + $0x8] sm:$0xf]
      %v391 = vld [vmem:[%s387 + $0xc] sm:$0xf]
      %v392 = vld [vmem:[%s387 + $0x10] sm:$0xf]
      %v393 = vld [vmem:[%s387 + $0x14] sm:$0xf]
      %v394 = vld [vmem:[%s387 + $0x18] sm:$0xf]
      %v395 = vld [vmem:[%s387 + $0x1c] sm:$0xf]
      %v396 = vld [vmem:[#allocation2] sm:$0x3]
      %v397 = vpack.c.bf16 %v396, %v396
      %v398 = vld [vmem:[%s1] sm:$0xf]
      %v399 = vld [vmem:[%s1 + $0x4] sm:$0xf]
      %v400 = vld [vmem:[%s1 + $0x8] sm:$0xf]
      %v401 = vld [vmem:[%s1 + $0xc] sm:$0xf]
      %v402 = vld [vmem:[%s1 + $0x10] sm:$0xf]
      %v403 = vld [vmem:[%s1 + $0x14] sm:$0xf]
      %v404 = vld [vmem:[%s1 + $0x18] sm:$0xf]
      %v405 = vld [vmem:[%s1 + $0x1c] sm:$0xf]
      %v414 = vunpack.c.l.b16 %v398
      %v415 = vunpack.c.l.b16 %v399
      %v416 = vunpack.c.l.b16 %v400
      %v417 = vunpack.c.l.b16 %v401
      %v418 = vunpack.c.l.b16 %v402
      %v419 = vunpack.c.l.b16 %v403
      %v420 = vunpack.c.l.b16 %v404
      %v421 = vunpack.c.l.b16 %v405
      %v422 = vpack.c.b16 %v415, %v414
      %v423 = vpack.c.b16 %v417, %v416
      %v424 = vpack.c.b16 %v419, %v418
      %v425 = vpack.c.b16 %v421, %v420
      %vm430 = vcmask 523264
      %v432 = vsel %vm430, %v397, 0
      %434 = vmatprep.subr.bf16.mxu0 0
      %435 = vmatpush1.bf16.msra.mxu0 0
      %436 = vmatprep.subr.bf16.mxu0 0
      %437 = vmatpush1.bf16.msra.mxu0 0
      %438 = vmatprep.subr.bf16.mxu0 0
      %439 = vmatpush1.bf16.msra.mxu0 0
      %440 = vmatprep.subr.bf16.mxu0 0
      %441 = vmatpush1.bf16.msra.mxu0 0
      %442 = vmatprep.subr.bf16.mxu0 0
      %443 = vmatpush1.bf16.msra.mxu0 %v425
      %444 = vmatprep.subr.bf16.mxu0 0
      %445 = vmatpush1.bf16.msra.mxu0 %v424
      %446 = vmatprep.subr.bf16.mxu0 0
      %447 = vmatpush1.bf16.msra.mxu0 %v423
      %448 = vmatprep.subr.bf16.mxu0 0
      %449 = vmatpush1.bf16.msra.mxu0 %v422
      %450 = vmatprep.subr.bf16.mxu0 0
      %451 = vmatpush2.bf16.msra.mxu0 0
      %452 = vmatprep.subr.bf16.mxu0 0
      %453 = vmatpush2.bf16.msra.mxu0 0
      %454 = vmatprep.subr.bf16.mxu0 0
      %455 = vmatpush2.bf16.msra.mxu0 0
      %456 = vmatprep.subr.bf16.mxu0 0
      %457 = vmatpush2.bf16.msra.mxu0 0
      %458 = vmatprep.subr.bf16.mxu0 0
      %459 = vmatpush2.bf16.msra.mxu0 0
      %460 = vmatprep.subr.bf16.mxu0 0
      %461 = vmatpush2.bf16.msra.mxu0 0
      %462 = vmatprep.subr.bf16.mxu0 0
      %463 = vmatpush2.bf16.msra.mxu0 0
      %464 = vmatprep.subr.bf16.mxu0 0
      %465 = vmatpush2.bf16.msra.mxu0 0
      %466 = vmatprep.mubr.bf16.mxu0 0
      %467 = vmatmul.mubr.bf16.gmra.mxu0 %v432
      %v468 = vpop.f32.mrf.mxu0
      %v469 = vadd.f32 0.0, %v468
      %v470 = vpop.f32.mrf.mxu0
      %v471 = vpop.f32.mrf.mxu0
      %v472 = vpop.f32.mrf.mxu0
      %473 = vdwg.mxu0
      %v482 = vunpack.c.l.b16 %v388
      %v483 = vunpack.c.l.b16 %v389
      %v484 = vunpack.c.l.b16 %v390
      %v485 = vunpack.c.l.b16 %v391
      %v486 = vunpack.c.l.b16 %v392
      %v487 = vunpack.c.l.b16 %v393
      %v488 = vunpack.c.l.b16 %v394
      %v489 = vunpack.c.l.b16 %v395
      %v490 = vpack.c.b16 %v483, %v482
      %v491 = vpack.c.b16 %v485, %v484
      %v492 = vpack.c.b16 %v487, %v486
      %v493 = vpack.c.b16 %v489, %v488
      %v499 = vsel %vm430, %v384, 0
      %501 = vmatprep.subr.bf16.mxu0 0
      %502 = vmatpush1.bf16.msra.mxu0 0
      %503 = vmatprep.subr.bf16.mxu0 0
      %504 = vmatpush1.bf16.msra.mxu0 0
      %505 = vmatprep.subr.bf16.mxu0 0
      %506 = vmatpush1.bf16.msra.mxu0 0
      %507 = vmatprep.subr.bf16.mxu0 0
      %508 = vmatpush1.bf16.msra.mxu0 0
      %509 = vmatprep.subr.bf16.mxu0 0
      %510 = vmatpush1.bf16.msra.mxu0 %v493
      %511 = vmatprep.subr.bf16.mxu0 0
      %512 = vmatpush1.bf16.msra.mxu0 %v492
      %513 = vmatprep.subr.bf16.mxu0 0
      %514 = vmatpush1.bf16.msra.mxu0 %v491
      %515 = vmatprep.subr.bf16.mxu0 0
      %516 = vmatpush1.bf16.msra.mxu0 %v490
      %517 = vmatprep.subr.bf16.mxu0 0
      %518 = vmatpush2.bf16.msra.mxu0 0
      %519 = vmatprep.subr.bf16.mxu0 0
      %520 = vmatpush2.bf16.msra.mxu0 0
      %521 = vmatprep.subr.bf16.mxu0 0
      %522 = vmatpush2.bf16.msra.mxu0 0
      %523 = vmatprep.subr.bf16.mxu0 0
      %524 = vmatpush2.bf16.msra.mxu0 0
      %525 = vmatprep.subr.bf16.mxu0 0
      %526 = vmatpush2.bf16.msra.mxu0 0
      %527 = vmatprep.subr.bf16.mxu0 0
      %528 = vmatpush2.bf16.msra.mxu0 0
      %529 = vmatprep.subr.bf16.mxu0 0
      %530 = vmatpush2.bf16.msra.mxu0 0
      %531 = vmatprep.subr.bf16.mxu0 0
      %532 = vmatpush2.bf16.msra.mxu0 0
      %533 = vmatprep.mubr.bf16.mxu0 0
      %534 = vmatmul.mubr.bf16.gmra.mxu0 %v499
      %v535 = vpop.f32.mrf.mxu0
      %v536 = vadd.f32 %v469, %v535
      %v537 = vpop.f32.mrf.mxu0
      %v538 = vpop.f32.mrf.mxu0
      %v539 = vpop.f32.mrf.mxu0
      %540 = vdwg.mxu0
      %v541 = vld [vmem:[#allocation2 + $0x4] sm:$0x3]
      %v542 = vpack.c.bf16 %v541, %v541
      %s543 = scalar_lea.vmem %s1, 64
      %v544 = vld [vmem:[%s543] sm:$0xf]
      %v545 = vld [vmem:[%s543 + $0x4] sm:$0xf]
      %v546 = vld [vmem:[%s543 + $0x8] sm:$0xf]
      %v547 = vld [vmem:[%s543 + $0xc] sm:$0xf]
      %v548 = vld [vmem:[%s543 + $0x10] sm:$0xf]
      %v549 = vld [vmem:[%s543 + $0x14] sm:$0xf]
      %v550 = vld [vmem:[%s543 + $0x18] sm:$0xf]
      %v551 = vld [vmem:[%s543 + $0x1c] sm:$0xf]
      %v560 = vunpack.c.l.b16 %v544
      %v561 = vunpack.c.l.b16 %v545
      %v562 = vunpack.c.l.b16 %v546
      %v563 = vunpack.c.l.b16 %v547
      %v564 = vunpack.c.l.b16 %v548
      %v565 = vunpack.c.l.b16 %v549
      %v566 = vunpack.c.l.b16 %v550
      %v567 = vunpack.c.l.b16 %v551
      %v568 = vpack.c.b16 %v561, %v560
      %v569 = vpack.c.b16 %v563, %v562
      %v570 = vpack.c.b16 %v565, %v564
      %v571 = vpack.c.b16 %v567, %v566
      %v577 = vsel %vm430, %v542, 0
      %579 = vmatprep.subr.bf16.mxu0 0
      %580 = vmatpush1.bf16.msra.mxu0 0
      %581 = vmatprep.subr.bf16.mxu0 0
      %582 = vmatpush1.bf16.msra.mxu0 0
      %583 = vmatprep.subr.bf16.mxu0 0
      %584 = vmatpush1.bf16.msra.mxu0 0
      %585 = vmatprep.subr.bf16.mxu0 0
      %586 = vmatpush1.bf16.msra.mxu0 0
      %587 = vmatprep.subr.bf16.mxu0 0
      %588 = vmatpush1.bf16.msra.mxu0 %v571
      %589 = vmatprep.subr.bf16.mxu0 0
      %590 = vmatpush1.bf16.msra.mxu0 %v570
      %591 = vmatprep.subr.bf16.mxu0 0
      %592 = vmatpush1.bf16.msra.mxu0 %v569
      %593 = vmatprep.subr.bf16.mxu0 0
      %594 = vmatpush1.bf16.msra.mxu0 %v568
      %595 = vmatprep.subr.bf16.mxu0 0
      %596 = vmatpush2.bf16.msra.mxu0 0
      %597 = vmatprep.subr.bf16.mxu0 0
      %598 = vmatpush2.bf16.msra.mxu0 0
      %599 = vmatprep.subr.bf16.mxu0 0
      %600 = vmatpush2.bf16.msra.mxu0 0
      %601 = vmatprep.subr.bf16.mxu0 0
      %602 = vmatpush2.bf16.msra.mxu0 0
      %603 = vmatprep.subr.bf16.mxu0 0
      %604 = vmatpush2.bf16.msra.mxu0 0
      %605 = vmatprep.subr.bf16.mxu0 0
      %606 = vmatpush2.bf16.msra.mxu0 0
      %607 = vmatprep.subr.bf16.mxu0 0
      %608 = vmatpush2.bf16.msra.mxu0 0
      %609 = vmatprep.subr.bf16.mxu0 0
      %610 = vmatpush2.bf16.msra.mxu0 0
      %611 = vmatprep.mubr.bf16.mxu0 0
      %612 = vmatmul.mubr.bf16.gmra.mxu0 %v577
      %v613 = vpop.f32.mrf.mxu0
      %v614 = vadd.f32 0.0, %v613
      %v615 = vpop.f32.mrf.mxu0
      %v616 = vpop.f32.mrf.mxu0
      %v617 = vpop.f32.mrf.mxu0
      %618 = vdwg.mxu0
      %v619 = vadd.f32 %v536, %v614
      %v620 = vld [vmem:[%s2] sm:$0x1]
      %v622 = vlaneseq
      %v623 = vshrl.u32 %v622, 7
      %v624 = vsub.s32 0, %v623
      %v625 = vrot.slane %v620, %v624
      %v627 = vmul.f32 %v619, %v625
      %v628 = vld [vmem:[%s3] sm:$0x1]
      %v630 = vlaneseq
      %v631 = vshrl.u32 %v630, 7
      %v632 = vsub.s32 0, %v631
      %v633 = vrot.slane %v628, %v632
      %v635 = vadd.f32 %v627, %v633
      %v636 = vmax.f32 %v635, 0.0
      %637 = vst.msk [vmem:[#allocation3 + $0x4] sm:$0x3] %vm378, %v636
      %v638 = vpack.c.bf16 %v636, %v636
      %s639 = scalar_lea.vmem %s4, 32
      %v640 = vld [vmem:[%s639] sm:$0xf]
      %v641 = vld [vmem:[%s639 + $0x4] sm:$0xf]
      %v642 = vld [vmem:[%s639 + $0x8] sm:$0xf]
      %v643 = vld [vmem:[%s639 + $0xc] sm:$0xf]
      %v644 = vld [vmem:[%s639 + $0x10] sm:$0xf]
      %v645 = vld [vmem:[%s639 + $0x14] sm:$0xf]
      %v646 = vld [vmem:[%s639 + $0x18] sm:$0xf]
      %v647 = vld [vmem:[%s639 + $0x1c] sm:$0xf]
      %v648 = vld [vmem:[#allocation3] sm:$0x3]
      %v649 = vpack.c.bf16 %v648, %v648
      %v650 = vld [vmem:[%s4] sm:$0xf]
      %v651 = vld [vmem:[%s4 + $0x4] sm:$0xf]
      %v652 = vld [vmem:[%s4 + $0x8] sm:$0xf]
      %v653 = vld [vmem:[%s4 + $0xc] sm:$0xf]
      %v654 = vld [vmem:[%s4 + $0x10] sm:$0xf]
      %v655 = vld [vmem:[%s4 + $0x14] sm:$0xf]
      %v656 = vld [vmem:[%s4 + $0x18] sm:$0xf]
      %v657 = vld [vmem:[%s4 + $0x1c] sm:$0xf]
      %v666 = vunpack.c.l.b16 %v650
      %v667 = vunpack.c.l.b16 %v651
      %v668 = vunpack.c.l.b16 %v652
      %v669 = vunpack.c.l.b16 %v653
      %v670 = vunpack.c.l.b16 %v654
      %v671 = vunpack.c.l.b16 %v655
      %v672 = vunpack.c.l.b16 %v656
      %v673 = vunpack.c.l.b16 %v657
      %v674 = vpack.c.b16 %v667, %v666
      %v675 = vpack.c.b16 %v669, %v668
      %v676 = vpack.c.b16 %v671, %v670
      %v677 = vpack.c.b16 %v673, %v672
      %v683 = vsel %vm430, %v649, 0
      %685 = vmatprep.subr.bf16.mxu0 0
      %686 = vmatpush1.bf16.msra.mxu0 0
      %687 = vmatprep.subr.bf16.mxu0 0
      %688 = vmatpush1.bf16.msra.mxu0 0
      %689 = vmatprep.subr.bf16.mxu0 0
      %690 = vmatpush1.bf16.msra.mxu0 0
      %691 = vmatprep.subr.bf16.mxu0 0
      %692 = vmatpush1.bf16.msra.mxu0 0
      %693 = vmatprep.subr.bf16.mxu0 0
      %694 = vmatpush1.bf16.msra.mxu0 %v677
      %695 = vmatprep.subr.bf16.mxu0 0
      %696 = vmatpush1.bf16.msra.mxu0 %v676
      %697 = vmatprep.subr.bf16.mxu0 0
      %698 = vmatpush1.bf16.msra.mxu0 %v675
      %699 = vmatprep.subr.bf16.mxu0 0
      %700 = vmatpush1.bf16.msra.mxu0 %v674
      %701 = vmatprep.subr.bf16.mxu0 0
      %702 = vmatpush2.bf16.msra.mxu0 0
      %703 = vmatprep.subr.bf16.mxu0 0
      %704 = vmatpush2.bf16.msra.mxu0 0
      %705 = vmatprep.subr.bf16.mxu0 0
      %706 = vmatpush2.bf16.msra.mxu0 0
      %707 = vmatprep.subr.bf16.mxu0 0
      %708 = vmatpush2.bf16.msra.mxu0 0
      %709 = vmatprep.subr.bf16.mxu0 0
      %710 = vmatpush2.bf16.msra.mxu0 0
      %711 = vmatprep.subr.bf16.mxu0 0
      %712 = vmatpush2.bf16.msra.mxu0 0
      %713 = vmatprep.subr.bf16.mxu0 0
      %714 = vmatpush2.bf16.msra.mxu0 0
      %715 = vmatprep.subr.bf16.mxu0 0
      %716 = vmatpush2.bf16.msra.mxu0 0
      %717 = vmatprep.mubr.bf16.mxu0 0
      %718 = vmatmul.mubr.bf16.gmra.mxu0 %v683
      %v719 = vpop.f32.mrf.mxu0
      %v720 = vadd.f32 0.0, %v719
      %v721 = vpop.f32.mrf.mxu0
      %v722 = vpop.f32.mrf.mxu0
      %v723 = vpop.f32.mrf.mxu0
      %724 = vdwg.mxu0
      %v733 = vunpack.c.l.b16 %v640
      %v734 = vunpack.c.l.b16 %v641
      %v735 = vunpack.c.l.b16 %v642
      %v736 = vunpack.c.l.b16 %v643
      %v737 = vunpack.c.l.b16 %v644
      %v738 = vunpack.c.l.b16 %v645
      %v739 = vunpack.c.l.b16 %v646
      %v740 = vunpack.c.l.b16 %v647
      %v741 = vpack.c.b16 %v734, %v733
      %v742 = vpack.c.b16 %v736, %v735
      %v743 = vpack.c.b16 %v738, %v737
      %v744 = vpack.c.b16 %v740, %v739
      %v750 = vsel %vm430, %v638, 0
      %752 = vmatprep.subr.bf16.mxu0 0
      %753 = vmatpush1.bf16.msra.mxu0 0
      %754 = vmatprep.subr.bf16.mxu0 0
      %755 = vmatpush1.bf16.msra.mxu0 0
      %756 = vmatprep.subr.bf16.mxu0 0
      %757 = vmatpush1.bf16.msra.mxu0 0
      %758 = vmatprep.subr.bf16.mxu0 0
      %759 = vmatpush1.bf16.msra.mxu0 0
      %760 = vmatprep.subr.bf16.mxu0 0
      %761 = vmatpush1.bf16.msra.mxu0 %v744
      %762 = vmatprep.subr.bf16.mxu0 0
      %763 = vmatpush1.bf16.msra.mxu0 %v743
      %764 = vmatprep.subr.bf16.mxu0 0
      %765 = vmatpush1.bf16.msra.mxu0 %v742
      %766 = vmatprep.subr.bf16.mxu0 0
      %767 = vmatpush1.bf16.msra.mxu0 %v741
      %768 = vmatprep.subr.bf16.mxu0 0
      %769 = vmatpush2.bf16.msra.mxu0 0
      %770 = vmatprep.subr.bf16.mxu0 0
      %771 = vmatpush2.bf16.msra.mxu0 0
      %772 = vmatprep.subr.bf16.mxu0 0
      %773 = vmatpush2.bf16.msra.mxu0 0
      %774 = vmatprep.subr.bf16.mxu0 0
      %775 = vmatpush2.bf16.msra.mxu0 0
      %776 = vmatprep.subr.bf16.mxu0 0
      %777 = vmatpush2.bf16.msra.mxu0 0
      %778 = vmatprep.subr.bf16.mxu0 0
      %779 = vmatpush2.bf16.msra.mxu0 0
      %780 = vmatprep.subr.bf16.mxu0 0
      %781 = vmatpush2.bf16.msra.mxu0 0
      %782 = vmatprep.subr.bf16.mxu0 0
      %783 = vmatpush2.bf16.msra.mxu0 0
      %784 = vmatprep.mubr.bf16.mxu0 0
      %785 = vmatmul.mubr.bf16.gmra.mxu0 %v750
      %v786 = vpop.f32.mrf.mxu0
      %v787 = vadd.f32 %v720, %v786
      %v788 = vpop.f32.mrf.mxu0
      %v789 = vpop.f32.mrf.mxu0
      %v790 = vpop.f32.mrf.mxu0
      %791 = vdwg.mxu0
      %v792 = vld [vmem:[#allocation3 + $0x8] sm:$0x3]
      %v793 = vpack.c.bf16 %v792, %v792
      %s794 = scalar_lea.vmem %s4, 64
      %v795 = vld [vmem:[%s794] sm:$0xf]
      %v796 = vld [vmem:[%s794 + $0x4] sm:$0xf]
      %v797 = vld [vmem:[%s794 + $0x8] sm:$0xf]
      %v798 = vld [vmem:[%s794 + $0xc] sm:$0xf]
      %v799 = vld [vmem:[%s794 + $0x10] sm:$0xf]
      %v800 = vld [vmem:[%s794 + $0x14] sm:$0xf]
      %v801 = vld [vmem:[%s794 + $0x18] sm:$0xf]
      %v802 = vld [vmem:[%s794 + $0x1c] sm:$0xf]
      %v811 = vunpack.c.l.b16 %v795
      %v812 = vunpack.c.l.b16 %v796
      %v813 = vunpack.c.l.b16 %v797
      %v814 = vunpack.c.l.b16 %v798
      %v815 = vunpack.c.l.b16 %v799
      %v816 = vunpack.c.l.b16 %v800
      %v817 = vunpack.c.l.b16 %v801
      %v818 = vunpack.c.l.b16 %v802
      %v819 = vpack.c.b16 %v812, %v811
      %v820 = vpack.c.b16 %v814, %v813
      %v821 = vpack.c.b16 %v816, %v815
      %v822 = vpack.c.b16 %v818, %v817
      %v828 = vsel %vm430, %v793, 0
      %830 = vmatprep.subr.bf16.mxu0 0
      %831 = vmatpush1.bf16.msra.mxu0 0
      %832 = vmatprep.subr.bf16.mxu0 0
      %833 = vmatpush1.bf16.msra.mxu0 0
      %834 = vmatprep.subr.bf16.mxu0 0
      %835 = vmatpush1.bf16.msra.mxu0 0
      %836 = vmatprep.subr.bf16.mxu0 0
      %837 = vmatpush1.bf16.msra.mxu0 0
      %838 = vmatprep.subr.bf16.mxu0 0
      %839 = vmatpush1.bf16.msra.mxu0 %v822
      %840 = vmatprep.subr.bf16.mxu0 0
      %841 = vmatpush1.bf16.msra.mxu0 %v821
      %842 = vmatprep.subr.bf16.mxu0 0
      %843 = vmatpush1.bf16.msra.mxu0 %v820
      %844 = vmatprep.subr.bf16.mxu0 0
      %845 = vmatpush1.bf16.msra.mxu0 %v819
      %846 = vmatprep.subr.bf16.mxu0 0
      %847 = vmatpush2.bf16.msra.mxu0 0
      %848 = vmatprep.subr.bf16.mxu0 0
      %849 = vmatpush2.bf16.msra.mxu0 0
      %850 = vmatprep.subr.bf16.mxu0 0
      %851 = vmatpush2.bf16.msra.mxu0 0
      %852 = vmatprep.subr.bf16.mxu0 0
      %853 = vmatpush2.bf16.msra.mxu0 0
      %854 = vmatprep.subr.bf16.mxu0 0
      %855 = vmatpush2.bf16.msra.mxu0 0
      %856 = vmatprep.subr.bf16.mxu0 0
      %857 = vmatpush2.bf16.msra.mxu0 0
      %858 = vmatprep.subr.bf16.mxu0 0
      %859 = vmatpush2.bf16.msra.mxu0 0
      %860 = vmatprep.subr.bf16.mxu0 0
      %861 = vmatpush2.bf16.msra.mxu0 0
      %862 = vmatprep.mubr.bf16.mxu0 0
      %863 = vmatmul.mubr.bf16.gmra.mxu0 %v828
      %v864 = vpop.f32.mrf.mxu0
      %v865 = vadd.f32 0.0, %v864
      %v866 = vpop.f32.mrf.mxu0
      %v867 = vpop.f32.mrf.mxu0
      %v868 = vpop.f32.mrf.mxu0
      %869 = vdwg.mxu0
      %v870 = vadd.f32 %v787, %v865
      %v871 = vld [vmem:[%s5] sm:$0x1]
      %v873 = vlaneseq
      %v874 = vshrl.u32 %v873, 7
      %v875 = vsub.s32 0, %v874
      %v876 = vrot.slane %v871, %v875
      %v878 = vmul.f32 %v870, %v876
      %v879 = vld [vmem:[%s6] sm:$0x1]
      %v881 = vlaneseq
      %v882 = vshrl.u32 %v881, 7
      %v883 = vsub.s32 0, %v882
      %v884 = vrot.slane %v879, %v883
      %v886 = vadd.f32 %v878, %v884
      %v887 = vsel %vm378, %v886, 0.0
      %v888 = vrot.slane %v887, 4
      %v889 = vadd.f32 %v887, %v888
      %v890 = vrot.slane %v889, 2
      %v891 = vadd.f32 %v889, %v890
      %v892 = vrot.slane %v891, 1
      %v893 = vadd.f32 %v891, %v892
      %v894 = vrcp.pop 2.0
      %v895 = vmul.f32 %v893, %v894
      %v896 = vpack.c.bf16 %v895, %v895
      %v897 = vld [vmem:[%s7] sm:$0xf]
      %v898 = vld [vmem:[%s7 + $0x4] sm:$0xf]
      %v899 = vld [vmem:[%s7 + $0x8] sm:$0xf]
      %v900 = vld [vmem:[%s7 + $0xc] sm:$0xf]
      %v901 = vld [vmem:[%s7 + $0x10] sm:$0xf]
      %v902 = vld [vmem:[%s7 + $0x14] sm:$0xf]
      %v903 = vld [vmem:[%s7 + $0x18] sm:$0xf]
      %v904 = vld [vmem:[%s7 + $0x1c] sm:$0xf]
      %v913 = vunpack.c.l.b16 %v897
      %v914 = vunpack.c.l.b16 %v898
      %v915 = vunpack.c.l.b16 %v899
      %v916 = vunpack.c.l.b16 %v900
      %v917 = vunpack.c.l.b16 %v901
      %v918 = vunpack.c.l.b16 %v902
      %v919 = vunpack.c.l.b16 %v903
      %v920 = vunpack.c.l.b16 %v904
      %v921 = vpack.c.b16 %v914, %v913
      %v922 = vpack.c.b16 %v916, %v915
      %v923 = vpack.c.b16 %v918, %v917
      %v924 = vpack.c.b16 %v920, %v919
      %v930 = vsel %vm430, %v896, 0
      %932 = vmatprep.subr.bf16.mxu0 0
      %933 = vmatpush1.bf16.msra.mxu0 0
      %934 = vmatprep.subr.bf16.mxu0 0
      %935 = vmatpush1.bf16.msra.mxu0 0
      %936 = vmatprep.subr.bf16.mxu0 0
      %937 = vmatpush1.bf16.msra.mxu0 0
      %938 = vmatprep.subr.bf16.mxu0 0
      %939 = vmatpush1.bf16.msra.mxu0 0
      %940 = vmatprep.subr.bf16.mxu0 0
      %941 = vmatpush1.bf16.msra.mxu0 %v924
      %942 = vmatprep.subr.bf16.mxu0 0
      %943 = vmatpush1.bf16.msra.mxu0 %v923
      %944 = vmatprep.subr.bf16.mxu0 0
      %945 = vmatpush1.bf16.msra.mxu0 %v922
      %946 = vmatprep.subr.bf16.mxu0 0
      %947 = vmatpush1.bf16.msra.mxu0 %v921
      %948 = vmatprep.subr.bf16.mxu0 0
      %949 = vmatpush2.bf16.msra.mxu0 0
      %950 = vmatprep.subr.bf16.mxu0 0
      %951 = vmatpush2.bf16.msra.mxu0 0
      %952 = vmatprep.subr.bf16.mxu0 0
      %953 = vmatpush2.bf16.msra.mxu0 0
      %954 = vmatprep.subr.bf16.mxu0 0
      %955 = vmatpush2.bf16.msra.mxu0 0
      %956 = vmatprep.subr.bf16.mxu0 0
      %957 = vmatpush2.bf16.msra.mxu0 0
      %958 = vmatprep.subr.bf16.mxu0 0
      %959 = vmatpush2.bf16.msra.mxu0 0
      %960 = vmatprep.subr.bf16.mxu0 0
      %961 = vmatpush2.bf16.msra.mxu0 0
      %962 = vmatprep.subr.bf16.mxu0 0
      %963 = vmatpush2.bf16.msra.mxu0 0
      %964 = vmatprep.mubr.bf16.mxu0 0
      %965 = vmatmul.mubr.bf16.gmra.mxu0 %v930
      %v966 = vpop.f32.mrf.mxu0
      %v967 = vadd.f32 0.0, %v966
      %v968 = vpop.f32.mrf.mxu0
      %v969 = vpop.f32.mrf.mxu0
      %v970 = vpop.f32.mrf.mxu0
      %971 = vdwg.mxu0
      %v972 = vxor.u32 %v967, 2147483648
      %v973 = vmul.f32 %v972, 1.442695
      %v974 = vpow.pop %v973
      %v975 = vadd.f32 %v974, 1.0
      %v976 = vrcp.pop %v975
      %v977 = vmul.f32 1.0, %v976
      %v978 = vlaneseq
      %v979 = vshrl.u32 %v978, 7
      %v980 = vsub.s32 0, %v979
      %v981 = vrot.slane %v977, %v980
      %v982 = vmul.f32 %v886, %v981
      %v983 = vld [vmem:[%s8] sm:$0xf]
      %v984 = vld [vmem:[%s8 + $0x4] sm:$0xf]
      %v985 = vld [vmem:[%s8 + $0x8] sm:$0xf]
      %v986 = vld [vmem:[%s8 + $0xc] sm:$0xf]
      %v987 = vld [vmem:[%s8 + $0x10] sm:$0xf]
      %v988 = vld [vmem:[%s8 + $0x14] sm:$0xf]
      %v989 = vld [vmem:[%s8 + $0x18] sm:$0xf]
      %v990 = vld [vmem:[%s8 + $0x1c] sm:$0xf]
      %v999 = vunpack.c.l.b16 %v983
      %v1000 = vunpack.c.l.b16 %v984
      %v1001 = vunpack.c.l.b16 %v985
      %v1002 = vunpack.c.l.b16 %v986
      %v1003 = vunpack.c.l.b16 %v987
      %v1004 = vunpack.c.l.b16 %v988
      %v1005 = vunpack.c.l.b16 %v989
      %v1006 = vunpack.c.l.b16 %v990
      %v1007 = vpack.c.b16 %v1000, %v999
      %v1008 = vpack.c.b16 %v1002, %v1001
      %v1009 = vpack.c.b16 %v1004, %v1003
      %v1010 = vpack.c.b16 %v1006, %v1005
      %1015 = vmatprep.subr.bf16.mxu0 0
      %1016 = vmatpush1.bf16.msra.mxu0 0
      %1017 = vmatprep.subr.bf16.mxu0 0
      %1018 = vmatpush1.bf16.msra.mxu0 0
      %1019 = vmatprep.subr.bf16.mxu0 0
      %1020 = vmatpush1.bf16.msra.mxu0 0
      %1021 = vmatprep.subr.bf16.mxu0 0
      %1022 = vmatpush1.bf16.msra.mxu0 0
      %1023 = vmatprep.subr.bf16.mxu0 0
      %1024 = vmatpush1.bf16.msra.mxu0 %v1010
      %1025 = vmatprep.subr.bf16.mxu0 0
      %1026 = vmatpush1.bf16.msra.mxu0 %v1009
      %1027 = vmatprep.subr.bf16.mxu0 0
      %1028 = vmatpush1.bf16.msra.mxu0 %v1008
      %1029 = vmatprep.subr.bf16.mxu0 0
      %1030 = vmatpush1.bf16.msra.mxu0 %v1007
      %1031 = vmatprep.subr.bf16.mxu0 0
      %1032 = vmatpush2.bf16.msra.mxu0 0
      %1033 = vmatprep.subr.bf16.mxu0 0
      %1034 = vmatpush2.bf16.msra.mxu0 0
      %1035 = vmatprep.subr.bf16.mxu0 0
      %1036 = vmatpush2.bf16.msra.mxu0 0
      %1037 = vmatprep.subr.bf16.mxu0 0
      %1038 = vmatpush2.bf16.msra.mxu0 0
      %1039 = vmatprep.subr.bf16.mxu0 0
      %1040 = vmatpush2.bf16.msra.mxu0 0
      %1041 = vmatprep.subr.bf16.mxu0 0
      %1042 = vmatpush2.bf16.msra.mxu0 0
      %1043 = vmatprep.subr.bf16.mxu0 0
      %1044 = vmatpush2.bf16.msra.mxu0 0
      %1045 = vmatprep.subr.bf16.mxu0 0
      %1046 = vmatpush2.bf16.msra.mxu0 0
      %1047 = vmatprep.mubr.bf16.mxu0 0
      %1048 = vmatmul.mubr.bf16.gmra.mxu0 %v499
      %v1049 = vpop.f32.mrf.mxu0
      %v1050 = vadd.f32 0.0, %v1049
      %v1051 = vpop.f32.mrf.mxu0
      %v1052 = vpop.f32.mrf.mxu0
      %v1053 = vpop.f32.mrf.mxu0
      %1054 = vdwg.mxu0
      %v1055 = vld [vmem:[%s9] sm:$0x1]
      %v1057 = vlaneseq
      %v1058 = vshrl.u32 %v1057, 7
      %v1059 = vsub.s32 0, %v1058
      %v1060 = vrot.slane %v1055, %v1059
      %v1062 = vmul.f32 %v1050, %v1060
      %v1063 = vld [vmem:[%s10] sm:$0x1]
      %v1065 = vlaneseq
      %v1066 = vshrl.u32 %v1065, 7
      %v1067 = vsub.s32 0, %v1066
      %v1068 = vrot.slane %v1063, %v1067
      %v1070 = vadd.f32 %v1062, %v1068
      %v1071 = vadd.f32 %v982, %v1070
      %v1072 = vmax.f32 %v1071, 0.0
      %v1073 = vpack.c.bf16 %v1072, %v1072
      %vm1074 = vcmask 516096
      %1075 = vst.msk [vmem:[%s376] sm:$0x1] %vm1074, %v1073
      %p1076 = scmp.lt.s32.totalorder %s22, 1
      %s1077 = scalar_select %p1076, %s22, 1
      %s1078 = scalar_lea.vmem %s11, %s1077
      // Predicated region
      $region65: #{mini_eca_restcn_forward.8} parent=63 // pred_check
        %p1079 = pneg %p276
      $region66: #{mini_eca_restcn_forward.8} parent=63 // pred_check_branch
        %1081 = sbr.rel (%p1079) target = $region68
      $region67: #{mini_eca_restcn_forward.8} parent=63 // pred_region
        _
      $region68: #{mini_eca_restcn_forward.8} parent=63 // pred_fallthru
        _
    $region64: #{mini_eca_restcn_forward.8} parent=5 // pred_fallthru
      _
    %p1082 = scmp.le.s32.totalorder 2, %s17
    // Predicated region
    $region69: #{mini_eca_restcn_forward.8} parent=5 // pred_check
      %p1083 = pneg %p1082
    $region70: #{mini_eca_restcn_forward.8} parent=5 // pred_check_branch
      %1085 = sbr.rel (%p1083) target = $region72
    $region71: #{mini_eca_restcn_forward.8} parent=5 // pred_region
      %s1086 = ssub.s32 %s17, 2
      // Predicated region
      $region73: #{mini_eca_restcn_forward.8} parent=71 // pred_check
        %p1087 = pneg %p282
      $region74: #{mini_eca_restcn_forward.8} parent=71 // pred_check_branch
        %1089 = sbr.rel (%p1087) target = $region76
      $region75: #{mini_eca_restcn_forward.8} parent=71 // pred_region
        %p1090 = scmp.lt.s32.totalorder %s23, 1
        %s1091 = scalar_select %p1090, %s23, 1
        %s1092 = scalar_lea.vmem %s11, %s1091
      $region76: #{mini_eca_restcn_forward.8} parent=71 // pred_fallthru
        _
    $region72: #{mini_eca_restcn_forward.8} parent=5 // pred_fallthru
      _
  $region6: #{mini_eca_restcn_forward.8} parent=0 // loop_footer
    %s21 = sadd.s32 1, %s17
  $region7: #{mini_eca_restcn_forward.8} parent=0 // loop_footer_branch
    %16 = sbr.rel target = $region3
  $region8: #{mini_eca_restcn_forward.8} parent=0 // loop_exit
    _

// kernel: mini_eca_restcn_forward.9
$region0: #{mini_eca_restcn_forward.9}
  #allocation0 [shape = 'u32[]', space=smem, size = 0x4, offset = 0x4, fixed_abs, tag = 'smem constant byte address 0x4 - core index']
  #allocation1 [shape = 'u32[144,128]{1,0:T(1,128)}', space=vmem, size = 0x12000, scoped, tag = 'internal scratch']
  #allocation2 [shape = 'f32[9,64]{1,0:T(8,128)}', space=vmem, size = 0x2000, scoped, tag = 'scratch operand']
  #allocation3 [shape = 'f32[17,64]{1,0:T(8,128)}', space=vmem, size = 0x3000, scoped, tag = 'scratch operand']
  %s0 = inlined_call_operand.vmem [shape: bf16[2,1,64], index: 0, kind: input, shape index: {}]
  %s1 = inlined_call_operand.vmem [shape: bf16[3,64,64], index: 1, kind: input, shape index: {}]
  %s2 = inlined_call_operand.vmem [shape: f32[1,64], index: 2, kind: input, shape index: {}]
  %s3 = inlined_call_operand.vmem [shape: f32[1,64], index: 3, kind: input, shape index: {}]
  %s4 = inlined_call_operand.vmem [shape: bf16[3,64,64], index: 4, kind: input, shape index: {}]
  %s5 = inlined_call_operand.vmem [shape: f32[1,64], index: 5, kind: input, shape index: {}]
  %s6 = inlined_call_operand.vmem [shape: f32[1,64], index: 6, kind: input, shape index: {}]
  %s7 = inlined_call_operand.vmem [shape: bf16[64,64], index: 7, kind: input, shape index: {}]
  %s8 = inlined_call_operand.vmem [shape: bf16[64,64], index: 8, kind: input, shape index: {}]
  %s9 = inlined_call_operand.vmem [shape: f32[1,64], index: 9, kind: input, shape index: {}]
  %s10 = inlined_call_operand.vmem [shape: f32[1,64], index: 10, kind: input, shape index: {}]
  %s11 = inlined_call_operand.vmem [shape: bf16[64,64], index: 11, kind: input, shape index: {}]
  %s12 = inlined_call_operand.vmem [shape: f32[1,64], index: 12, kind: input, shape index: {}]
  %s13 = inlined_call_operand.vmem [shape: bf16[64,10], index: 13, kind: input, shape index: {}]
  %s14 = inlined_call_operand.vmem [shape: f32[1,10], index: 14, kind: input, shape index: {}]
  %s15 = inlined_call_operand.hbm [shape: f32[2,1,10], index: 15, kind: output, shape index: {}]
  %s16 = sld [smem:[#allocation0]]
  $region93: #{mini_eca_restcn_forward.9} parent=0
    _
  %s18 = ssub.s32 1, %s16
  %s19 = scalar_select 0, %s18, %s16
  $region1: #{mini_eca_restcn_forward.9} parent=0
    #allocation4 [shape = 'u8[1024]{0}', space=vmem, size = 0x400, scoped, tag = 'output window, operand 0']
    #allocation5 [shape = 's32[2]{0}', space=sflag, size = 0x8, scoped, tag = 'scoped memory for mini_eca_restcn_forward.9']
    %20 = vsyncpa [#allocation5], 0
    %s21 = scalar_lea.sflag [#allocation5], 1
    %22 = vsyncpa %s21, 0
    loop: start=0, step=1, limit=4
    $region2: #{mini_eca_restcn_forward.9} parent=1 // loop_pre_header
      _
    $region3: #{mini_eca_restcn_forward.9} parent=1 // loop_header
      %s24 = sphi 0, %s28
      %p25 = scmp.ge.s32.totalorder %s24, 4
      %s34 = sphi 0, %s36
      %s37 = sphi 0, %s34
      %s38 = sphi 0, %s37
      %s54 = sphi 0, %s38
      %s58 = sphi 0, %s58
      %s60 = sphi 0, %s58
      %s61 = sphi 0, %s60
      %s75 = sphi 0, %s61
      %s79 = sphi 0, %s79
      %s81 = sphi 0, %s79
      %s82 = sphi 0, %s81
      %s96 = sphi 0, %s82
      %s100 = sphi 0, %s100
      %s102 = sphi 0, %s100
      %s103 = sphi 0, %s102
      %s117 = sphi 0, %s103
      %s121 = sphi 0, %s121
      %s123 = sphi 0, %s121
      %s124 = sphi 0, %s123
      %s138 = sphi 0, %s124
      %s142 = sphi 0, %s142
      %s144 = sphi 0, %s142
      %s145 = sphi 0, %s144
      %s159 = sphi 0, %s145
      %s163 = sphi 0, %s163
      %s165 = sphi 0, %s163
      %s166 = sphi 0, %s165
      %s180 = sphi 0, %s166
      %s184 = sphi 0, %s184
      %s186 = sphi 0, %s184
      %s187 = sphi 0, %s186
      %s201 = sphi 0, %s187
      %s205 = sphi 0, %s205
      %s207 = sphi 0, %s205
      %s208 = sphi 0, %s207
      %s222 = sphi 0, %s208
      %s226 = sphi 0, %s226
      %s228 = sphi 0, %s226
      %s229 = sphi 0, %s228
      %s243 = sphi 0, %s229
      %s247 = sphi 0, %s247
      %s249 = sphi 0, %s247
      %s250 = sphi 0, %s249
      %s264 = sphi 0, %s250
      %s268 = sphi 0, %s268
      %s270 = sphi 0, %s268
      %s271 = sphi 0, %s270
      %s285 = sphi 0, %s271
      %s289 = sphi 0, %s289
      %s291 = sphi 0, %s289
      %s292 = sphi 0, %s291
      %s306 = sphi 0, %s292
      %s310 = sphi 0, %s310
      %s312 = sphi 0, %s310
      %s313 = sphi 0, %s312
      %s327 = sphi 0, %s313
      %s331 = sphi 0, %s331
      %s333 = sphi 0, %s331
      %s334 = sphi 0, %s333
      %s348 = sphi 0, %s334
      %s354 = sphi 0, %s356
      %s357 = sphi 0, %s354
      %s358 = sphi 0, %s357
      %s374 = sphi 0, %s358
    $region4: #{mini_eca_restcn_forward.9} parent=1 // loop_header_branch
      %27 = sbr.rel (%p25) target = $region8
    $region5: #{mini_eca_restcn_forward.9} parent=1 // loop_body
      %s29 = ssub.s32 %s24, 1
      %s30 = ssub.s32 %s24, 2
      %s31 = sadd.s32 %s24, 1
      %s32 = ssub.s32 %s24, %s31
      %p33 = scmp.eq.s32.totalorder %s32, 0
      %s35 = sadd.s32 %s34, 1
      %s36 = scalar_select %p33, %s34, %s35
      %p39 = pneg %p33
      %p40 = scmp.eq.s32.totalorder %s24, 1
      %p41 = por %p39, %p40
      %p42 = scmp.ne.s32.totalorder %s34, %s37
      %p43 = scmp.eq.s32.totalorder %s24, 0
      %p44 = por %p42, %p43
      %p45 = scmp.ne.s32.totalorder %s34, %s37
      %p46 = scmp.eq.s32.totalorder %s29, 1
      %p47 = por %p45, %p46
      %p48 = scmp.ne.s32.totalorder %s37, %s38
      %p49 = scmp.eq.s32.totalorder %s29, 0
      %p50 = por %p48, %p49
      %p51 = scmp.ne.s32.totalorder %s37, %s38
      %p52 = scmp.eq.s32.totalorder %s30, 1
      %p53 = por %p51, %p52
      %p55 = scmp.ne.s32.totalorder %s38, %s54
      %p56 = scmp.eq.s32.totalorder %s30, 0
      %p57 = por %p55, %p56
      %s59 = sadd.s32 %s58, 1
      %p62 = scmp.eq.s32.totalorder %s24, 1
      %p63 = scmp.ne.s32.totalorder %s58, %s60
      %p64 = scmp.eq.s32.totalorder %s24, 0
      %p65 = por %p63, %p64
      %p66 = scmp.ne.s32.totalorder %s58, %s60
      %p67 = scmp.eq.s32.totalorder %s29, 1
      %p68 = por %p66, %p67
      %p69 = scmp.ne.s32.totalorder %s60, %s61
      %p70 = scmp.eq.s32.totalorder %s29, 0
      %p71 = por %p69, %p70
      %p72 = scmp.ne.s32.totalorder %s60, %s61
      %p73 = scmp.eq.s32.totalorder %s30, 1
      %p74 = por %p72, %p73
      %p76 = scmp.ne.s32.totalorder %s61, %s75
      %p77 = scmp.eq.s32.totalorder %s30, 0
      %p78 = por %p76, %p77
      %s80 = sadd.s32 %s79, 1
      %p83 = scmp.eq.s32.totalorder %s24, 1
      %p84 = scmp.ne.s32.totalorder %s79, %s81
      %p85 = scmp.eq.s32.totalorder %s24, 0
      %p86 = por %p84, %p85
      %p87 = scmp.ne.s32.totalorder %s79, %s81
      %p88 = scmp.eq.s32.totalorder %s29, 1
      %p89 = por %p87, %p88
      %p90 = scmp.ne.s32.totalorder %s81, %s82
      %p91 = scmp.eq.s32.totalorder %s29, 0
      %p92 = por %p90, %p91
      %p93 = scmp.ne.s32.totalorder %s81, %s82
      %p94 = scmp.eq.s32.totalorder %s30, 1
      %p95 = por %p93, %p94
      %p97 = scmp.ne.s32.totalorder %s82, %s96
      %p98 = scmp.eq.s32.totalorder %s30, 0
      %p99 = por %p97, %p98
      %s101 = sadd.s32 %s100, 1
      %p104 = scmp.eq.s32.totalorder %s24, 1
      %p105 = scmp.ne.s32.totalorder %s100, %s102
      %p106 = scmp.eq.s32.totalorder %s24, 0
      %p107 = por %p105, %p106
      %p108 = scmp.ne.s32.totalorder %s100, %s102
      %p109 = scmp.eq.s32.totalorder %s29, 1
      %p110 = por %p108, %p109
      %p111 = scmp.ne.s32.totalorder %s102, %s103
      %p112 = scmp.eq.s32.totalorder %s29, 0
      %p113 = por %p111, %p112
      %p114 = scmp.ne.s32.totalorder %s102, %s103
      %p115 = scmp.eq.s32.totalorder %s30, 1
      %p116 = por %p114, %p115
      %p118 = scmp.ne.s32.totalorder %s103, %s117
      %p119 = scmp.eq.s32.totalorder %s30, 0
      %p120 = por %p118, %p119
      %s122 = sadd.s32 %s121, 1
      %p125 = scmp.eq.s32.totalorder %s24, 1
      %p126 = scmp.ne.s32.totalorder %s121, %s123
      %p127 = scmp.eq.s32.totalorder %s24, 0
      %p128 = por %p126, %p127
      %p129 = scmp.ne.s32.totalorder %s121, %s123
      %p130 = scmp.eq.s32.totalorder %s29, 1
      %p131 = por %p129, %p130
      %p132 = scmp.ne.s32.totalorder %s123, %s124
      %p133 = scmp.eq.s32.totalorder %s29, 0
      %p134 = por %p132, %p133
      %p135 = scmp.ne.s32.totalorder %s123, %s124
      %p136 = scmp.eq.s32.totalorder %s30, 1
      %p137 = por %p135, %p136
      %p139 = scmp.ne.s32.totalorder %s124, %s138
      %p140 = scmp.eq.s32.totalorder %s30, 0
      %p141 = por %p139, %p140
      %s143 = sadd.s32 %s142, 1
      %p146 = scmp.eq.s32.totalorder %s24, 1
      %p147 = scmp.ne.s32.totalorder %s142, %s144
      %p148 = scmp.eq.s32.totalorder %s24, 0
      %p149 = por %p147, %p148
      %p150 = scmp.ne.s32.totalorder %s142, %s144
      %p151 = scmp.eq.s32.totalorder %s29, 1
      %p152 = por %p150, %p151
      %p153 = scmp.ne.s32.totalorder %s144, %s145
      %p154 = scmp.eq.s32.totalorder %s29, 0
      %p155 = por %p153, %p154
      %p156 = scmp.ne.s32.totalorder %s144, %s145
      %p157 = scmp.eq.s32.totalorder %s30, 1
      %p158 = por %p156, %p157
      %p160 = scmp.ne.s32.totalorder %s145, %s159
      %p161 = scmp.eq.s32.totalorder %s30, 0
      %p162 = por %p160, %p161
      %s164 = sadd.s32 %s163, 1
      %p167 = scmp.eq.s32.totalorder %s24, 1
      %p168 = scmp.ne.s32.totalorder %s163, %s165
      %p169 = scmp.eq.s32.totalorder %s24, 0
      %p170 = por %p168, %p169
      %p171 = scmp.ne.s32.totalorder %s163, %s165
      %p172 = scmp.eq.s32.totalorder %s29, 1
      %p173 = por %p171, %p172
      %p174 = scmp.ne.s32.totalorder %s165, %s166
      %p175 = scmp.eq.s32.totalorder %s29, 0
      %p176 = por %p174, %p175
      %p177 = scmp.ne.s32.totalorder %s165, %s166
      %p178 = scmp.eq.s32.totalorder %s30, 1
      %p179 = por %p177, %p178
      %p181 = scmp.ne.s32.totalorder %s166, %s180
      %p182 = scmp.eq.s32.totalorder %s30, 0
      %p183 = por %p181, %p182
      %s185 = sadd.s32 %s184, 1
      %p188 = scmp.eq.s32.totalorder %s24, 1
      %p189 = scmp.ne.s32.totalorder %s184, %s186
      %p190 = scmp.eq.s32.totalorder %s24, 0
      %p191 = por %p189, %p190
      %p192 = scmp.ne.s32.totalorder %s184, %s186
      %p193 = scmp.eq.s32.totalorder %s29, 1
      %p194 = por %p192, %p193
      %p195 = scmp.ne.s32.totalorder %s186, %s187
      %p196 = scmp.eq.s32.totalorder %s29, 0
      %p197 = por %p195, %p196
      %p198 = scmp.ne.s32.totalorder %s186, %s187
      %p199 = scmp.eq.s32.totalorder %s30, 1
      %p200 = por %p198, %p199
      %p202 = scmp.ne.s32.totalorder %s187, %s201
      %p203 = scmp.eq.s32.totalorder %s30, 0
      %p204 = por %p202, %p203
      %s206 = sadd.s32 %s205, 1
      %p209 = scmp.eq.s32.totalorder %s24, 1
      %p210 = scmp.ne.s32.totalorder %s205, %s207
      %p211 = scmp.eq.s32.totalorder %s24, 0
      %p212 = por %p210, %p211
      %p213 = scmp.ne.s32.totalorder %s205, %s207
      %p214 = scmp.eq.s32.totalorder %s29, 1
      %p215 = por %p213, %p214
      %p216 = scmp.ne.s32.totalorder %s207, %s208
      %p217 = scmp.eq.s32.totalorder %s29, 0
      %p218 = por %p216, %p217
      %p219 = scmp.ne.s32.totalorder %s207, %s208
      %p220 = scmp.eq.s32.totalorder %s30, 1
      %p221 = por %p219, %p220
      %p223 = scmp.ne.s32.totalorder %s208, %s222
      %p224 = scmp.eq.s32.totalorder %s30, 0
      %p225 = por %p223, %p224
      %s227 = sadd.s32 %s226, 1
      %p230 = scmp.eq.s32.totalorder %s24, 1
      %p231 = scmp.ne.s32.totalorder %s226, %s228
      %p232 = scmp.eq.s32.totalorder %s24, 0
      %p233 = por %p231, %p232
      %p234 = scmp.ne.s32.totalorder %s226, %s228
      %p235 = scmp.eq.s32.totalorder %s29, 1
      %p236 = por %p234, %p235
      %p237 = scmp.ne.s32.totalorder %s228, %s229
      %p238 = scmp.eq.s32.totalorder %s29, 0
      %p239 = por %p237, %p238
      %p240 = scmp.ne.s32.totalorder %s228, %s229
      %p241 = scmp.eq.s32.totalorder %s30, 1
      %p242 = por %p240, %p241
      %p244 = scmp.ne.s32.totalorder %s229, %s243
      %p245 = scmp.eq.s32.totalorder %s30, 0
      %p246 = por %p244, %p245
      %s248 = sadd.s32 %s247, 1
      %p251 = scmp.eq.s32.totalorder %s24, 1
      %p252 = scmp.ne.s32.totalorder %s247, %s249
      %p253 = scmp.eq.s32.totalorder %s24, 0
      %p254 = por %p252, %p253
      %p255 = scmp.ne.s32.totalorder %s247, %s249
      %p256 = scmp.eq.s32.totalorder %s29, 1
      %p257 = por %p255, %p256
      %p258 = scmp.ne.s32.totalorder %s249, %s250
      %p259 = scmp.eq.s32.totalorder %s29, 0
      %p260 = por %p258, %p259
      %p261 = scmp.ne.s32.totalorder %s249, %s250
      %p262 = scmp.eq.s32.totalorder %s30, 1
      %p263 = por %p261, %p262
      %p265 = scmp.ne.s32.totalorder %s250, %s264
      %p266 = scmp.eq.s32.totalorder %s30, 0
      %p267 = por %p265, %p266
      %s269 = sadd.s32 %s268, 1
      %p272 = scmp.eq.s32.totalorder %s24, 1
      %p273 = scmp.ne.s32.totalorder %s268, %s270
      %p274 = scmp.eq.s32.totalorder %s24, 0
      %p275 = por %p273, %p274
      %p276 = scmp.ne.s32.totalorder %s268, %s270
      %p277 = scmp.eq.s32.totalorder %s29, 1
      %p278 = por %p276, %p277
      %p279 = scmp.ne.s32.totalorder %s270, %s271
      %p280 = scmp.eq.s32.totalorder %s29, 0
      %p281 = por %p279, %p280
      %p282 = scmp.ne.s32.totalorder %s270, %s271
      %p283 = scmp.eq.s32.totalorder %s30, 1
      %p284 = por %p282, %p283
      %p286 = scmp.ne.s32.totalorder %s271, %s285
      %p287 = scmp.eq.s32.totalorder %s30, 0
      %p288 = por %p286, %p287
      %s290 = sadd.s32 %s289, 1
      %p293 = scmp.eq.s32.totalorder %s24, 1
      %p294 = scmp.ne.s32.totalorder %s289, %s291
      %p295 = scmp.eq.s32.totalorder %s24, 0
      %p296 = por %p294, %p295
      %p297 = scmp.ne.s32.totalorder %s289, %s291
      %p298 = scmp.eq.s32.totalorder %s29, 1
      %p299 = por %p297, %p298
      %p300 = scmp.ne.s32.totalorder %s291, %s292
      %p301 = scmp.eq.s32.totalorder %s29, 0
      %p302 = por %p300, %p301
      %p303 = scmp.ne.s32.totalorder %s291, %s292
      %p304 = scmp.eq.s32.totalorder %s30, 1
      %p305 = por %p303, %p304
      %p307 = scmp.ne.s32.totalorder %s292, %s306
      %p308 = scmp.eq.s32.totalorder %s30, 0
      %p309 = por %p307, %p308
      %s311 = sadd.s32 %s310, 1
      %p314 = scmp.eq.s32.totalorder %s24, 1
      %p315 = scmp.ne.s32.totalorder %s310, %s312
      %p316 = scmp.eq.s32.totalorder %s24, 0
      %p317 = por %p315, %p316
      %p318 = scmp.ne.s32.totalorder %s310, %s312
      %p319 = scmp.eq.s32.totalorder %s29, 1
      %p320 = por %p318, %p319
      %p321 = scmp.ne.s32.totalorder %s312, %s313
      %p322 = scmp.eq.s32.totalorder %s29, 0
      %p323 = por %p321, %p322
      %p324 = scmp.ne.s32.totalorder %s312, %s313
      %p325 = scmp.eq.s32.totalorder %s30, 1
      %p326 = por %p324, %p325
      %p328 = scmp.ne.s32.totalorder %s313, %s327
      %p329 = scmp.eq.s32.totalorder %s30, 0
      %p330 = por %p328, %p329
      %s332 = sadd.s32 %s331, 1
      %p335 = scmp.eq.s32.totalorder %s24, 1
      %p336 = scmp.ne.s32.totalorder %s331, %s333
      %p337 = scmp.eq.s32.totalorder %s24, 0
      %p338 = por %p336, %p337
      %p339 = scmp.ne.s32.totalorder %s331, %s333
      %p340 = scmp.eq.s32.totalorder %s29, 1
      %p341 = por %p339, %p340
      %p342 = scmp.ne.s32.totalorder %s333, %s334
      %p343 = scmp.eq.s32.totalorder %s29, 0
      %p344 = por %p342, %p343
      %p345 = scmp.ne.s32.totalorder %s333, %s334
      %p346 = scmp.eq.s32.totalorder %s30, 1
      %p347 = por %p345, %p346
      %p349 = scmp.ne.s32.totalorder %s334, %s348
      %p350 = scmp.eq.s32.totalorder %s30, 0
      %p351 = por %p349, %p350
      %s352 = ssub.s32 %s24, %s31
      %p353 = scmp.eq.s32.totalorder %s352, 0
      %s355 = sadd.s32 %s354, 1
      %s356 = scalar_select %p353, %s354, %s355
      %p359 = pneg %p353
      %p360 = scmp.eq.s32.totalorder %s24, 1
      %p361 = por %p359, %p360
      %p362 = scmp.ne.s32.totalorder %s354, %s357
      %p363 = scmp.eq.s32.totalorder %s24, 0
      %p364 = por %p362, %p363
      %p365 = scmp.ne.s32.totalorder %s354, %s357
      %p366 = scmp.eq.s32.totalorder %s29, 1
      %p367 = por %p365, %p366
      %p368 = scmp.ne.s32.totalorder %s357, %s358
      %p369 = scmp.eq.s32.totalorder %s29, 0
      %p370 = por %p368, %p369
      %p371 = scmp.ne.s32.totalorder %s357, %s358
      %p372 = scmp.eq.s32.totalorder %s30, 1
      %p373 = por %p371, %p372
      %p375 = scmp.ne.s32.totalorder %s358, %s374
      %p376 = scmp.eq.s32.totalorder %s30, 0
      %p377 = por %p375, %p376
      %p378 = scmp.le.s32.totalorder 1, %s24
      %p379 = scmp.lt.s32.totalorder %s24, 3
      %p380 = pnand %p378, %p379
      %p381 = pneg %p380
      // Predicated region
      $region9: #{mini_eca_restcn_forward.9} parent=5 // pred_check
        _
      $region10: #{mini_eca_restcn_forward.9} parent=5 // pred_check_branch
        %383 = sbr.rel (%p380) target = $region12
      $region11: #{mini_eca_restcn_forward.9} parent=5 // pred_region
        %s384 = ssub.s32 %s24, 1
        // Predicated region
        $region13: #{mini_eca_restcn_forward.9} parent=11 // pred_check
          %p385 = pneg %p71
        $region14: #{mini_eca_restcn_forward.9} parent=11 // pred_check_branch
          %387 = sbr.rel (%p385) target = $region16
        $region15: #{mini_eca_restcn_forward.9} parent=11 // pred_region
          _
        $region16: #{mini_eca_restcn_forward.9} parent=11 // pred_fallthru
          _
        // Predicated region
        $region17: #{mini_eca_restcn_forward.9} parent=11 // pred_check
          %p388 = pneg %p92
        $region18: #{mini_eca_restcn_forward.9} parent=11 // pred_check_branch
          %390 = sbr.rel (%p388) target = $region20
        $region19: #{mini_eca_restcn_forward.9} parent=11 // pred_region
          _
        $region20: #{mini_eca_restcn_forward.9} parent=11 // pred_fallthru
          _
        // Predicated region
        $region21: #{mini_eca_restcn_forward.9} parent=11 // pred_check
          %p391 = pneg %p113
        $region22: #{mini_eca_restcn_forward.9} parent=11 // pred_check_branch
          %393 = sbr.rel (%p391) target = $region24
        $region23: #{mini_eca_restcn_forward.9} parent=11 // pred_region
          _
        $region24: #{mini_eca_restcn_forward.9} parent=11 // pred_fallthru
          _
        // Predicated region
        $region25: #{mini_eca_restcn_forward.9} parent=11 // pred_check
          %p394 = pneg %p134
        $region26: #{mini_eca_restcn_forward.9} parent=11 // pred_check_branch
          %396 = sbr.rel (%p394) target = $region28
        $region27: #{mini_eca_restcn_forward.9} parent=11 // pred_region
          _
        $region28: #{mini_eca_restcn_forward.9} parent=11 // pred_fallthru
          _
        // Predicated region
        $region29: #{mini_eca_restcn_forward.9} parent=11 // pred_check
          %p397 = pneg %p155
        $region30: #{mini_eca_restcn_forward.9} parent=11 // pred_check_branch
          %399 = sbr.rel (%p397) target = $region32
        $region31: #{mini_eca_restcn_forward.9} parent=11 // pred_region
          _
        $region32: #{mini_eca_restcn_forward.9} parent=11 // pred_fallthru
          _
        // Predicated region
        $region33: #{mini_eca_restcn_forward.9} parent=11 // pred_check
          %p400 = pneg %p176
        $region34: #{mini_eca_restcn_forward.9} parent=11 // pred_check_branch
          %402 = sbr.rel (%p400) target = $region36
        $region35: #{mini_eca_restcn_forward.9} parent=11 // pred_region
          _
        $region36: #{mini_eca_restcn_forward.9} parent=11 // pred_fallthru
          _
        // Predicated region
        $region37: #{mini_eca_restcn_forward.9} parent=11 // pred_check
          %p403 = pneg %p197
        $region38: #{mini_eca_restcn_forward.9} parent=11 // pred_check_branch
          %405 = sbr.rel (%p403) target = $region40
        $region39: #{mini_eca_restcn_forward.9} parent=11 // pred_region
          _
        $region40: #{mini_eca_restcn_forward.9} parent=11 // pred_fallthru
          _
        // Predicated region
        $region41: #{mini_eca_restcn_forward.9} parent=11 // pred_check
          %p406 = pneg %p218
        $region42: #{mini_eca_restcn_forward.9} parent=11 // pred_check_branch
          %408 = sbr.rel (%p406) target = $region44
        $region43: #{mini_eca_restcn_forward.9} parent=11 // pred_region
          _
        $region44: #{mini_eca_restcn_forward.9} parent=11 // pred_fallthru
          _
        // Predicated region
        $region45: #{mini_eca_restcn_forward.9} parent=11 // pred_check
          %p409 = pneg %p239
        $region46: #{mini_eca_restcn_forward.9} parent=11 // pred_check_branch
          %411 = sbr.rel (%p409) target = $region48
        $region47: #{mini_eca_restcn_forward.9} parent=11 // pred_region
          _
        $region48: #{mini_eca_restcn_forward.9} parent=11 // pred_fallthru
          _
        // Predicated region
        $region49: #{mini_eca_restcn_forward.9} parent=11 // pred_check
          %p412 = pneg %p260
        $region50: #{mini_eca_restcn_forward.9} parent=11 // pred_check_branch
          %414 = sbr.rel (%p412) target = $region52
        $region51: #{mini_eca_restcn_forward.9} parent=11 // pred_region
          _
        $region52: #{mini_eca_restcn_forward.9} parent=11 // pred_fallthru
          _
        // Predicated region
        $region53: #{mini_eca_restcn_forward.9} parent=11 // pred_check
          %p415 = pneg %p281
        $region54: #{mini_eca_restcn_forward.9} parent=11 // pred_check_branch
          %417 = sbr.rel (%p415) target = $region56
        $region55: #{mini_eca_restcn_forward.9} parent=11 // pred_region
          _
        $region56: #{mini_eca_restcn_forward.9} parent=11 // pred_fallthru
          _
        // Predicated region
        $region57: #{mini_eca_restcn_forward.9} parent=11 // pred_check
          %p418 = pneg %p302
        $region58: #{mini_eca_restcn_forward.9} parent=11 // pred_check_branch
          %420 = sbr.rel (%p418) target = $region60
        $region59: #{mini_eca_restcn_forward.9} parent=11 // pred_region
          _
        $region60: #{mini_eca_restcn_forward.9} parent=11 // pred_fallthru
          _
        // Predicated region
        $region61: #{mini_eca_restcn_forward.9} parent=11 // pred_check
          %p421 = pneg %p323
        $region62: #{mini_eca_restcn_forward.9} parent=11 // pred_check_branch
          %423 = sbr.rel (%p421) target = $region64
        $region63: #{mini_eca_restcn_forward.9} parent=11 // pred_region
          _
        $region64: #{mini_eca_restcn_forward.9} parent=11 // pred_fallthru
          _
        // Predicated region
        $region65: #{mini_eca_restcn_forward.9} parent=11 // pred_check
          %p424 = pneg %p344
        $region66: #{mini_eca_restcn_forward.9} parent=11 // pred_check_branch
          %426 = sbr.rel (%p424) target = $region68
        $region67: #{mini_eca_restcn_forward.9} parent=11 // pred_region
          _
        $region68: #{mini_eca_restcn_forward.9} parent=11 // pred_fallthru
          _
      $region12: #{mini_eca_restcn_forward.9} parent=5 // pred_fallthru
        _
      %p427 = scmp.lt.s32.totalorder %s24, 2
      // Predicated region
      $region69: #{mini_eca_restcn_forward.9} parent=5 // pred_check
        %p428 = pneg %p427
      $region70: #{mini_eca_restcn_forward.9} parent=5 // pred_check_branch
        %430 = sbr.rel (%p428) target = $region72
      $region71: #{mini_eca_restcn_forward.9} parent=5 // pred_region
        // Predicated region
        $region73: #{mini_eca_restcn_forward.9} parent=71 // pred_check
          %p431 = pneg %p44
        $region74: #{mini_eca_restcn_forward.9} parent=71 // pred_check_branch
          %433 = sbr.rel (%p431) target = $region76
        $region75: #{mini_eca_restcn_forward.9} parent=71 // pred_region
          %p434 = scmp.lt.s32.totalorder %s24, 1
          %s435 = scalar_select %p434, %s24, 1
          %s436 = scalar_lea.vmem %s0, %s435
        $region76: #{mini_eca_restcn_forward.9} parent=71 // pred_fallthru
          _
      $region72: #{mini_eca_restcn_forward.9} parent=5 // pred_fallthru
        _
      %p437 = scmp.le.s32.totalorder 1, %s24
      %p438 = scmp.lt.s32.totalorder %s24, 3
      %p439 = pnand %p437, %p438
      %p440 = pneg %p439
      // Predicated region
      $region77: #{mini_eca_restcn_forward.9} parent=5 // pred_check
        _
      $region78: #{mini_eca_restcn_forward.9} parent=5 // pred_check_branch
        %442 = sbr.rel (%p439) target = $region80
      $region79: #{mini_eca_restcn_forward.9} parent=5 // pred_region
        %s443 = ssub.s32 %s24, 1
        %p444 = scmp.lt.s32.totalorder %s29, 1
        %s445 = scalar_select %p444, %s29, 1
        %s446 = scalar_lea.vmem %s0, %s445
        %p447 = pneg %p50
        %p448 = pneg %p47
        %p449 = pneg %p71
        %p450 = pneg %p68
        %p451 = pneg %p92
        %p452 = pneg %p89
        %p453 = pneg %p113
        %p454 = pneg %p110
        %p455 = pneg %p134
        %p456 = pneg %p131
        %p457 = pneg %p155
        %p458 = pneg %p152
        %p459 = pneg %p176
        %p460 = pneg %p173
        %p461 = pneg %p197
        %p462 = pneg %p194
        %p463 = pneg %p218
        %p464 = pneg %p215
        %p465 = pneg %p239
        %p466 = pneg %p236
        %p467 = pneg %p260
        %p468 = pneg %p257
        %p469 = pneg %p281
        %p470 = pneg %p278
        %p471 = pneg %p302
        %p472 = pneg %p299
        %p473 = pneg %p323
        %p474 = pneg %p320
        %p475 = pneg %p344
        %p476 = pneg %p341
        %p477 = pneg %p370
        %p478 = pneg %p367
        %s479 = sand.u32 %s357, 1
        %s480 = scalar_lea.sflag [#allocation5], %s479
        %s481 = sand.u32 %s357, 1
        %s482 = scalar_lea.vmem [#allocation4], %s481
        %p483 = scmp.lt.s32.totalorder %s29, 1
        %s484 = scalar_select %p483, %s29, 1
        %s485 = scalar_lea.vmem %s0, %s484
        %vm487 = vcmask 519168
        %488 = vst.msk [vmem:[#allocation2] sm:$0xf] %vm487, 0.0
        %489 = vst.msk [vmem:[#allocation2 + $0x5] sm:$0xf] %vm487, 0.0
        %vm490 = vcmask 523264
        %491 = vst.msk [vmem:[#allocation3] sm:$0xff] %vm490, 0.0
        %492 = vst.msk [vmem:[#allocation3 + $0x9] sm:$0xff] %vm490, 0.0
        %v493 = vld [vmem:[%s485] sm:$0x1]
        %v494 = vunpack.c.l.bf16 %v493
        %vm495 = vcmask 516096
        %496 = vst.msk [vmem:[#allocation2 + $0x4] sm:$0x1] %vm495, %v494
        %s497 = scalar_lea.vmem %s1, 32
        %v498 = vld [vmem:[%s497] sm:$0xf]
        %v499 = vld [vmem:[%s497 + $0x4] sm:$0xf]
        %v500 = vld [vmem:[%s497 + $0x8] sm:$0xf]
        %v501 = vld [vmem:[%s497 + $0xc] sm:$0xf]
        %v502 = vld [vmem:[%s497 + $0x10] sm:$0xf]
        %v503 = vld [vmem:[%s497 + $0x14] sm:$0xf]
        %v504 = vld [vmem:[%s497 + $0x18] sm:$0xf]
        %v505 = vld [vmem:[%s497 + $0x1c] sm:$0xf]
        %v506 = vld [vmem:[#allocation2] sm:$0x1]
        %v507 = vpack.c.bf16 %v506, %v506
        %v508 = vld [vmem:[%s1] sm:$0xf]
        %v509 = vld [vmem:[%s1 + $0x4] sm:$0xf]
        %v510 = vld [vmem:[%s1 + $0x8] sm:$0xf]
        %v511 = vld [vmem:[%s1 + $0xc] sm:$0xf]
        %v512 = vld [vmem:[%s1 + $0x10] sm:$0xf]
        %v513 = vld [vmem:[%s1 + $0x14] sm:$0xf]
        %v514 = vld [vmem:[%s1 + $0x18] sm:$0xf]
        %v515 = vld [vmem:[%s1 + $0x1c] sm:$0xf]
        %v524 = vunpack.c.l.b16 %v508
        %v525 = vunpack.c.l.b16 %v509
        %v526 = vunpack.c.l.b16 %v510
        %v527 = vunpack.c.l.b16 %v511
        %v528 = vunpack.c.l.b16 %v512
        %v529 = vunpack.c.l.b16 %v513
        %v530 = vunpack.c.l.b16 %v514
        %v531 = vunpack.c.l.b16 %v515
        %v532 = vpack.c.b16 %v525, %v524
        %v533 = vpack.c.b16 %v527, %v526
        %v534 = vpack.c.b16 %v529, %v528
        %v535 = vpack.c.b16 %v531, %v530
        %v541 = vsel %vm490, %v507, 0
        %543 = vmatprep.subr.bf16.mxu0 0
        %544 = vmatpush1.bf16.msra.mxu0 0
        %545 = vmatprep.subr.bf16.mxu0 0
        %546 = vmatpush1.bf16.msra.mxu0 0
        %547 = vmatprep.subr.bf16.mxu0 0
        %548 = vmatpush1.bf16.msra.mxu0 0
        %549 = vmatprep.subr.bf16.mxu0 0
        %550 = vmatpush1.bf16.msra.mxu0 0
        %551 = vmatprep.subr.bf16.mxu0 0
        %552 = vmatpush1.bf16.msra.mxu0 %v535
        %553 = vmatprep.subr.bf16.mxu0 0
        %554 = vmatpush1.bf16.msra.mxu0 %v534
        %555 = vmatprep.subr.bf16.mxu0 0
        %556 = vmatpush1.bf16.msra.mxu0 %v533
        %557 = vmatprep.subr.bf16.mxu0 0
        %558 = vmatpush1.bf16.msra.mxu0 %v532
        %559 = vmatprep.subr.bf16.mxu0 0
        %560 = vmatpush2.bf16.msra.mxu0 0
        %561 = vmatprep.subr.bf16.mxu0 0
        %562 = vmatpush2.bf16.msra.mxu0 0
        %563 = vmatprep.subr.bf16.mxu0 0
        %564 = vmatpush2.bf16.msra.mxu0 0
        %565 = vmatprep.subr.bf16.mxu0 0
        %566 = vmatpush2.bf16.msra.mxu0 0
        %567 = vmatprep.subr.bf16.mxu0 0
        %568 = vmatpush2.bf16.msra.mxu0 0
        %569 = vmatprep.subr.bf16.mxu0 0
        %570 = vmatpush2.bf16.msra.mxu0 0
        %571 = vmatprep.subr.bf16.mxu0 0
        %572 = vmatpush2.bf16.msra.mxu0 0
        %573 = vmatprep.subr.bf16.mxu0 0
        %574 = vmatpush2.bf16.msra.mxu0 0
        %575 = vmatprep.mubr.bf16.mxu0 0
        %576 = vmatmul.mubr.bf16.gmra.mxu0 %v541
        %v577 = vpop.f32.mrf.mxu0
        %v578 = vadd.f32 0.0, %v577
        %v579 = vpop.f32.mrf.mxu0
        %v580 = vpop.f32.mrf.mxu0
        %v581 = vpop.f32.mrf.mxu0
        %582 = vdwg.mxu0
        %v591 = vunpack.c.l.b16 %v498
        %v592 = vunpack.c.l.b16 %v499
        %v593 = vunpack.c.l.b16 %v500
        %v594 = vunpack.c.l.b16 %v501
        %v595 = vunpack.c.l.b16 %v502
        %v596 = vunpack.c.l.b16 %v503
        %v597 = vunpack.c.l.b16 %v504
        %v598 = vunpack.c.l.b16 %v505
        %v599 = vpack.c.b16 %v592, %v591
        %v600 = vpack.c.b16 %v594, %v593
        %v601 = vpack.c.b16 %v596, %v595
        %v602 = vpack.c.b16 %v598, %v597
        %v608 = vsel %vm490, %v493, 0
        %610 = vmatprep.subr.bf16.mxu0 0
        %611 = vmatpush1.bf16.msra.mxu0 0
        %612 = vmatprep.subr.bf16.mxu0 0
        %613 = vmatpush1.bf16.msra.mxu0 0
        %614 = vmatprep.subr.bf16.mxu0 0
        %615 = vmatpush1.bf16.msra.mxu0 0
        %616 = vmatprep.subr.bf16.mxu0 0
        %617 = vmatpush1.bf16.msra.mxu0 0
        %618 = vmatprep.subr.bf16.mxu0 0
        %619 = vmatpush1.bf16.msra.mxu0 %v602
        %620 = vmatprep.subr.bf16.mxu0 0
        %621 = vmatpush1.bf16.msra.mxu0 %v601
        %622 = vmatprep.subr.bf16.mxu0 0
        %623 = vmatpush1.bf16.msra.mxu0 %v600
        %624 = vmatprep.subr.bf16.mxu0 0
        %625 = vmatpush1.bf16.msra.mxu0 %v599
        %626 = vmatprep.subr.bf16.mxu0 0
        %627 = vmatpush2.bf16.msra.mxu0 0
        %628 = vmatprep.subr.bf16.mxu0 0
        %629 = vmatpush2.bf16.msra.mxu0 0
        %630 = vmatprep.subr.bf16.mxu0 0
        %631 = vmatpush2.bf16.msra.mxu0 0
        %632 = vmatprep.subr.bf16.mxu0 0
        %633 = vmatpush2.bf16.msra.mxu0 0
        %634 = vmatprep.subr.bf16.mxu0 0
        %635 = vmatpush2.bf16.msra.mxu0 0
        %636 = vmatprep.subr.bf16.mxu0 0
        %637 = vmatpush2.bf16.msra.mxu0 0
        %638 = vmatprep.subr.bf16.mxu0 0
        %639 = vmatpush2.bf16.msra.mxu0 0
        %640 = vmatprep.subr.bf16.mxu0 0
        %641 = vmatpush2.bf16.msra.mxu0 0
        %642 = vmatprep.mubr.bf16.mxu0 0
        %643 = vmatmul.mubr.bf16.gmra.mxu0 %v608
        %v644 = vpop.f32.mrf.mxu0
        %v645 = vadd.f32 %v578, %v644
        %v646 = vpop.f32.mrf.mxu0
        %v647 = vpop.f32.mrf.mxu0
        %v648 = vpop.f32.mrf.mxu0
        %649 = vdwg.mxu0
        %v650 = vld [vmem:[#allocation2 + $0x8] sm:$0x1]
        %v651 = vpack.c.bf16 %v650, %v650
        %s652 = scalar_lea.vmem %s1, 64
        %v653 = vld [vmem:[%s652] sm:$0xf]
        %v654 = vld [vmem:[%s652 + $0x4] sm:$0xf]
        %v655 = vld [vmem:[%s652 + $0x8] sm:$0xf]
        %v656 = vld [vmem:[%s652 + $0xc] sm:$0xf]
        %v657 = vld [vmem:[%s652 + $0x10] sm:$0xf]
        %v658 = vld [vmem:[%s652 + $0x14] sm:$0xf]
        %v659 = vld [vmem:[%s652 + $0x18] sm:$0xf]
        %v660 = vld [vmem:[%s652 + $0x1c] sm:$0xf]
        %v669 = vunpack.c.l.b16 %v653
        %v670 = vunpack.c.l.b16 %v654
        %v671 = vunpack.c.l.b16 %v655
        %v672 = vunpack.c.l.b16 %v656
        %v673 = vunpack.c.l.b16 %v657
        %v674 = vunpack.c.l.b16 %v658
        %v675 = vunpack.c.l.b16 %v659
        %v676 = vunpack.c.l.b16 %v660
        %v677 = vpack.c.b16 %v670, %v669
        %v678 = vpack.c.b16 %v672, %v671
        %v679 = vpack.c.b16 %v674, %v673
        %v680 = vpack.c.b16 %v676, %v675
        %v686 = vsel %vm490, %v651, 0
        %688 = vmatprep.subr.bf16.mxu0 0
        %689 = vmatpush1.bf16.msra.mxu0 0
        %690 = vmatprep.subr.bf16.mxu0 0
        %691 = vmatpush1.bf16.msra.mxu0 0
        %692 = vmatprep.subr.bf16.mxu0 0
        %693 = vmatpush1.bf16.msra.mxu0 0
        %694 = vmatprep.subr.bf16.mxu0 0
        %695 = vmatpush1.bf16.msra.mxu0 0
        %696 = vmatprep.subr.bf16.mxu0 0
        %697 = vmatpush1.bf16.msra.mxu0 %v680
        %698 = vmatprep.subr.bf16.mxu0 0
        %699 = vmatpush1.bf16.msra.mxu0 %v679
        %700 = vmatprep.subr.bf16.mxu0 0
        %701 = vmatpush1.bf16.msra.mxu0 %v678
        %702 = vmatprep.subr.bf16.mxu0 0
        %703 = vmatpush1.bf16.msra.mxu0 %v677
        %704 = vmatprep.subr.bf16.mxu0 0
        %705 = vmatpush2.bf16.msra.mxu0 0
        %706 = vmatprep.subr.bf16.mxu0 0
        %707 = vmatpush2.bf16.msra.mxu0 0
        %708 = vmatprep.subr.bf16.mxu0 0
        %709 = vmatpush2.bf16.msra.mxu0 0
        %710 = vmatprep.subr.bf16.mxu0 0
        %711 = vmatpush2.bf16.msra.mxu0 0
        %712 = vmatprep.subr.bf16.mxu0 0
        %713 = vmatpush2.bf16.msra.mxu0 0
        %714 = vmatprep.subr.bf16.mxu0 0
        %715 = vmatpush2.bf16.msra.mxu0 0
        %716 = vmatprep.subr.bf16.mxu0 0
        %717 = vmatpush2.bf16.msra.mxu0 0
        %718 = vmatprep.subr.bf16.mxu0 0
        %719 = vmatpush2.bf16.msra.mxu0 0
        %720 = vmatprep.mubr.bf16.mxu0 0
        %721 = vmatmul.mubr.bf16.gmra.mxu0 %v686
        %v722 = vpop.f32.mrf.mxu0
        %v723 = vadd.f32 0.0, %v722
        %v724 = vpop.f32.mrf.mxu0
        %v725 = vpop.f32.mrf.mxu0
        %v726 = vpop.f32.mrf.mxu0
        %727 = vdwg.mxu0
        %v728 = vadd.f32 %v645, %v723
        %v729 = vld [vmem:[%s2] sm:$0x1]
        %v730 = vmul.f32 %v728, %v729
        %v731 = vld [vmem:[%s3] sm:$0x1]
        %v732 = vadd.f32 %v730, %v731
        %v733 = vmax.f32 %v732, 0.0
        %734 = vst.msk [vmem:[#allocation3 + $0x8] sm:$0x1] %vm495, %v733
        %v735 = vpack.c.bf16 %v733, %v733
        %s736 = scalar_lea.vmem %s4, 32
        %v737 = vld [vmem:[%s736] sm:$0xf]
        %v738 = vld [vmem:[%s736 + $0x4] sm:$0xf]
        %v739 = vld [vmem:[%s736 + $0x8] sm:$0xf]
        %v740 = vld [vmem:[%s736 + $0xc] sm:$0xf]
        %v741 = vld [vmem:[%s736 + $0x10] sm:$0xf]
        %v742 = vld [vmem:[%s736 + $0x14] sm:$0xf]
        %v743 = vld [vmem:[%s736 + $0x18] sm:$0xf]
        %v744 = vld [vmem:[%s736 + $0x1c] sm:$0xf]
        %v745 = vld [vmem:[#allocation3] sm:$0x1]
        %v746 = vpack.c.bf16 %v745, %v745
        %v747 = vld [vmem:[%s4] sm:$0xf]
        %v748 = vld [vmem:[%s4 + $0x4] sm:$0xf]
        %v749 = vld [vmem:[%s4 + $0x8] sm:$0xf]
        %v750 = vld [vmem:[%s4 + $0xc] sm:$0xf]
        %v751 = vld [vmem:[%s4 + $0x10] sm:$0xf]
        %v752 = vld [vmem:[%s4 + $0x14] sm:$0xf]
        %v753 = vld [vmem:[%s4 + $0x18] sm:$0xf]
        %v754 = vld [vmem:[%s4 + $0x1c] sm:$0xf]
        %v763 = vunpack.c.l.b16 %v747
        %v764 = vunpack.c.l.b16 %v748
        %v765 = vunpack.c.l.b16 %v749
        %v766 = vunpack.c.l.b16 %v750
        %v767 = vunpack.c.l.b16 %v751
        %v768 = vunpack.c.l.b16 %v752
        %v769 = vunpack.c.l.b16 %v753
        %v770 = vunpack.c.l.b16 %v754
        %v771 = vpack.c.b16 %v764, %v763
        %v772 = vpack.c.b16 %v766, %v765
        %v773 = vpack.c.b16 %v768, %v767
        %v774 = vpack.c.b16 %v770, %v769
        %v780 = vsel %vm490, %v746, 0
        %782 = vmatprep.subr.bf16.mxu0 0
        %783 = vmatpush1.bf16.msra.mxu0 0
        %784 = vmatprep.subr.bf16.mxu0 0
        %785 = vmatpush1.bf16.msra.mxu0 0
        %786 = vmatprep.subr.bf16.mxu0 0
        %787 = vmatpush1.bf16.msra.mxu0 0
        %788 = vmatprep.subr.bf16.mxu0 0
        %789 = vmatpush1.bf16.msra.mxu0 0
        %790 = vmatprep.subr.bf16.mxu0 0
        %791 = vmatpush1.bf16.msra.mxu0 %v774
        %792 = vmatprep.subr.bf16.mxu0 0
        %793 = vmatpush1.bf16.msra.mxu0 %v773
        %794 = vmatprep.subr.bf16.mxu0 0
        %795 = vmatpush1.bf16.msra.mxu0 %v772
        %796 = vmatprep.subr.bf16.mxu0 0
        %797 = vmatpush1.bf16.msra.mxu0 %v771
        %798 = vmatprep.subr.bf16.mxu0 0
        %799 = vmatpush2.bf16.msra.mxu0 0
        %800 = vmatprep.subr.bf16.mxu0 0
        %801 = vmatpush2.bf16.msra.mxu0 0
        %802 = vmatprep.subr.bf16.mxu0 0
        %803 = vmatpush2.bf16.msra.mxu0 0
        %804 = vmatprep.subr.bf16.mxu0 0
        %805 = vmatpush2.bf16.msra.mxu0 0
        %806 = vmatprep.subr.bf16.mxu0 0
        %807 = vmatpush2.bf16.msra.mxu0 0
        %808 = vmatprep.subr.bf16.mxu0 0
        %809 = vmatpush2.bf16.msra.mxu0 0
        %810 = vmatprep.subr.bf16.mxu0 0
        %811 = vmatpush2.bf16.msra.mxu0 0
        %812 = vmatprep.subr.bf16.mxu0 0
        %813 = vmatpush2.bf16.msra.mxu0 0
        %814 = vmatprep.mubr.bf16.mxu0 0
        %815 = vmatmul.mubr.bf16.gmra.mxu0 %v780
        %v816 = vpop.f32.mrf.mxu0
        %v817 = vadd.f32 0.0, %v816
        %v818 = vpop.f32.mrf.mxu0
        %v819 = vpop.f32.mrf.mxu0
        %v820 = vpop.f32.mrf.mxu0
        %821 = vdwg.mxu0
        %v830 = vunpack.c.l.b16 %v737
        %v831 = vunpack.c.l.b16 %v738
        %v832 = vunpack.c.l.b16 %v739
        %v833 = vunpack.c.l.b16 %v740
        %v834 = vunpack.c.l.b16 %v741
        %v835 = vunpack.c.l.b16 %v742
        %v836 = vunpack.c.l.b16 %v743
        %v837 = vunpack.c.l.b16 %v744
        %v838 = vpack.c.b16 %v831, %v830
        %v839 = vpack.c.b16 %v833, %v832
        %v840 = vpack.c.b16 %v835, %v834
        %v841 = vpack.c.b16 %v837, %v836
        %v847 = vsel %vm490, %v735, 0
        %849 = vmatprep.subr.bf16.mxu0 0
        %850 = vmatpush1.bf16.msra.mxu0 0
        %851 = vmatprep.subr.bf16.mxu0 0
        %852 = vmatpush1.bf16.msra.mxu0 0
        %853 = vmatprep.subr.bf16.mxu0 0
        %854 = vmatpush1.bf16.msra.mxu0 0
        %855 = vmatprep.subr.bf16.mxu0 0
        %856 = vmatpush1.bf16.msra.mxu0 0
        %857 = vmatprep.subr.bf16.mxu0 0
        %858 = vmatpush1.bf16.msra.mxu0 %v841
        %859 = vmatprep.subr.bf16.mxu0 0
        %860 = vmatpush1.bf16.msra.mxu0 %v840
        %861 = vmatprep.subr.bf16.mxu0 0
        %862 = vmatpush1.bf16.msra.mxu0 %v839
        %863 = vmatprep.subr.bf16.mxu0 0
        %864 = vmatpush1.bf16.msra.mxu0 %v838
        %865 = vmatprep.subr.bf16.mxu0 0
        %866 = vmatpush2.bf16.msra.mxu0 0
        %867 = vmatprep.subr.bf16.mxu0 0
        %868 = vmatpush2.bf16.msra.mxu0 0
        %869 = vmatprep.subr.bf16.mxu0 0
        %870 = vmatpush2.bf16.msra.mxu0 0
        %871 = vmatprep.subr.bf16.mxu0 0
        %872 = vmatpush2.bf16.msra.mxu0 0
        %873 = vmatprep.subr.bf16.mxu0 0
        %874 = vmatpush2.bf16.msra.mxu0 0
        %875 = vmatprep.subr.bf16.mxu0 0
        %876 = vmatpush2.bf16.msra.mxu0 0
        %877 = vmatprep.subr.bf16.mxu0 0
        %878 = vmatpush2.bf16.msra.mxu0 0
        %879 = vmatprep.subr.bf16.mxu0 0
        %880 = vmatpush2.bf16.msra.mxu0 0
        %881 = vmatprep.mubr.bf16.mxu0 0
        %882 = vmatmul.mubr.bf16.gmra.mxu0 %v847
        %v883 = vpop.f32.mrf.mxu0
        %v884 = vadd.f32 %v817, %v883
        %v885 = vpop.f32.mrf.mxu0
        %v886 = vpop.f32.mrf.mxu0
        %v887 = vpop.f32.mrf.mxu0
        %888 = vdwg.mxu0
        %v889 = vld [vmem:[#allocation3 + $0x10] sm:$0x1]
        %v890 = vpack.c.bf16 %v889, %v889
        %s891 = scalar_lea.vmem %s4, 64
        %v892 = vld [vmem:[%s891] sm:$0xf]
        %v893 = vld [vmem:[%s891 + $0x4] sm:$0xf]
        %v894 = vld [vmem:[%s891 + $0x8] sm:$0xf]
        %v895 = vld [vmem:[%s891 + $0xc] sm:$0xf]
        %v896 = vld [vmem:[%s891 + $0x10] sm:$0xf]
        %v897 = vld [vmem:[%s891 + $0x14] sm:$0xf]
        %v898 = vld [vmem:[%s891 + $0x18] sm:$0xf]
        %v899 = vld [vmem:[%s891 + $0x1c] sm:$0xf]
        %v908 = vunpack.c.l.b16 %v892
        %v909 = vunpack.c.l.b16 %v893
        %v910 = vunpack.c.l.b16 %v894
        %v911 = vunpack.c.l.b16 %v895
        %v912 = vunpack.c.l.b16 %v896
        %v913 = vunpack.c.l.b16 %v897
        %v914 = vunpack.c.l.b16 %v898
        %v915 = vunpack.c.l.b16 %v899
        %v916 = vpack.c.b16 %v909, %v908
        %v917 = vpack.c.b16 %v911, %v910
        %v918 = vpack.c.b16 %v913, %v912
        %v919 = vpack.c.b16 %v915, %v914
        %v925 = vsel %vm490, %v890, 0
        %927 = vmatprep.subr.bf16.mxu0 0
        %928 = vmatpush1.bf16.msra.mxu0 0
        %929 = vmatprep.subr.bf16.mxu0 0
        %930 = vmatpush1.bf16.msra.mxu0 0
        %931 = vmatprep.subr.bf16.mxu0 0
        %932 = vmatpush1.bf16.msra.mxu0 0
        %933 = vmatprep.subr.bf16.mxu0 0
        %934 = vmatpush1.bf16.msra.mxu0 0
        %935 = vmatprep.subr.bf16.mxu0 0
        %936 = vmatpush1.bf16.msra.mxu0 %v919
        %937 = vmatprep.subr.bf16.mxu0 0
        %938 = vmatpush1.bf16.msra.mxu0 %v918
        %939 = vmatprep.subr.bf16.mxu0 0
        %940 = vmatpush1.bf16.msra.mxu0 %v917
        %941 = vmatprep.subr.bf16.mxu0 0
        %942 = vmatpush1.bf16.msra.mxu0 %v916
        %943 = vmatprep.subr.bf16.mxu0 0
        %944 = vmatpush2.bf16.msra.mxu0 0
        %945 = vmatprep.subr.bf16.mxu0 0
        %946 = vmatpush2.bf16.msra.mxu0 0
        %947 = vmatprep.subr.bf16.mxu0 0
        %948 = vmatpush2.bf16.msra.mxu0 0
        %949 = vmatprep.subr.bf16.mxu0 0
        %950 = vmatpush2.bf16.msra.mxu0 0
        %951 = vmatprep.subr.bf16.mxu0 0
        %952 = vmatpush2.bf16.msra.mxu0 0
        %953 = vmatprep.subr.bf16.mxu0 0
        %954 = vmatpush2.bf16.msra.mxu0 0
        %955 = vmatprep.subr.bf16.mxu0 0
        %956 = vmatpush2.bf16.msra.mxu0 0
        %957 = vmatprep.subr.bf16.mxu0 0
        %958 = vmatpush2.bf16.msra.mxu0 0
        %959 = vmatprep.mubr.bf16.mxu0 0
        %960 = vmatmul.mubr.bf16.gmra.mxu0 %v925
        %v961 = vpop.f32.mrf.mxu0
        %v962 = vadd.f32 0.0, %v961
        %v963 = vpop.f32.mrf.mxu0
        %v964 = vpop.f32.mrf.mxu0
        %v965 = vpop.f32.mrf.mxu0
        %966 = vdwg.mxu0
        %v967 = vadd.f32 %v884, %v962
        %v968 = vld [vmem:[%s5] sm:$0x1]
        %v969 = vmul.f32 %v967, %v968
        %v970 = vld [vmem:[%s6] sm:$0x1]
        %v971 = vadd.f32 %v969, %v970
        %v972 = vadd.f32 %v971, 0.0
        %v973 = vpack.c.bf16 %v972, %v972
        %v974 = vld [vmem:[%s7] sm:$0xf]
        %v975 = vld [vmem:[%s7 + $0x4] sm:$0xf]
        %v976 = vld [vmem:[%s7 + $0x8] sm:$0xf]
        %v977 = vld [vmem:[%s7 + $0xc] sm:$0xf]
        %v978 = vld [vmem:[%s7 + $0x10] sm:$0xf]
        %v979 = vld [vmem:[%s7 + $0x14] sm:$0xf]
        %v980 = vld [vmem:[%s7 + $0x18] sm:$0xf]
        %v981 = vld [vmem:[%s7 + $0x1c] sm:$0xf]
        %v990 = vunpack.c.l.b16 %v974
        %v991 = vunpack.c.l.b16 %v975
        %v992 = vunpack.c.l.b16 %v976
        %v993 = vunpack.c.l.b16 %v977
        %v994 = vunpack.c.l.b16 %v978
        %v995 = vunpack.c.l.b16 %v979
        %v996 = vunpack.c.l.b16 %v980
        %v997 = vunpack.c.l.b16 %v981
        %v998 = vpack.c.b16 %v991, %v990
        %v999 = vpack.c.b16 %v993, %v992
        %v1000 = vpack.c.b16 %v995, %v994
        %v1001 = vpack.c.b16 %v997, %v996
        %v1007 = vsel %vm490, %v973, 0
        %1009 = vmatprep.subr.bf16.mxu0 0
        %1010 = vmatpush1.bf16.msra.mxu0 0
        %1011 = vmatprep.subr.bf16.mxu0 0
        %1012 = vmatpush1.bf16.msra.mxu0 0
        %1013 = vmatprep.subr.bf16.mxu0 0
        %1014 = vmatpush1.bf16.msra.mxu0 0
        %1015 = vmatprep.subr.bf16.mxu0 0
        %1016 = vmatpush1.bf16.msra.mxu0 0
        %1017 = vmatprep.subr.bf16.mxu0 0
        %1018 = vmatpush1.bf16.msra.mxu0 %v1001
        %1019 = vmatprep.subr.bf16.mxu0 0
        %1020 = vmatpush1.bf16.msra.mxu0 %v1000
        %1021 = vmatprep.subr.bf16.mxu0 0
        %1022 = vmatpush1.bf16.msra.mxu0 %v999
        %1023 = vmatprep.subr.bf16.mxu0 0
        %1024 = vmatpush1.bf16.msra.mxu0 %v998
        %1025 = vmatprep.subr.bf16.mxu0 0
        %1026 = vmatpush2.bf16.msra.mxu0 0
        %1027 = vmatprep.subr.bf16.mxu0 0
        %1028 = vmatpush2.bf16.msra.mxu0 0
        %1029 = vmatprep.subr.bf16.mxu0 0
        %1030 = vmatpush2.bf16.msra.mxu0 0
        %1031 = vmatprep.subr.bf16.mxu0 0
        %1032 = vmatpush2.bf16.msra.mxu0 0
        %1033 = vmatprep.subr.bf16.mxu0 0
        %1034 = vmatpush2.bf16.msra.mxu0 0
        %1035 = vmatprep.subr.bf16.mxu0 0
        %1036 = vmatpush2.bf16.msra.mxu0 0
        %1037 = vmatprep.subr.bf16.mxu0 0
        %1038 = vmatpush2.bf16.msra.mxu0 0
        %1039 = vmatprep.subr.bf16.mxu0 0
        %1040 = vmatpush2.bf16.msra.mxu0 0
        %1041 = vmatprep.mubr.bf16.mxu0 0
        %1042 = vmatmul.mubr.bf16.gmra.mxu0 %v1007
        %v1043 = vpop.f32.mrf.mxu0
        %v1044 = vadd.f32 0.0, %v1043
        %v1045 = vpop.f32.mrf.mxu0
        %v1046 = vpop.f32.mrf.mxu0
        %v1047 = vpop.f32.mrf.mxu0
        %1048 = vdwg.mxu0
        %v1049 = vxor.u32 %v1044, 2147483648
        %v1050 = vmul.f32 %v1049, 1.442695
        %v1051 = vpow.pop %v1050
        %v1052 = vadd.f32 %v1051, 1.0
        %v1053 = vrcp.pop %v1052
        %v1054 = vmul.f32 1.0, %v1053
        %v1055 = vmul.f32 %v971, %v1054
        %v1056 = vld [vmem:[%s8] sm:$0xf]
        %v1057 = vld [vmem:[%s8 + $0x4] sm:$0xf]
        %v1058 = vld [vmem:[%s8 + $0x8] sm:$0xf]
        %v1059 = vld [vmem:[%s8 + $0xc] sm:$0xf]
        %v1060 = vld [vmem:[%s8 + $0x10] sm:$0xf]
        %v1061 = vld [vmem:[%s8 + $0x14] sm:$0xf]
        %v1062 = vld [vmem:[%s8 + $0x18] sm:$0xf]
        %v1063 = vld [vmem:[%s8 + $0x1c] sm:$0xf]
        %v1072 = vunpack.c.l.b16 %v1056
        %v1073 = vunpack.c.l.b16 %v1057
        %v1074 = vunpack.c.l.b16 %v1058
        %v1075 = vunpack.c.l.b16 %v1059
        %v1076 = vunpack.c.l.b16 %v1060
        %v1077 = vunpack.c.l.b16 %v1061
        %v1078 = vunpack.c.l.b16 %v1062
        %v1079 = vunpack.c.l.b16 %v1063
        %v1080 = vpack.c.b16 %v1073, %v1072
        %v1081 = vpack.c.b16 %v1075, %v1074
        %v1082 = vpack.c.b16 %v1077, %v1076
        %v1083 = vpack.c.b16 %v1079, %v1078
        %1088 = vmatprep.subr.bf16.mxu0 0
        %1089 = vmatpush1.bf16.msra.mxu0 0
        %1090 = vmatprep.subr.bf16.mxu0 0
        %1091 = vmatpush1.bf16.msra.mxu0 0
        %1092 = vmatprep.subr.bf16.mxu0 0
        %1093 = vmatpush1.bf16.msra.mxu0 0
        %1094 = vmatprep.subr.bf16.mxu0 0
        %1095 = vmatpush1.bf16.msra.mxu0 0
        %1096 = vmatprep.subr.bf16.mxu0 0
        %1097 = vmatpush1.bf16.msra.mxu0 %v1083
        %1098 = vmatprep.subr.bf16.mxu0 0
        %1099 = vmatpush1.bf16.msra.mxu0 %v1082
        %1100 = vmatprep.subr.bf16.mxu0 0
        %1101 = vmatpush1.bf16.msra.mxu0 %v1081
        %1102 = vmatprep.subr.bf16.mxu0 0
        %1103 = vmatpush1.bf16.msra.mxu0 %v1080
        %1104 = vmatprep.subr.bf16.mxu0 0
        %1105 = vmatpush2.bf16.msra.mxu0 0
        %1106 = vmatprep.subr.bf16.mxu0 0
        %1107 = vmatpush2.bf16.msra.mxu0 0
        %1108 = vmatprep.subr.bf16.mxu0 0
        %1109 = vmatpush2.bf16.msra.mxu0 0
        %1110 = vmatprep.subr.bf16.mxu0 0
        %1111 = vmatpush2.bf16.msra.mxu0 0
        %1112 = vmatprep.subr.bf16.mxu0 0
        %1113 = vmatpush2.bf16.msra.mxu0 0
        %1114 = vmatprep.subr.bf16.mxu0 0
        %1115 = vmatpush2.bf16.msra.mxu0 0
        %1116 = vmatprep.subr.bf16.mxu0 0
        %1117 = vmatpush2.bf16.msra.mxu0 0
        %1118 = vmatprep.subr.bf16.mxu0 0
        %1119 = vmatpush2.bf16.msra.mxu0 0
        %1120 = vmatprep.mubr.bf16.mxu0 0
        %1121 = vmatmul.mubr.bf16.gmra.mxu0 %v608
        %v1122 = vpop.f32.mrf.mxu0
        %v1123 = vadd.f32 0.0, %v1122
        %v1124 = vpop.f32.mrf.mxu0
        %v1125 = vpop.f32.mrf.mxu0
        %v1126 = vpop.f32.mrf.mxu0
        %1127 = vdwg.mxu0
        %v1128 = vld [vmem:[%s9] sm:$0x1]
        %v1129 = vmul.f32 %v1123, %v1128
        %v1130 = vld [vmem:[%s10] sm:$0x1]
        %v1131 = vadd.f32 %v1129, %v1130
        %v1132 = vadd.f32 %v1055, %v1131
        %v1133 = vmax.f32 %v1132, 0.0
        %v1134 = vadd.f32 %v1133, 0.0
        %v1135 = vpack.c.bf16 %v1134, %v1134
        %v1136 = vld [vmem:[%s11] sm:$0xf]
        %v1137 = vld [vmem:[%s11 + $0x4] sm:$0xf]
        %v1138 = vld [vmem:[%s11 + $0x8] sm:$0xf]
        %v1139 = vld [vmem:[%s11 + $0xc] sm:$0xf]
        %v1140 = vld [vmem:[%s11 + $0x10] sm:$0xf]
        %v1141 = vld [vmem:[%s11 + $0x14] sm:$0xf]
        %v1142 = vld [vmem:[%s11 + $0x18] sm:$0xf]
        %v1143 = vld [vmem:[%s11 + $0x1c] sm:$0xf]
        %v1144 = vld [vmem:[%s12] sm:$0x1]
        %v1153 = vunpack.c.l.b16 %v1136
        %v1154 = vunpack.c.l.b16 %v1137
        %v1155 = vunpack.c.l.b16 %v1138
        %v1156 = vunpack.c.l.b16 %v1139
        %v1157 = vunpack.c.l.b16 %v1140
        %v1158 = vunpack.c.l.b16 %v1141
        %v1159 = vunpack.c.l.b16 %v1142
        %v1160 = vunpack.c.l.b16 %v1143
        %v1161 = vpack.c.b16 %v1154, %v1153
        %v1162 = vpack.c.b16 %v1156, %v1155
        %v1163 = vpack.c.b16 %v1158, %v1157
        %v1164 = vpack.c.b16 %v1160, %v1159
        %v1170 = vsel %vm490, %v1135, 0
        %1172 = vmatprep.subr.bf16.mxu0 0
        %1173 = vmatpush1.bf16.msra.mxu0 0
        %1174 = vmatprep.subr.bf16.mxu0 0
        %1175 = vmatpush1.bf16.msra.mxu0 0
        %1176 = vmatprep.subr.bf16.mxu0 0
        %1177 = vmatpush1.bf16.msra.mxu0 0
        %1178 = vmatprep.subr.bf16.mxu0 0
        %1179 = vmatpush1.bf16.msra.mxu0 0
        %1180 = vmatprep.subr.bf16.mxu0 0
        %1181 = vmatpush1.bf16.msra.mxu0 %v1164
        %1182 = vmatprep.subr.bf16.mxu0 0
        %1183 = vmatpush1.bf16.msra.mxu0 %v1163
        %1184 = vmatprep.subr.bf16.mxu0 0
        %1185 = vmatpush1.bf16.msra.mxu0 %v1162
        %1186 = vmatprep.subr.bf16.mxu0 0
        %1187 = vmatpush1.bf16.msra.mxu0 %v1161
        %1188 = vmatprep.subr.bf16.mxu0 0
        %1189 = vmatpush2.bf16.msra.mxu0 0
        %1190 = vmatprep.subr.bf16.mxu0 0
        %1191 = vmatpush2.bf16.msra.mxu0 0
        %1192 = vmatprep.subr.bf16.mxu0 0
        %1193 = vmatpush2.bf16.msra.mxu0 0
        %1194 = vmatprep.subr.bf16.mxu0 0
        %1195 = vmatpush2.bf16.msra.mxu0 0
        %1196 = vmatprep.subr.bf16.mxu0 0
        %1197 = vmatpush2.bf16.msra.mxu0 0
        %1198 = vmatprep.subr.bf16.mxu0 0
        %1199 = vmatpush2.bf16.msra.mxu0 0
        %1200 = vmatprep.subr.bf16.mxu0 0
        %1201 = vmatpush2.bf16.msra.mxu0 0
        %1202 = vmatprep.subr.bf16.mxu0 0
        %1203 = vmatpush2.bf16.msra.mxu0 0
        %1204 = vmatprep.mubr.bf16.mxu0 0
        %1205 = vmatmul.mubr.bf16.gmra.mxu0 %v1170
        %v1206 = vpop.f32.mrf.mxu0
        %v1207 = vadd.f32 %v1144, %v1206
        %v1208 = vpop.f32.mrf.mxu0
        %v1209 = vpop.f32.mrf.mxu0
        %v1210 = vpop.f32.mrf.mxu0
        %1211 = vdwg.mxu0
        %v1212 = vmax.f32 %v1207, 0.0
        %v1213 = vpack.c.bf16 %v1212, %v1212
        %v1214 = vld [vmem:[%s13] sm:$0xf]
        %v1215 = vld [vmem:[%s13 + $0x4] sm:$0xf]
        %v1216 = vld [vmem:[%s13 + $0x8] sm:$0xf]
        %v1217 = vld [vmem:[%s13 + $0xc] sm:$0xf]
        %v1218 = vld [vmem:[%s13 + $0x10] sm:$0xf]
        %v1219 = vld [vmem:[%s13 + $0x14] sm:$0xf]
        %v1220 = vld [vmem:[%s13 + $0x18] sm:$0xf]
        %v1221 = vld [vmem:[%s13 + $0x1c] sm:$0xf]
        %v1222 = vld [vmem:[%s14] sm:$0x1]
        %v1231 = vunpack.c.l.b16 %v1214
        %v1232 = vunpack.c.l.b16 %v1215
        %v1233 = vunpack.c.l.b16 %v1216
        %v1234 = vunpack.c.l.b16 %v1217
        %v1235 = vunpack.c.l.b16 %v1218
        %v1236 = vunpack.c.l.b16 %v1219
        %v1237 = vunpack.c.l.b16 %v1220
        %v1238 = vunpack.c.l.b16 %v1221
        %v1239 = vpack.c.b16 %v1232, %v1231
        %v1240 = vpack.c.b16 %v1234, %v1233
        %v1241 = vpack.c.b16 %v1236, %v1235
        %v1242 = vpack.c.b16 %v1238, %v1237
        %v1248 = vsel %vm490, %v1213, 0
        %1250 = vmatprep.subr.bf16.mxu0 0
        %1251 = vmatpush1.bf16.msra.mxu0 0
        %1252 = vmatprep.subr.bf16.mxu0 0
        %1253 = vmatpush1.bf16.msra.mxu0 0
        %1254 = vmatprep.subr.bf16.mxu0 0
        %1255 = vmatpush1.bf16.msra.mxu0 0
        %1256 = vmatprep.subr.bf16.mxu0 0
        %1257 = vmatpush1.bf16.msra.mxu0 0
        %1258 = vmatprep.subr.bf16.mxu0 0
        %1259 = vmatpush1.bf16.msra.mxu0 %v1242
        %1260 = vmatprep.subr.bf16.mxu0 0
        %1261 = vmatpush1.bf16.msra.mxu0 %v1241
        %1262 = vmatprep.subr.bf16.mxu0 0
        %1263 = vmatpush1.bf16.msra.mxu0 %v1240
        %1264 = vmatprep.subr.bf16.mxu0 0
        %1265 = vmatpush1.bf16.msra.mxu0 %v1239
        %1266 = vmatprep.subr.bf16.mxu0 0
        %1267 = vmatpush2.bf16.msra.mxu0 0
        %1268 = vmatprep.subr.bf16.mxu0 0
        %1269 = vmatpush2.bf16.msra.mxu0 0
        %1270 = vmatprep.subr.bf16.mxu0 0
        %1271 = vmatpush2.bf16.msra.mxu0 0
        %1272 = vmatprep.subr.bf16.mxu0 0
        %1273 = vmatpush2.bf16.msra.mxu0 0
        %1274 = vmatprep.subr.bf16.mxu0 0
        %1275 = vmatpush2.bf16.msra.mxu0 0
        %1276 = vmatprep.subr.bf16.mxu0 0
        %1277 = vmatpush2.bf16.msra.mxu0 0
        %1278 = vmatprep.subr.bf16.mxu0 0
        %1279 = vmatpush2.bf16.msra.mxu0 0
        %1280 = vmatprep.subr.bf16.mxu0 0
        %1281 = vmatpush2.bf16.msra.mxu0 0
        %1282 = vmatprep.mubr.bf16.mxu0 0
        %1283 = vmatmul.mubr.bf16.gmra.mxu0 %v1248
        %v1284 = vpop.f32.mrf.mxu0
        %v1285 = vadd.f32 %v1222, %v1284
        %v1286 = vpop.f32.mrf.mxu0
        %v1287 = vpop.f32.mrf.mxu0
        %v1288 = vpop.f32.mrf.mxu0
        %1289 = vdwg.mxu0
        %vm1290 = vcmask 73728
        %1291 = vst.msk [vmem:[%s482] sm:$0x1] %vm1290, %v1285
        %s1292 = sand.u32 %s357, 1
        %s1293 = scalar_lea.sflag [#allocation5], %s1292
        %s1294 = sand.u32 %s357, 1
        %s1295 = scalar_lea.vmem [#allocation4], %s1294
        // Predicated region
        $region81: #{mini_eca_restcn_forward.9} parent=79 // pred_check
          %p1296 = pneg %p367
        $region82: #{mini_eca_restcn_forward.9} parent=79 // pred_check_branch
          %1298 = sbr.rel (%p1296) target = $region84
        $region83: #{mini_eca_restcn_forward.9} parent=79 // pred_region
          %s1300 = ssub.s32 16, 16
          %1301 = vsyncadd %s1293, %s1300
          %s1302 = smul.addr %s29, 16
          %s1303 = scalar_lea.hbm %s15, %s1302
          %s1305 = sshll.u32 %s1295, 4
          %s1306 = int_to_ptr.vmem [resolvable:$true] %s1305
          %1308 = dma.vmem_to_hbm [thread:$0]  %s1306, 16, %s1303, %s1293
        $region84: #{mini_eca_restcn_forward.9} parent=79 // pred_fallthru
          _
      $region80: #{mini_eca_restcn_forward.9} parent=5 // pred_fallthru
        _
      %p1309 = scmp.le.s32.totalorder 2, %s24
      // Predicated region
      $region85: #{mini_eca_restcn_forward.9} parent=5 // pred_check
        %p1310 = pneg %p1309
      $region86: #{mini_eca_restcn_forward.9} parent=5 // pred_check_branch
        %1312 = sbr.rel (%p1310) target = $region88
      $region87: #{mini_eca_restcn_forward.9} parent=5 // pred_region
        %s1313 = ssub.s32 %s24, 2
        // Predicated region
        $region89: #{mini_eca_restcn_forward.9} parent=87 // pred_check
          %p1314 = pneg %p373
        $region90: #{mini_eca_restcn_forward.9} parent=87 // pred_check_branch
          %1316 = sbr.rel (%p1314) target = $region92
        $region91: #{mini_eca_restcn_forward.9} parent=87 // pred_region
          %s1317 = sand.u32 %s358, 1
          %s1318 = scalar_lea.sflag [#allocation5], %s1317
          %s1319 = sand.u32 %s358, 1
          %s1320 = scalar_lea.vmem [#allocation4], %s1319
          %1321 = dma.done %s1318, 16
        $region92: #{mini_eca_restcn_forward.9} parent=87 // pred_fallthru
          _
      $region88: #{mini_eca_restcn_forward.9} parent=5 // pred_fallthru
        _
    $region6: #{mini_eca_restcn_forward.9} parent=1 // loop_footer
      %s28 = sadd.s32 1, %s24
    $region7: #{mini_eca_restcn_forward.9} parent=1 // loop_footer_branch
      %23 = sbr.rel target = $region3
    $region8: #{mini_eca_restcn_forward.9} parent=1 // loop_exit
      _
    %1322 = vsyncpa [#allocation5], 1
    %s1323 = scalar_lea.sflag [#allocation5], 1
    %1324 = vsyncpa %s1323, 1

</llo_original>
